<compile_context>
chip_gen: v7x
topology: tpu7x:2x2x1
jax: 0.10.0
libtpu: 0.0.40
codegen_flags: <defaults>
</compile_context>

<pallas_src>
import functools
import math

import jax
import jax.numpy as jnp
from jax.experimental import pallas as pl
from jax.experimental.pallas import tpu as pltpu


LN_EPS = 1e-6


# ----------------------------- in-kernel helpers -----------------------------

def _layernorm(v, g, b, eps=LN_EPS):
    mu = jnp.mean(v, axis=-1, keepdims=True)
    vc = v - mu
    var = jnp.mean(vc * vc, axis=-1, keepdims=True)
    return vc * jax.lax.rsqrt(var + eps) * g + b


def _gelu_exact(y):
    # exact erf GELU, matching nn.GELU()
    return 0.5 * y * (1.0 + jax.lax.erf(y * (1.0 / math.sqrt(2.0))))


# ----------------------------- Pallas kernels -----------------------------

def _patch_embed_kernel(p_ref, w_ref, b_ref, cls_ref, pos_ref, o_ref,
                        *, n_patches, s_pad):
    """Per-batch: tokens = patches @ W + b, prepend cls, add pos, pad rows to s_pad."""
    p = p_ref[0].astype(jnp.float32)                       # (N, C*P*P)
    tok = jnp.dot(p, w_ref[...], preferred_element_type=jnp.float32) + b_ref[...]
    parts = [cls_ref[...].astype(jnp.float32), tok]        # (1,D), (N,D)
    pad_rows = s_pad - 1 - n_patches
    if pad_rows > 0:
        parts.append(jnp.zeros((pad_rows, tok.shape[1]), jnp.float32))
    seq = jnp.concatenate(parts, axis=0) + pos_ref[...]    # (s_pad, D)
    o_ref[0] = seq.astype(o_ref.dtype)


def _block_kernel(x_ref, ln1g, ln1b, qkvw, qkvb, projw, projb,
                  ln2g, ln2b, fc1w, fc1b, fc2w, fc2b, o_ref,
                  *, heads, hd, s_real):
    """One full pre-norm transformer block for one batch element, all in VMEM."""
    x = x_ref[0].astype(jnp.float32)                       # (s_pad, D)
    s_pad, dim = x.shape
    scale = 1.0 / math.sqrt(hd)

    # ---- multi-head self attention ----
    hn = _layernorm(x, ln1g[...], ln1b[...])
    qkv = jnp.dot(hn, qkvw[...], preferred_element_type=jnp.float32) + qkvb[...]
    q_all = qkv[:, 0:dim]
    k_all = qkv[:, dim:2 * dim]
    v_all = qkv[:, 2 * dim:3 * dim]

    # mask padded key positions (>= s_real)
    key_idx = jax.lax.broadcasted_iota(jnp.int32, (s_pad, s_pad), 1)
    neg = jnp.where(key_idx < s_real, 0.0, -1e30).astype(jnp.float32)

    head_outs = []
    for h_i in range(heads):
        lo = h_i * hd
        q = q_all[:, lo:lo + hd]
        k = k_all[:, lo:lo + hd]
        v = v_all[:, lo:lo + hd]
        s = jax.lax.dot_general(q, k, (((1,), (1,)), ((), ())),
                                preferred_element_type=jnp.float32) * scale + neg
        m = jnp.max(s, axis=-1, keepdims=True)
        e = jnp.exp(s - m)
        p = e * pl.reciprocal(jnp.sum(e, axis=-1, keepdims=True), approx=True)
        head_outs.append(jnp.dot(p, v, preferred_element_type=jnp.float32))
    attn = jnp.concatenate(head_outs, axis=-1)             # (s_pad, D)

    x = x + jnp.dot(attn, projw[...], preferred_element_type=jnp.float32) + projb[...]

    # ---- MLP ----
    hn = _layernorm(x, ln2g[...], ln2b[...])
    h1 = jnp.dot(hn, fc1w[...], preferred_element_type=jnp.float32) + fc1b[...]
    h1 = _gelu_exact(h1)
    x = x + jnp.dot(h1, fc2w[...], preferred_element_type=jnp.float32) + fc2b[...]

    o_ref[0] = x.astype(o_ref.dtype)


def _head_kernel(x_ref, g_ref, b_ref, w_ref, hb_ref, o_ref):
    """Final LayerNorm on cls token + lane-padded classification head."""
    x = x_ref[...].astype(jnp.float32)                     # (B, s_pad, D)
    cls = x[:, 0, :]                                       # (B, D)
    cn = _layernorm(cls, g_ref[...], b_ref[...])
    y = jnp.dot(cn, w_ref[...], preferred_element_type=jnp.float32) + hb_ref[...]
    o_ref[...] = y.astype(o_ref.dtype)


# ----------------------------- kernel wrappers -----------------------------

def patch_embed_cls_pos(patches, pe_w, pe_b, cls, pos_pad):
    B, N, CPP = patches.shape
    D = pe_w.shape[1]
    s_pad = pos_pad.shape[0]
    kernel = functools.partial(_patch_embed_kernel, n_patches=N, s_pad=s_pad)
    return pl.pallas_call(
        kernel,
        out_shape=jax.ShapeDtypeStruct((B, s_pad, D), patches.dtype),
        grid=(B,),
        in_specs=[
            pl.BlockSpec((1, N, CPP), lambda b: (b, 0, 0)),
            pl.BlockSpec((CPP, D), lambda b: (0, 0)),
            pl.BlockSpec((1, D), lambda b: (0, 0)),
            pl.BlockSpec((1, D), lambda b: (0, 0)),
            pl.BlockSpec((s_pad, D), lambda b: (0, 0)),
        ],
        out_specs=pl.BlockSpec((1, s_pad, D), lambda b: (b, 0, 0)),
        compiler_params=pltpu.CompilerParams(dimension_semantics=("parallel",)),
    )(patches, pe_w, pe_b.reshape(1, D), cls.reshape(1, D), pos_pad)


def transformer_block(h, blk, *, heads, hd, s_real):
    B, s_pad, D = h.shape
    mlp = blk["fc1_w"].shape[1]
    kernel = functools.partial(_block_kernel, heads=heads, hd=hd, s_real=s_real)

    def vec(n):
        return pl.BlockSpec((1, n), lambda b: (0, 0))

    def mat(r, c):
        return pl.BlockSpec((r, c), lambda b: (0, 0))

    tok_spec = pl.BlockSpec((1, s_pad, D), lambda b: (b, 0, 0))
    return pl.pallas_call(
        kernel,
        out_shape=jax.ShapeDtypeStruct((B, s_pad, D), h.dtype),
        grid=(B,),
        in_specs=[
            tok_spec,
            vec(D), vec(D),
            mat(D, 3 * D), vec(3 * D),
            mat(D, D), vec(D),
            vec(D), vec(D),
            mat(D, mlp), vec(mlp),
            mat(mlp, D), vec(D),
        ],
        out_specs=tok_spec,
        compiler_params=pltpu.CompilerParams(dimension_semantics=("parallel",)),
    )(h,
      blk["ln1_g"].reshape(1, D), blk["ln1_b"].reshape(1, D),
      blk["qkv_w"], blk["qkv_b"].reshape(1, 3 * D),
      blk["proj_w"], blk["proj_b"].reshape(1, D),
      blk["ln2_g"].reshape(1, D), blk["ln2_b"].reshape(1, D),
      blk["fc1_w"], blk["fc1_b"].reshape(1, mlp),
      blk["fc2_w"], blk["fc2_b"].reshape(1, D))


def final_head(h, lnf_g, lnf_b, head_w_pad, head_b_pad):
    B, s_pad, D = h.shape
    npad = head_w_pad.shape[1]
    return pl.pallas_call(
        _head_kernel,
        out_shape=jax.ShapeDtypeStruct((B, npad), h.dtype),
        grid=(1,),
        in_specs=[
            pl.BlockSpec((B, s_pad, D), lambda i: (0, 0, 0)),
            pl.BlockSpec((1, D), lambda i: (0, 0)),
            pl.BlockSpec((1, D), lambda i: (0, 0)),
            pl.BlockSpec((D, npad), lambda i: (0, 0)),
            pl.BlockSpec((1, npad), lambda i: (0, 0)),
        ],
        out_specs=pl.BlockSpec((B, npad), lambda i: (0, 0)),
    )(h, lnf_g.reshape(1, D), lnf_b.reshape(1, D),
      head_w_pad, head_b_pad.reshape(1, npad))


# ----------------------------- model definition -----------------------------

CFG = dict(
    img=32,          # ViT-B/16 uses 224; scaled down for the synthetic test
    patch=16,
    in_chans=3,
    dim=128,         # ViT-B uses 768
    depth=2,         # ViT-B uses 12
    heads=4,         # ViT-B uses 12
    mlp_ratio=4,
    num_classes=10,
)


def init_params(key, cfg):
    # TODO(synk): timm pretrained weight loading has no in-script equivalent;
    # weights are randomly initialized with the same shapes/structure.
    P, C, D = cfg["patch"], cfg["in_chans"], cfg["dim"]
    N = (cfg["img"] // P) ** 2
    S = N + 1
    mlp = cfg["mlp_ratio"] * D
    nc = cfg["num_classes"]
    std = 0.02

    def nrm(k, shape):
        return (std * jax.random.normal(k, shape)).astype(jnp.float32)

    keys = iter(jax.random.split(key, 8 + 8 * cfg["depth"]))
    params = {
        "pe_w": nrm(next(keys), (C * P * P, D)),
        "pe_b": jnp.zeros((D,), jnp.float32),
        "cls": nrm(next(keys), (1, 1, D)),
        "pos": nrm(next(keys), (1, S, D)),
        "lnf_g": jnp.ones((D,), jnp.float32),
        "lnf_b": jnp.zeros((D,), jnp.float32),
        "head_w": nrm(next(keys), (D, nc)),
        "head_b": jnp.zeros((nc,), jnp.float32),
        "blocks": [],
    }
    for _ in range(cfg["depth"]):
        blk = {
            "ln1_g": jnp.ones((D,), jnp.float32),
            "ln1_b": jnp.zeros((D,), jnp.float32),
            "qkv_w": nrm(next(keys), (D, 3 * D)),
            "qkv_b": jnp.zeros((3 * D,), jnp.float32),
            "proj_w": nrm(next(keys), (D, D)),
            "proj_b": jnp.zeros((D,), jnp.float32),
            "ln2_g": jnp.ones((D,), jnp.float32),
            "ln2_b": jnp.zeros((D,), jnp.float32),
            "fc1_w": nrm(next(keys), (D, mlp)),
            "fc1_b": jnp.zeros((mlp,), jnp.float32),
            "fc2_w": nrm(next(keys), (mlp, D)),
            "fc2_b": jnp.zeros((D,), jnp.float32),
        }
        params["blocks"].append(blk)
    return params


def vit_forward(params, x, cfg):
    B, C, H, W = x.shape              # NCHW, like PyTorch
    P, D, heads = cfg["patch"], cfg["dim"], cfg["heads"]
    nH, nW = H // P, W // P
    N = nH * nW
    S = N + 1
    s_pad = ((S + 7) // 8) * 8        # sublane-friendly sequence padding
    hd = D // heads
    nc = cfg["num_classes"]
    nc_pad = ((nc + 127) // 128) * 128  # lane-dense classifier output

    # --- patch extraction (one-time XLA glue; flatten order (c,i,j) matches conv) ---
    patches = (x.reshape(B, C, nH, P, nW, P)
                .transpose(0, 2, 4, 1, 3, 5)
                .reshape(B, N, C * P * P))

    # --- pad pos-embed / head weights to TPU-friendly shapes (tiny one-time ops) ---
    pos_pad = jnp.pad(params["pos"][0], ((0, s_pad - S), (0, 0)))         # (s_pad, D)
    head_w_pad = jnp.pad(params["head_w"], ((0, 0), (0, nc_pad - nc)))    # (D, nc_pad)
    head_b_pad = jnp.pad(params["head_b"], ((0, nc_pad - nc),))           # (nc_pad,)

    # --- fused patch-embed + cls token + positional embedding ---
    h = patch_embed_cls_pos(patches, params["pe_w"], params["pe_b"],
                            params["cls"], pos_pad)                       # (B, s_pad, D)

    # --- fused transformer blocks (pre-norm MHSA + GELU MLP, residuals in VMEM) ---
    for blk in params["blocks"]:
        h = transformer_block(h, blk, heads=heads, hd=hd, s_real=S)

    # --- fused final LayerNorm + cls-token head; slice off lane padding ---
    logits_pad = final_head(h, params["lnf_g"], params["lnf_b"],
                            head_w_pad, head_b_pad)                       # (B, nc_pad)
    return logits_pad[:, :nc]                                             # (B, num_classes)


if __name__ == "__main__":
    key = jax.random.PRNGKey(0)
    k_params, k_x = jax.random.split(key)

    params = init_params(k_params, CFG)
    x = jax.random.normal(
        k_x, (2, CFG["in_chans"], CFG["img"], CFG["img"]), dtype=jnp.float32
    )  # NCHW

    fwd = jax.jit(functools.partial(vit_forward, cfg=CFG))
    logits = fwd(params, x)
    jax.block_until_ready(logits)
    assert logits.shape == (2, CFG["num_classes"])
    print("KERNEL_OK")
</pallas_src>

<mosaic_0001>
module attributes {stable_mosaic.version = 11 : i64} {
  func.func @_head_kernel(%arg0: i32, %arg1: memref<2x8x128xf32, #tpu.memory_space<vmem>>, %arg2: memref<1x128xf32, #tpu.memory_space<vmem>>, %arg3: memref<1x128xf32, #tpu.memory_space<vmem>>, %arg4: memref<128x128xf32, #tpu.memory_space<vmem>>, %arg5: memref<1x128xf32, #tpu.memory_space<vmem>>, %arg6: memref<2x128xf32, #tpu.memory_space<vmem>>) attributes {dimension_semantics = [#tpu.dimension_semantics<arbitrary>], iteration_bounds = array<i64: 1>, scalar_prefetch = 0 : i64, scratch_operands = 0 : i64, tpu.core_type = #tpu.core_type<tc>, window_params = [{pipeline_mode = #tpu.pipeline_mode<synchronous>, transform_indices = @transform_0, window_bounds = array<i64: 2, 8, 128>}, {pipeline_mode = #tpu.pipeline_mode<synchronous>, transform_indices = @transform_1, window_bounds = array<i64: 1, 128>}, {pipeline_mode = #tpu.pipeline_mode<synchronous>, transform_indices = @transform_2, window_bounds = array<i64: 1, 128>}, {pipeline_mode = #tpu.pipeline_mode<synchronous>, transform_indices = @transform_3, window_bounds = array<i64: 128, 128>}, {pipeline_mode = #tpu.pipeline_mode<synchronous>, transform_indices = @transform_4, window_bounds = array<i64: 1, 128>}, {pipeline_mode = #tpu.pipeline_mode<synchronous>, transform_indices = @transform_5, window_bounds = array<i64: 2, 128>}]} {
    %c0 = arith.constant 0 : index
    %c0_0 = arith.constant 0 : index
    %c0_1 = arith.constant 0 : index
    %0 = vector.load %arg1[%c0, %c0_0, %c0_1] : memref<2x8x128xf32, #tpu.memory_space<vmem>>, vector<2x8x128xf32>
    %1 = vector.extract_strided_slice %0 {offsets = [0, 0, 0], sizes = [2, 1, 128], strides = [1, 1, 1]} : vector<2x8x128xf32> to vector<2x1x128xf32>
    %2 = vector.shape_cast %1 : vector<2x1x128xf32> to vector<2x128xf32>
    %c0_2 = arith.constant 0 : index
    %c0_3 = arith.constant 0 : index
    %3 = vector.load %arg2[%c0_2, %c0_3] : memref<1x128xf32, #tpu.memory_space<vmem>>, vector<1x128xf32>
    %c0_4 = arith.constant 0 : index
    %c0_5 = arith.constant 0 : index
    %4 = vector.load %arg3[%c0_4, %c0_5] : memref<1x128xf32, #tpu.memory_space<vmem>>, vector<1x128xf32>
    %cst = arith.constant dense<0.000000e+00> : vector<2xf32>
    %5 = vector.multi_reduction <add>, %2, %cst [1] : vector<2x128xf32> to vector<2xf32>
    %6 = vector.shape_cast %5 : vector<2xf32> to vector<2x1xf32>
    %cst_6 = arith.constant 1.280000e+02 : f32
    %7 = vector.broadcast %cst_6 : f32 to vector<2x1xf32>
    %8 = arith.divf %6, %7 : vector<2x1xf32>
    %9 = vector.broadcast %8 : vector<2x1xf32> to vector<2x128xf32>
    %10 = arith.subf %2, %9 : vector<2x128xf32>
    %11 = arith.mulf %10, %10 : vector<2x128xf32>
    %cst_7 = arith.constant dense<0.000000e+00> : vector<2xf32>
    %12 = vector.multi_reduction <add>, %11, %cst_7 [1] : vector<2x128xf32> to vector<2xf32>
    %13 = vector.shape_cast %12 : vector<2xf32> to vector<2x1xf32>
    %cst_8 = arith.constant 1.280000e+02 : f32
    %14 = vector.broadcast %cst_8 : f32 to vector<2x1xf32>
    %15 = arith.divf %13, %14 : vector<2x1xf32>
    %cst_9 = arith.constant 9.99999997E-7 : f32
    %16 = vector.broadcast %cst_9 : f32 to vector<2x1xf32>
    %17 = arith.addf %15, %16 : vector<2x1xf32>
    %18 = math.rsqrt %17 : vector<2x1xf32>
    %19 = vector.broadcast %18 : vector<2x1xf32> to vector<2x128xf32>
    %20 = arith.mulf %10, %19 : vector<2x128xf32>
    %21 = vector.broadcast %3 : vector<1x128xf32> to vector<2x128xf32>
    %22 = arith.mulf %20, %21 : vector<2x128xf32>
    %23 = vector.broadcast %4 : vector<1x128xf32> to vector<2x128xf32>
    %24 = arith.addf %22, %23 : vector<2x128xf32>
    %c0_10 = arith.constant 0 : index
    %c0_11 = arith.constant 0 : index
    %25 = vector.load %arg4[%c0_10, %c0_11] : memref<128x128xf32, #tpu.memory_space<vmem>>, vector<128x128xf32>
    %cst_12 = arith.constant dense<0.000000e+00> : vector<2x128xf32>
    %26 = tpu.matmul %24, %25, %cst_12 {dimension_numbers = #tpu.dot_dimension_numbers<[1], [0], [0], [1], [0, 0, 1, 1], [], []>} : vector<2x128xf32>, vector<128x128xf32>, vector<2x128xf32> -> vector<2x128xf32>
    %c0_13 = arith.constant 0 : index
    %c0_14 = arith.constant 0 : index
    %27 = vector.load %arg5[%c0_13, %c0_14] : memref<1x128xf32, #tpu.memory_space<vmem>>, vector<1x128xf32>
    %28 = vector.broadcast %27 : vector<1x128xf32> to vector<2x128xf32>
    %29 = arith.addf %26, %28 : vector<2x128xf32>
    %c0_15 = arith.constant 0 : index
    %c0_16 = arith.constant 0 : index
    %30 = vector.load %arg6[%c0_15, %c0_16] : memref<2x128xf32, #tpu.memory_space<vmem>>, vector<2x128xf32>
    tpu.vector_store %arg6[%c0_15, %c0_16], %29 {strides = array<i32>} : memref<2x128xf32, #tpu.memory_space<vmem>>, vector<2x128xf32>,
    return
  }
  func.func @transform_0(%arg0: i32) -> (i32, i32, i32) {
    %c0_i32 = arith.constant 0 : i32
    %c0_i32_0 = arith.constant 0 : i32
    %c0_i32_1 = arith.constant 0 : i32
    %c0_i32_2 = arith.constant 0 : i32
    return %c0_i32, %c0_i32_0, %c0_i32_1 : i32, i32, i32
  }
  func.func @transform_1(%arg0: i32) -> (i32, i32) {
    %c0_i32 = arith.constant 0 : i32
    %c0_i32_0 = arith.constant 0 : i32
    %c0_i32_1 = arith.constant 0 : i32
    return %c0_i32, %c0_i32_0 : i32, i32
  }
  func.func @transform_2(%arg0: i32) -> (i32, i32) {
    %c0_i32 = arith.constant 0 : i32
    %c0_i32_0 = arith.constant 0 : i32
    %c0_i32_1 = arith.constant 0 : i32
    return %c0_i32, %c0_i32_0 : i32, i32
  }
  func.func @transform_3(%arg0: i32) -> (i32, i32) {
    %c0_i32 = arith.constant 0 : i32
    %c0_i32_0 = arith.constant 0 : i32
    %c0_i32_1 = arith.constant 0 : i32
    return %c0_i32, %c0_i32_0 : i32, i32
  }
  func.func @transform_4(%arg0: i32) -> (i32, i32) {
    %c0_i32 = arith.constant 0 : i32
    %c0_i32_0 = arith.constant 0 : i32
    %c0_i32_1 = arith.constant 0 : i32
    return %c0_i32, %c0_i32_0 : i32, i32
  }
  func.func @transform_5(%arg0: i32) -> (i32, i32) {
    %c0_i32 = arith.constant 0 : i32
    %c0_i32_0 = arith.constant 0 : i32
    %c0_i32_1 = arith.constant 0 : i32
    return %c0_i32, %c0_i32_0 : i32, i32
  }
}

module attributes {stable_mosaic.version = 11 : i64} {
  func.func @_patch_embed_kernel(%arg0: i32, %arg1: memref<1x4x768xf32, #tpu.memory_space<vmem>>, %arg2: memref<768x128xf32, #tpu.memory_space<vmem>>, %arg3: memref<1x128xf32, #tpu.memory_space<vmem>>, %arg4: memref<1x128xf32, #tpu.memory_space<vmem>>, %arg5: memref<8x128xf32, #tpu.memory_space<vmem>>, %arg6: memref<1x8x128xf32, #tpu.memory_space<vmem>>) attributes {dimension_semantics = [#tpu.dimension_semantics<parallel>], iteration_bounds = array<i64: 2>, scalar_prefetch = 0 : i64, scratch_operands = 0 : i64, tpu.core_type = #tpu.core_type<tc>, window_params = [{transform_indices = @transform_0, window_bounds = array<i64: 1, 4, 768>}, {pipeline_mode = #tpu.pipeline_mode<synchronous>, transform_indices = @transform_1, window_bounds = array<i64: 768, 128>}, {pipeline_mode = #tpu.pipeline_mode<synchronous>, transform_indices = @transform_2, window_bounds = array<i64: 1, 128>}, {pipeline_mode = #tpu.pipeline_mode<synchronous>, transform_indices = @transform_3, window_bounds = array<i64: 1, 128>}, {pipeline_mode = #tpu.pipeline_mode<synchronous>, transform_indices = @transform_4, window_bounds = array<i64: 8, 128>}, {transform_indices = @transform_5, window_bounds = array<i64: 1, 8, 128>}]} {
    %c0 = arith.constant 0 : index
    %c0_0 = arith.constant 0 : index
    %c0_1 = arith.constant 0 : index
    %0 = vector.load %arg1[%c0, %c0_0, %c0_1] : memref<1x4x768xf32, #tpu.memory_space<vmem>>, vector<1x4x768xf32>
    %1 = vector.shape_cast %0 : vector<1x4x768xf32> to vector<4x768xf32>
    %c0_2 = arith.constant 0 : index
    %c0_3 = arith.constant 0 : index
    %2 = vector.load %arg2[%c0_2, %c0_3] : memref<768x128xf32, #tpu.memory_space<vmem>>, vector<768x128xf32>
    %cst = arith.constant dense<0.000000e+00> : vector<4x128xf32>
    %3 = tpu.matmul %1, %2, %cst {dimension_numbers = #tpu.dot_dimension_numbers<[1], [0], [0], [1], [0, 0, 1, 1], [], []>} : vector<4x768xf32>, vector<768x128xf32>, vector<4x128xf32> -> vector<4x128xf32>
    %c0_4 = arith.constant 0 : index
    %c0_5 = arith.constant 0 : index
    %4 = vector.load %arg3[%c0_4, %c0_5] : memref<1x128xf32, #tpu.memory_space<vmem>>, vector<1x128xf32>
    %5 = vector.broadcast %4 : vector<1x128xf32> to vector<4x128xf32>
    %6 = arith.addf %3, %5 : vector<4x128xf32>
    %c0_6 = arith.constant 0 : index
    %c0_7 = arith.constant 0 : index
    %7 = vector.load %arg4[%c0_6, %c0_7] : memref<1x128xf32, #tpu.memory_space<vmem>>, vector<1x128xf32>
    %cst_8 = arith.constant 0.000000e+00 : f32
    %8 = vector.broadcast %cst_8 : f32 to vector<3x128xf32>
    %9 = tpu.concatenate %7, %6, %8 in 0 : vector<1x128xf32>, vector<4x128xf32>, vector<3x128xf32> -> vector<8x128xf32>
    %c0_9 = arith.constant 0 : index
    %c0_10 = arith.constant 0 : index
    %10 = vector.load %arg5[%c0_9, %c0_10] : memref<8x128xf32, #tpu.memory_space<vmem>>, vector<8x128xf32>
    %11 = arith.addf %9, %10 : vector<8x128xf32>
    %c0_11 = arith.constant 0 : index
    %c0_12 = arith.constant 0 : index
    %c0_13 = arith.constant 0 : index
    %12 = vector.load %arg6[%c0_11, %c0_12, %c0_13] : memref<1x8x128xf32, #tpu.memory_space<vmem>>, vector<1x8x128xf32>
    %13 = vector.shape_cast %12 : vector<1x8x128xf32> to vector<8x128xf32>
    %14 = vector.shape_cast %11 : vector<8x128xf32> to vector<1x8x128xf32>
    tpu.vector_store %arg6[%c0_11, %c0_12, %c0_13], %14 {strides = array<i32>} : memref<1x8x128xf32, #tpu.memory_space<vmem>>, vector<1x8x128xf32>,
    return
  }
  func.func @transform_0(%arg0: i32) -> (i32, i32, i32) {
    %c0_i32 = arith.constant 0 : i32
    %c0_i32_0 = arith.constant 0 : i32
    %c0_i32_1 = arith.constant 0 : i32
    return %arg0, %c0_i32, %c0_i32_0 : i32, i32, i32
  }
  func.func @transform_1(%arg0: i32) -> (i32, i32) {
    %c0_i32 = arith.constant 0 : i32
    %c0_i32_0 = arith.constant 0 : i32
    %c0_i32_1 = arith.constant 0 : i32
    return %c0_i32, %c0_i32_0 : i32, i32
  }
  func.func @transform_2(%arg0: i32) -> (i32, i32) {
    %c0_i32 = arith.constant 0 : i32
    %c0_i32_0 = arith.constant 0 : i32
    %c0_i32_1 = arith.constant 0 : i32
    return %c0_i32, %c0_i32_0 : i32, i32
  }
  func.func @transform_3(%arg0: i32) -> (i32, i32) {
    %c0_i32 = arith.constant 0 : i32
    %c0_i32_0 = arith.constant 0 : i32
    %c0_i32_1 = arith.constant 0 : i32
    return %c0_i32, %c0_i32_0 : i32, i32
  }
  func.func @transform_4(%arg0: i32) -> (i32, i32) {
    %c0_i32 = arith.constant 0 : i32
    %c0_i32_0 = arith.constant 0 : i32
    %c0_i32_1 = arith.constant 0 : i32
    return %c0_i32, %c0_i32_0 : i32, i32
  }
  func.func @transform_5(%arg0: i32) -> (i32, i32, i32) {
    %c0_i32 = arith.constant 0 : i32
    %c0_i32_0 = arith.constant 0 : i32
    %c0_i32_1 = arith.constant 0 : i32
    return %arg0, %c0_i32, %c0_i32_0 : i32, i32, i32
  }
}

module attributes {stable_mosaic.version = 11 : i64} {
  func.func @_block_kernel(%arg0: i32, %arg1: memref<1x8x128xf32, #tpu.memory_space<vmem>>, %arg2: memref<1x128xf32, #tpu.memory_space<vmem>>, %arg3: memref<1x128xf32, #tpu.memory_space<vmem>>, %arg4: memref<128x384xf32, #tpu.memory_space<vmem>>, %arg5: memref<1x384xf32, #tpu.memory_space<vmem>>, %arg6: memref<128x128xf32, #tpu.memory_space<vmem>>, %arg7: memref<1x128xf32, #tpu.memory_space<vmem>>, %arg8: memref<1x128xf32, #tpu.memory_space<vmem>>, %arg9: memref<1x128xf32, #tpu.memory_space<vmem>>, %arg10: memref<128x512xf32, #tpu.memory_space<vmem>>, %arg11: memref<1x512xf32, #tpu.memory_space<vmem>>, %arg12: memref<512x128xf32, #tpu.memory_space<vmem>>, %arg13: memref<1x128xf32, #tpu.memory_space<vmem>>, %arg14: memref<1x8x128xf32, #tpu.memory_space<vmem>>) attributes {dimension_semantics = [#tpu.dimension_semantics<parallel>], iteration_bounds = array<i64: 2>, scalar_prefetch = 0 : i64, scratch_operands = 0 : i64, tpu.core_type = #tpu.core_type<tc>, window_params = [{transform_indices = @transform_0, window_bounds = array<i64: 1, 8, 128>}, {pipeline_mode = #tpu.pipeline_mode<synchronous>, transform_indices = @transform_1, window_bounds = array<i64: 1, 128>}, {pipeline_mode = #tpu.pipeline_mode<synchronous>, transform_indices = @transform_2, window_bounds = array<i64: 1, 128>}, {pipeline_mode = #tpu.pipeline_mode<synchronous>, transform_indices = @transform_3, window_bounds = array<i64: 128, 384>}, {pipeline_mode = #tpu.pipeline_mode<synchronous>, transform_indices = @transform_4, window_bounds = array<i64: 1, 384>}, {pipeline_mode = #tpu.pipeline_mode<synchronous>, transform_indices = @transform_5, window_bounds = array<i64: 128, 128>}, {pipeline_mode = #tpu.pipeline_mode<synchronous>, transform_indices = @transform_6, window_bounds = array<i64: 1, 128>}, {pipeline_mode = #tpu.pipeline_mode<synchronous>, transform_indices = @transform_7, window_bounds = array<i64: 1, 128>}, {pipeline_mode = #tpu.pipeline_mode<synchronous>, transform_indices = @transform_8, window_bounds = array<i64: 1, 128>}, {pipeline_mode = #tpu.pipeline_mode<synchronous>, transform_indices = @transform_9, window_bounds = array<i64: 128, 512>}, {pipeline_mode = #tpu.pipeline_mode<synchronous>, transform_indices = @transform_10, window_bounds = array<i64: 1, 512>}, {pipeline_mode = #tpu.pipeline_mode<synchronous>, transform_indices = @transform_11, window_bounds = array<i64: 512, 128>}, {pipeline_mode = #tpu.pipeline_mode<synchronous>, transform_indices = @transform_12, window_bounds = array<i64: 1, 128>}, {transform_indices = @transform_13, window_bounds = array<i64: 1, 8, 128>}]} {
    %c0 = arith.constant 0 : index
    %c0_0 = arith.constant 0 : index
    %c0_1 = arith.constant 0 : index
    %0 = vector.load %arg1[%c0, %c0_0, %c0_1] : memref<1x8x128xf32, #tpu.memory_space<vmem>>, vector<1x8x128xf32>
    %1 = vector.shape_cast %0 : vector<1x8x128xf32> to vector<8x128xf32>
    %c0_2 = arith.constant 0 : index
    %c0_3 = arith.constant 0 : index
    %2 = vector.load %arg2[%c0_2, %c0_3] : memref<1x128xf32, #tpu.memory_space<vmem>>, vector<1x128xf32>
    %c0_4 = arith.constant 0 : index
    %c0_5 = arith.constant 0 : index
    %3 = vector.load %arg3[%c0_4, %c0_5] : memref<1x128xf32, #tpu.memory_space<vmem>>, vector<1x128xf32>
    %cst = arith.constant dense<0.000000e+00> : vector<8xf32>
    %4 = vector.multi_reduction <add>, %1, %cst [1] : vector<8x128xf32> to vector<8xf32>
    %5 = vector.shape_cast %4 : vector<8xf32> to vector<8x1xf32>
    %cst_6 = arith.constant 1.280000e+02 : f32
    %6 = vector.broadcast %cst_6 : f32 to vector<8x1xf32>
    %7 = arith.divf %5, %6 : vector<8x1xf32>
    %8 = vector.broadcast %7 : vector<8x1xf32> to vector<8x128xf32>
    %9 = arith.subf %1, %8 : vector<8x128xf32>
    %10 = arith.mulf %9, %9 : vector<8x128xf32>
    %cst_7 = arith.constant dense<0.000000e+00> : vector<8xf32>
    %11 = vector.multi_reduction <add>, %10, %cst_7 [1] : vector<8x128xf32> to vector<8xf32>
    %12 = vector.shape_cast %11 : vector<8xf32> to vector<8x1xf32>
    %cst_8 = arith.constant 1.280000e+02 : f32
    %13 = vector.broadcast %cst_8 : f32 to vector<8x1xf32>
    %14 = arith.divf %12, %13 : vector<8x1xf32>
    %cst_9 = arith.constant 9.99999997E-7 : f32
    %15 = vector.broadcast %cst_9 : f32 to vector<8x1xf32>
    %16 = arith.addf %14, %15 : vector<8x1xf32>
    %17 = math.rsqrt %16 : vector<8x1xf32>
    %18 = vector.broadcast %17 : vector<8x1xf32> to vector<8x128xf32>
    %19 = arith.mulf %9, %18 : vector<8x128xf32>
    %20 = vector.broadcast %2 : vector<1x128xf32> to vector<8x128xf32>
    %21 = arith.mulf %19, %20 : vector<8x128xf32>
    %22 = vector.broadcast %3 : vector<1x128xf32> to vector<8x128xf32>
    %23 = arith.addf %21, %22 : vector<8x128xf32>
    %c0_10 = arith.constant 0 : index
    %c0_11 = arith.constant 0 : index
    %24 = vector.load %arg4[%c0_10, %c0_11] : memref<128x384xf32, #tpu.memory_space<vmem>>, vector<128x384xf32>
    %cst_12 = arith.constant dense<0.000000e+00> : vector<8x384xf32>
    %25 = tpu.matmul %23, %24, %cst_12 {dimension_numbers = #tpu.dot_dimension_numbers<[1], [0], [0], [1], [0, 0, 1, 1], [], []>} : vector<8x128xf32>, vector<128x384xf32>, vector<8x384xf32> -> vector<8x384xf32>
    %c0_13 = arith.constant 0 : index
    %c0_14 = arith.constant 0 : index
    %26 = vector.load %arg5[%c0_13, %c0_14] : memref<1x384xf32, #tpu.memory_space<vmem>>, vector<1x384xf32>
    %27 = vector.broadcast %26 : vector<1x384xf32> to vector<8x384xf32>
    %28 = arith.addf %25, %27 : vector<8x384xf32>
    %29 = vector.extract_strided_slice %28 {offsets = [0, 0], sizes = [8, 128], strides = [1, 1]} : vector<8x384xf32> to vector<8x128xf32>
    %30 = vector.extract_strided_slice %28 {offsets = [0, 128], sizes = [8, 128], strides = [1, 1]} : vector<8x384xf32> to vector<8x128xf32>
    %31 = vector.extract_strided_slice %28 {offsets = [0, 256], sizes = [8, 128], strides = [1, 1]} : vector<8x384xf32> to vector<8x128xf32>
    %32 = tpu.iota {dimensions = array<i32: 1>} : vector<8x8xi32>
    %c5_i32 = arith.constant 5 : i32
    %33 = vector.broadcast %c5_i32 : i32 to vector<8x8xi32>
    %34 = arith.cmpi slt, %32, %33 : vector<8x8xi32>
    %cst_15 = arith.constant 0.000000e+00 : f32
    %cst_16 = arith.constant -1.000000e+30 : f32
    %35 = vector.broadcast %cst_15 : f32 to vector<8x8xf32>
    %36 = vector.broadcast %cst_16 : f32 to vector<8x8xf32>
    %37 = arith.select %34, %35, %36 : vector<8x8xi1>, vector<8x8xf32>
    %38 = vector.extract_strided_slice %29 {offsets = [0, 0], sizes = [8, 32], strides = [1, 1]} : vector<8x128xf32> to vector<8x32xf32>
    %39 = vector.extract_strided_slice %30 {offsets = [0, 0], sizes = [8, 32], strides = [1, 1]} : vector<8x128xf32> to vector<8x32xf32>
    %40 = vector.extract_strided_slice %31 {offsets = [0, 0], sizes = [8, 32], strides = [1, 1]} : vector<8x128xf32> to vector<8x32xf32>
    %cst_17 = arith.constant dense<0.000000e+00> : vector<8x8xf32>
    %41 = tpu.matmul %38, %39, %cst_17 {dimension_numbers = #tpu.dot_dimension_numbers<[1], [1], [0], [0], [0, 0, 1, 0], [], []>} : vector<8x32xf32>, vector<8x32xf32>, vector<8x8xf32> -> vector<8x8xf32>
    %cst_18 = arith.constant 0.176776692 : f32
    %42 = vector.broadcast %cst_18 : f32 to vector<8x8xf32>
    %43 = arith.mulf %41, %42 : vector<8x8xf32>
    %44 = arith.addf %43, %37 : vector<8x8xf32>
    %cst_19 = arith.constant dense<0xFF800000> : vector<8xf32>
    %45 = vector.multi_reduction <maximumf>, %44, %cst_19 [1] : vector<8x8xf32> to vector<8xf32>
    %46 = vector.shape_cast %45 : vector<8xf32> to vector<8x1xf32>
    %47 = vector.broadcast %46 : vector<8x1xf32> to vector<8x8xf32>
    %48 = arith.subf %44, %47 : vector<8x8xf32>
    %49 = math.exp %48 : vector<8x8xf32>
    %cst_20 = arith.constant dense<0.000000e+00> : vector<8xf32>
    %50 = vector.multi_reduction <add>, %49, %cst_20 [1] : vector<8x8xf32> to vector<8xf32>
    %51 = vector.shape_cast %50 : vector<8xf32> to vector<8x1xf32>
    %52 = tpu.reciprocal %51 {approx = true} : vector<8x1xf32> -> vector<8x1xf32>
    %53 = vector.broadcast %52 : vector<8x1xf32> to vector<8x8xf32>
    %54 = arith.mulf %49, %53 : vector<8x8xf32>
    %cst_21 = arith.constant dense<0.000000e+00> : vector<8x32xf32>
    %55 = tpu.matmul %54, %40, %cst_21 {dimension_numbers = #tpu.dot_dimension_numbers<[1], [0], [0], [1], [0, 0, 1, 1], [], []>} : vector<8x8xf32>, vector<8x32xf32>, vector<8x32xf32> -> vector<8x32xf32>
    %56 = vector.extract_strided_slice %29 {offsets = [0, 32], sizes = [8, 32], strides = [1, 1]} : vector<8x128xf32> to vector<8x32xf32>
    %57 = vector.extract_strided_slice %30 {offsets = [0, 32], sizes = [8, 32], strides = [1, 1]} : vector<8x128xf32> to vector<8x32xf32>
    %58 = vector.extract_strided_slice %31 {offsets = [0, 32], sizes = [8, 32], strides = [1, 1]} : vector<8x128xf32> to vector<8x32xf32>
    %cst_22 = arith.constant dense<0.000000e+00> : vector<8x8xf32>
    %59 = tpu.matmul %56, %57, %cst_22 {dimension_numbers = #tpu.dot_dimension_numbers<[1], [1], [0], [0], [0, 0, 1, 0], [], []>} : vector<8x32xf32>, vector<8x32xf32>, vector<8x8xf32> -> vector<8x8xf32>
    %cst_23 = arith.constant 0.176776692 : f32
    %60 = vector.broadcast %cst_23 : f32 to vector<8x8xf32>
    %61 = arith.mulf %59, %60 : vector<8x8xf32>
    %62 = arith.addf %61, %37 : vector<8x8xf32>
    %cst_24 = arith.constant dense<0xFF800000> : vector<8xf32>
    %63 = vector.multi_reduction <maximumf>, %62, %cst_24 [1] : vector<8x8xf32> to vector<8xf32>
    %64 = vector.shape_cast %63 : vector<8xf32> to vector<8x1xf32>
    %65 = vector.broadcast %64 : vector<8x1xf32> to vector<8x8xf32>
    %66 = arith.subf %62, %65 : vector<8x8xf32>
    %67 = math.exp %66 : vector<8x8xf32>
    %cst_25 = arith.constant dense<0.000000e+00> : vector<8xf32>
    %68 = vector.multi_reduction <add>, %67, %cst_25 [1] : vector<8x8xf32> to vector<8xf32>
    %69 = vector.shape_cast %68 : vector<8xf32> to vector<8x1xf32>
    %70 = tpu.reciprocal %69 {approx = true} : vector<8x1xf32> -> vector<8x1xf32>
    %71 = vector.broadcast %70 : vector<8x1xf32> to vector<8x8xf32>
    %72 = arith.mulf %67, %71 : vector<8x8xf32>
    %cst_26 = arith.constant dense<0.000000e+00> : vector<8x32xf32>
    %73 = tpu.matmul %72, %58, %cst_26 {dimension_numbers = #tpu.dot_dimension_numbers<[1], [0], [0], [1], [0, 0, 1, 1], [], []>} : vector<8x8xf32>, vector<8x32xf32>, vector<8x32xf32> -> vector<8x32xf32>
    %74 = vector.extract_strided_slice %29 {offsets = [0, 64], sizes = [8, 32], strides = [1, 1]} : vector<8x128xf32> to vector<8x32xf32>
    %75 = vector.extract_strided_slice %30 {offsets = [0, 64], sizes = [8, 32], strides = [1, 1]} : vector<8x128xf32> to vector<8x32xf32>
    %76 = vector.extract_strided_slice %31 {offsets = [0, 64], sizes = [8, 32], strides = [1, 1]} : vector<8x128xf32> to vector<8x32xf32>
    %cst_27 = arith.constant dense<0.000000e+00> : vector<8x8xf32>
    %77 = tpu.matmul %74, %75, %cst_27 {dimension_numbers = #tpu.dot_dimension_numbers<[1], [1], [0], [0], [0, 0, 1, 0], [], []>} : vector<8x32xf32>, vector<8x32xf32>, vector<8x8xf32> -> vector<8x8xf32>
    %cst_28 = arith.constant 0.176776692 : f32
    %78 = vector.broadcast %cst_28 : f32 to vector<8x8xf32>
    %79 = arith.mulf %77, %78 : vector<8x8xf32>
    %80 = arith.addf %79, %37 : vector<8x8xf32>
    %cst_29 = arith.constant dense<0xFF800000> : vector<8xf32>
    %81 = vector.multi_reduction <maximumf>, %80, %cst_29 [1] : vector<8x8xf32> to vector<8xf32>
    %82 = vector.shape_cast %81 : vector<8xf32> to vector<8x1xf32>
    %83 = vector.broadcast %82 : vector<8x1xf32> to vector<8x8xf32>
    %84 = arith.subf %80, %83 : vector<8x8xf32>
    %85 = math.exp %84 : vector<8x8xf32>
    %cst_30 = arith.constant dense<0.000000e+00> : vector<8xf32>
    %86 = vector.multi_reduction <add>, %85, %cst_30 [1] : vector<8x8xf32> to vector<8xf32>
    %87 = vector.shape_cast %86 : vector<8xf32> to vector<8x1xf32>
    %88 = tpu.reciprocal %87 {approx = true} : vector<8x1xf32> -> vector<8x1xf32>
    %89 = vector.broadcast %88 : vector<8x1xf32> to vector<8x8xf32>
    %90 = arith.mulf %85, %89 : vector<8x8xf32>
    %cst_31 = arith.constant dense<0.000000e+00> : vector<8x32xf32>
    %91 = tpu.matmul %90, %76, %cst_31 {dimension_numbers = #tpu.dot_dimension_numbers<[1], [0], [0], [1], [0, 0, 1, 1], [], []>} : vector<8x8xf32>, vector<8x32xf32>, vector<8x32xf32> -> vector<8x32xf32>
    %92 = vector.extract_strided_slice %29 {offsets = [0, 96], sizes = [8, 32], strides = [1, 1]} : vector<8x128xf32> to vector<8x32xf32>
    %93 = vector.extract_strided_slice %30 {offsets = [0, 96], sizes = [8, 32], strides = [1, 1]} : vector<8x128xf32> to vector<8x32xf32>
    %94 = vector.extract_strided_slice %31 {offsets = [0, 96], sizes = [8, 32], strides = [1, 1]} : vector<8x128xf32> to vector<8x32xf32>
    %cst_32 = arith.constant dense<0.000000e+00> : vector<8x8xf32>
    %95 = tpu.matmul %92, %93, %cst_32 {dimension_numbers = #tpu.dot_dimension_numbers<[1], [1], [0], [0], [0, 0, 1, 0], [], []>} : vector<8x32xf32>, vector<8x32xf32>, vector<8x8xf32> -> vector<8x8xf32>
    %cst_33 = arith.constant 0.176776692 : f32
    %96 = vector.broadcast %cst_33 : f32 to vector<8x8xf32>
    %97 = arith.mulf %95, %96 : vector<8x8xf32>
    %98 = arith.addf %97, %37 : vector<8x8xf32>
    %cst_34 = arith.constant dense<0xFF800000> : vector<8xf32>
    %99 = vector.multi_reduction <maximumf>, %98, %cst_34 [1] : vector<8x8xf32> to vector<8xf32>
    %100 = vector.shape_cast %99 : vector<8xf32> to vector<8x1xf32>
    %101 = vector.broadcast %100 : vector<8x1xf32> to vector<8x8xf32>
    %102 = arith.subf %98, %101 : vector<8x8xf32>
    %103 = math.exp %102 : vector<8x8xf32>
    %cst_35 = arith.constant dense<0.000000e+00> : vector<8xf32>
    %104 = vector.multi_reduction <add>, %103, %cst_35 [1] : vector<8x8xf32> to vector<8xf32>
    %105 = vector.shape_cast %104 : vector<8xf32> to vector<8x1xf32>
    %106 = tpu.reciprocal %105 {approx = true} : vector<8x1xf32> -> vector<8x1xf32>
    %107 = vector.broadcast %106 : vector<8x1xf32> to vector<8x8xf32>
    %108 = arith.mulf %103, %107 : vector<8x8xf32>
    %cst_36 = arith.constant dense<0.000000e+00> : vector<8x32xf32>
    %109 = tpu.matmul %108, %94, %cst_36 {dimension_numbers = #tpu.dot_dimension_numbers<[1], [0], [0], [1], [0, 0, 1, 1], [], []>} : vector<8x8xf32>, vector<8x32xf32>, vector<8x32xf32> -> vector<8x32xf32>
    %110 = tpu.concatenate %55, %73, %91, %109 in 1 : vector<8x32xf32>, vector<8x32xf32>, vector<8x32xf32>, vector<8x32xf32> -> vector<8x128xf32>
    %c0_37 = arith.constant 0 : index
    %c0_38 = arith.constant 0 : index
    %111 = vector.load %arg6[%c0_37, %c0_38] : memref<128x128xf32, #tpu.memory_space<vmem>>, vector<128x128xf32>
    %cst_39 = arith.constant dense<0.000000e+00> : vector<8x128xf32>
    %112 = tpu.matmul %110, %111, %cst_39 {dimension_numbers = #tpu.dot_dimension_numbers<[1], [0], [0], [1], [0, 0, 1, 1], [], []>} : vector<8x128xf32>, vector<128x128xf32>, vector<8x128xf32> -> vector<8x128xf32>
    %113 = arith.addf %1, %112 : vector<8x128xf32>
    %c0_40 = arith.constant 0 : index
    %c0_41 = arith.constant 0 : index
    %114 = vector.load %arg7[%c0_40, %c0_41] : memref<1x128xf32, #tpu.memory_space<vmem>>, vector<1x128xf32>
    %115 = vector.broadcast %114 : vector<1x128xf32> to vector<8x128xf32>
    %116 = arith.addf %113, %115 : vector<8x128xf32>
    %c0_42 = arith.constant 0 : index
    %c0_43 = arith.constant 0 : index
    %117 = vector.load %arg8[%c0_42, %c0_43] : memref<1x128xf32, #tpu.memory_space<vmem>>, vector<1x128xf32>
    %c0_44 = arith.constant 0 : index
    %c0_45 = arith.constant 0 : index
    %118 = vector.load %arg9[%c0_44, %c0_45] : memref<1x128xf32, #tpu.memory_space<vmem>>, vector<1x128xf32>
    %cst_46 = arith.constant dense<0.000000e+00> : vector<8xf32>
    %119 = vector.multi_reduction <add>, %116, %cst_46 [1] : vector<8x128xf32> to vector<8xf32>
    %120 = vector.shape_cast %119 : vector<8xf32> to vector<8x1xf32>
    %cst_47 = arith.constant 1.280000e+02 : f32
    %121 = vector.broadcast %cst_47 : f32 to vector<8x1xf32>
    %122 = arith.divf %120, %121 : vector<8x1xf32>
    %123 = vector.broadcast %122 : vector<8x1xf32> to vector<8x128xf32>
    %124 = arith.subf %116, %123 : vector<8x128xf32>
    %125 = arith.mulf %124, %124 : vector<8x128xf32>
    %cst_48 = arith.constant dense<0.000000e+00> : vector<8xf32>
    %126 = vector.multi_reduction <add>, %125, %cst_48 [1] : vector<8x128xf32> to vector<8xf32>
    %127 = vector.shape_cast %126 : vector<8xf32> to vector<8x1xf32>
    %cst_49 = arith.constant 1.280000e+02 : f32
    %128 = vector.broadcast %cst_49 : f32 to vector<8x1xf32>
    %129 = arith.divf %127, %128 : vector<8x1xf32>
    %cst_50 = arith.constant 9.99999997E-7 : f32
    %130 = vector.broadcast %cst_50 : f32 to vector<8x1xf32>
    %131 = arith.addf %129, %130 : vector<8x1xf32>
    %132 = math.rsqrt %131 : vector<8x1xf32>
    %133 = vector.broadcast %132 : vector<8x1xf32> to vector<8x128xf32>
    %134 = arith.mulf %124, %133 : vector<8x128xf32>
    %135 = vector.broadcast %117 : vector<1x128xf32> to vector<8x128xf32>
    %136 = arith.mulf %134, %135 : vector<8x128xf32>
    %137 = vector.broadcast %118 : vector<1x128xf32> to vector<8x128xf32>
    %138 = arith.addf %136, %137 : vector<8x128xf32>
    %c0_51 = arith.constant 0 : index
    %c0_52 = arith.constant 0 : index
    %139 = vector.load %arg10[%c0_51, %c0_52] : memref<128x512xf32, #tpu.memory_space<vmem>>, vector<128x512xf32>
    %cst_53 = arith.constant dense<0.000000e+00> : vector<8x512xf32>
    %140 = tpu.matmul %138, %139, %cst_53 {dimension_numbers = #tpu.dot_dimension_numbers<[1], [0], [0], [1], [0, 0, 1, 1], [], []>} : vector<8x128xf32>, vector<128x512xf32>, vector<8x512xf32> -> vector<8x512xf32>
    %c0_54 = arith.constant 0 : index
    %c0_55 = arith.constant 0 : index
    %141 = vector.load %arg11[%c0_54, %c0_55] : memref<1x512xf32, #tpu.memory_space<vmem>>, vector<1x512xf32>
    %142 = vector.broadcast %141 : vector<1x512xf32> to vector<8x512xf32>
    %143 = arith.addf %140, %142 : vector<8x512xf32>
    %cst_56 = arith.constant 5.000000e-01 : f32
    %144 = vector.broadcast %cst_56 : f32 to vector<8x512xf32>
    %145 = arith.mulf %144, %143 : vector<8x512xf32>
    %cst_57 = arith.constant 0.707106769 : f32
    %146 = vector.broadcast %cst_57 : f32 to vector<8x512xf32>
    %147 = arith.mulf %143, %146 : vector<8x512xf32>
    %148 = math.erf %147 : vector<8x512xf32>
    %cst_58 = arith.constant 1.000000e+00 : f32
    %149 = vector.broadcast %cst_58 : f32 to vector<8x512xf32>
    %150 = arith.addf %149, %148 : vector<8x512xf32>
    %151 = arith.mulf %145, %150 : vector<8x512xf32>
    %c0_59 = arith.constant 0 : index
    %c0_60 = arith.constant 0 : index
    %152 = vector.load %arg12[%c0_59, %c0_60] : memref<512x128xf32, #tpu.memory_space<vmem>>, vector<512x128xf32>
    %cst_61 = arith.constant dense<0.000000e+00> : vector<8x128xf32>
    %153 = tpu.matmul %151, %152, %cst_61 {dimension_numbers = #tpu.dot_dimension_numbers<[1], [0], [0], [1], [0, 0, 1, 1], [], []>} : vector<8x512xf32>, vector<512x128xf32>, vector<8x128xf32> -> vector<8x128xf32>
    %154 = arith.addf %116, %153 : vector<8x128xf32>
    %c0_62 = arith.constant 0 : index
    %c0_63 = arith.constant 0 : index
    %155 = vector.load %arg13[%c0_62, %c0_63] : memref<1x128xf32, #tpu.memory_space<vmem>>, vector<1x128xf32>
    %156 = vector.broadcast %155 : vector<1x128xf32> to vector<8x128xf32>
    %157 = arith.addf %154, %156 : vector<8x128xf32>
    %c0_64 = arith.constant 0 : index
    %c0_65 = arith.constant 0 : index
    %c0_66 = arith.constant 0 : index
    %158 = vector.load %arg14[%c0_64, %c0_65, %c0_66] : memref<1x8x128xf32, #tpu.memory_space<vmem>>, vector<1x8x128xf32>
    %159 = vector.shape_cast %158 : vector<1x8x128xf32> to vector<8x128xf32>
    %160 = vector.shape_cast %157 : vector<8x128xf32> to vector<1x8x128xf32>
    tpu.vector_store %arg14[%c0_64, %c0_65, %c0_66], %160 {strides = array<i32>} : memref<1x8x128xf32, #tpu.memory_space<vmem>>, vector<1x8x128xf32>,
    return
  }
  func.func @transform_0(%arg0: i32) -> (i32, i32, i32) {
    %c0_i32 = arith.constant 0 : i32
    %c0_i32_0 = arith.constant 0 : i32
    %c0_i32_1 = arith.constant 0 : i32
    return %arg0, %c0_i32, %c0_i32_0 : i32, i32, i32
  }
  func.func @transform_1(%arg0: i32) -> (i32, i32) {
    %c0_i32 = arith.constant 0 : i32
    %c0_i32_0 = arith.constant 0 : i32
    %c0_i32_1 = arith.constant 0 : i32
    return %c0_i32, %c0_i32_0 : i32, i32
  }
  func.func @transform_2(%arg0: i32) -> (i32, i32) {
    %c0_i32 = arith.constant 0 : i32
    %c0_i32_0 = arith.constant 0 : i32
    %c0_i32_1 = arith.constant 0 : i32
    return %c0_i32, %c0_i32_0 : i32, i32
  }
  func.func @transform_3(%arg0: i32) -> (i32, i32) {
    %c0_i32 = arith.constant 0 : i32
    %c0_i32_0 = arith.constant 0 : i32
    %c0_i32_1 = arith.constant 0 : i32
    return %c0_i32, %c0_i32_0 : i32, i32
  }
  func.func @transform_4(%arg0: i32) -> (i32, i32) {
    %c0_i32 = arith.constant 0 : i32
    %c0_i32_0 = arith.constant 0 : i32
    %c0_i32_1 = arith.constant 0 : i32
    return %c0_i32, %c0_i32_0 : i32, i32
  }
  func.func @transform_5(%arg0: i32) -> (i32, i32) {
    %c0_i32 = arith.constant 0 : i32
    %c0_i32_0 = arith.constant 0 : i32
    %c0_i32_1 = arith.constant 0 : i32
    return %c0_i32, %c0_i32_0 : i32, i32
  }
  func.func @transform_6(%arg0: i32) -> (i32, i32) {
    %c0_i32 = arith.constant 0 : i32
    %c0_i32_0 = arith.constant 0 : i32
    %c0_i32_1 = arith.constant 0 : i32
    return %c0_i32, %c0_i32_0 : i32, i32
  }
  func.func @transform_7(%arg0: i32) -> (i32, i32) {
    %c0_i32 = arith.constant 0 : i32
    %c0_i32_0 = arith.constant 0 : i32
    %c0_i32_1 = arith.constant 0 : i32
    return %c0_i32, %c0_i32_0 : i32, i32
  }
  func.func @transform_8(%arg0: i32) -> (i32, i32) {
    %c0_i32 = arith.constant 0 : i32
    %c0_i32_0 = arith.constant 0 : i32
    %c0_i32_1 = arith.constant 0 : i32
    return %c0_i32, %c0_i32_0 : i32, i32
  }
  func.func @transform_9(%arg0: i32) -> (i32, i32) {
    %c0_i32 = arith.constant 0 : i32
    %c0_i32_0 = arith.constant 0 : i32
    %c0_i32_1 = arith.constant 0 : i32
    return %c0_i32, %c0_i32_0 : i32, i32
  }
  func.func @transform_10(%arg0: i32) -> (i32, i32) {
    %c0_i32 = arith.constant 0 : i32
    %c0_i32_0 = arith.constant 0 : i32
    %c0_i32_1 = arith.constant 0 : i32
    return %c0_i32, %c0_i32_0 : i32, i32
  }
  func.func @transform_11(%arg0: i32) -> (i32, i32) {
    %c0_i32 = arith.constant 0 : i32
    %c0_i32_0 = arith.constant 0 : i32
    %c0_i32_1 = arith.constant 0 : i32
    return %c0_i32, %c0_i32_0 : i32, i32
  }
  func.func @transform_12(%arg0: i32) -> (i32, i32) {
    %c0_i32 = arith.constant 0 : i32
    %c0_i32_0 = arith.constant 0 : i32
    %c0_i32_1 = arith.constant 0 : i32
    return %c0_i32, %c0_i32_0 : i32, i32
  }
  func.func @transform_13(%arg0: i32) -> (i32, i32, i32) {
    %c0_i32 = arith.constant 0 : i32
    %c0_i32_0 = arith.constant 0 : i32
    %c0_i32_1 = arith.constant 0 : i32
    return %arg0, %c0_i32, %c0_i32_0 : i32, i32, i32
  }
}

</mosaic_0001>

<llo_original>
// kernel: vit_forward.7
$region0: #{vit_forward.7}
  #allocation0 [shape = 'u32[]', space=smem, size = 0x4, offset = 0x4, fixed_abs, tag = 'smem constant byte address 0x4 - core index']
  #allocation1 [shape = 'u32[144,128]{1,0:T(1,128)}', space=vmem, size = 0x12000, scoped, tag = 'internal scratch']
  %s0 = inlined_call_operand.vmem [shape: f32[2,8,128], index: 0, kind: input, shape index: {}]
  %s1 = inlined_call_operand.vmem [shape: f32[1,128], index: 1, kind: input, shape index: {}]
  %s2 = inlined_call_operand.vmem [shape: f32[1,128], index: 2, kind: input, shape index: {}]
  %s3 = inlined_call_operand.vmem [shape: f32[128,128], index: 3, kind: input, shape index: {}]
  %s4 = inlined_call_operand.vmem [shape: f32[1,128], index: 4, kind: input, shape index: {}]
  %s5 = inlined_call_operand.hbm [shape: f32[2,128], index: 5, kind: output, shape index: {}]
  %s6 = sld [smem:[#allocation0]]
  $region30: #{vit_forward.7} parent=0
    _
  %s8 = ssub.s32 1, %s6
  %s9 = scalar_select 0, %s8, %s6
  $region1: #{vit_forward.7} parent=0
    #allocation2 [shape = 'u8[1024]{0}', space=vmem, size = 0x400, scoped, tag = 'output window, operand 0, single buffered']
    #allocation3 [shape = 's32[1]{0}', space=sflag, size = 0x4, scoped, tag = 'scoped memory for vit_forward.7']
    %10 = vsyncpa [#allocation3], 0
    // Predicated region
    $region2: #{vit_forward.7} parent=1 // pred_check
      _
    $region3: #{vit_forward.7} parent=1 // pred_check_branch
      %12 = sbr.rel (0) target = $region5
    $region4: #{vit_forward.7} parent=1 // pred_region
      _
    $region5: #{vit_forward.7} parent=1 // pred_fallthru
      _
    // Predicated region
    $region6: #{vit_forward.7} parent=1 // pred_check
      _
    $region7: #{vit_forward.7} parent=1 // pred_check_branch
      %14 = sbr.rel (0) target = $region9
    $region8: #{vit_forward.7} parent=1 // pred_region
      _
    $region9: #{vit_forward.7} parent=1 // pred_fallthru
      _
    // Predicated region
    $region10: #{vit_forward.7} parent=1 // pred_check
      _
    $region11: #{vit_forward.7} parent=1 // pred_check_branch
      %16 = sbr.rel (0) target = $region13
    $region12: #{vit_forward.7} parent=1 // pred_region
      _
    $region13: #{vit_forward.7} parent=1 // pred_fallthru
      _
    // Predicated region
    $region14: #{vit_forward.7} parent=1 // pred_check
      _
    $region15: #{vit_forward.7} parent=1 // pred_check_branch
      %18 = sbr.rel (0) target = $region17
    $region16: #{vit_forward.7} parent=1 // pred_region
      _
    $region17: #{vit_forward.7} parent=1 // pred_fallthru
      _
    // Predicated region
    $region18: #{vit_forward.7} parent=1 // pred_check
      _
    $region19: #{vit_forward.7} parent=1 // pred_check_branch
      %20 = sbr.rel (0) target = $region21
    $region20: #{vit_forward.7} parent=1 // pred_region
      _
    $region21: #{vit_forward.7} parent=1 // pred_fallthru
      _
    %v21 = vld [vmem:[%s0] sm:$0xff]
    %v22 = vld [vmem:[%s0 + $0x8] sm:$0xff]
    %v23 = vld [vmem:[%s1] sm:$0x1]
    %v24 = vld [vmem:[%s2] sm:$0x1]
    %v27 = vrot.slane %v22, 7
    %vm28 = vcmask 1041409
    %v29 = vsel %vm28, %v27, %v21
    %vm31 = vcmask 1041408
    %v32 = vsel %vm31, %v29, 0.0
    %33 = vadd.xlane.f32.xlu0 %v32
    %v34 = vpop.xlane.xlu0 %33
    %v35 = vrcp.pop 128.0
    %v36 = vmul.f32 %v34, %v35
    %v38 = vrot.slane %v36, 1
    %v41 = vsub.f32 %v21, %v36
    %v42 = vsub.f32 %v22, %v38
    %v43 = vmul.f32 %v41, %v41
    %v44 = vmul.f32 %v42, %v42
    %v47 = vrot.slane %v44, 7
    %v48 = vsel %vm28, %v47, %v43
    %v50 = vsel %vm31, %v48, 0.0
    %51 = vadd.xlane.f32.xlu0 %v50
    %v52 = vpop.xlane.xlu0 %51
    %v53 = vmul.f32 %v52, %v35
    %v54 = vadd.f32 %v53, 1e-06
    %v55 = vrsqrt.pop %v54
    %v57 = vrot.slane %v55, 1
    %v60 = vmul.f32 %v41, %v55
    %v61 = vmul.f32 %v42, %v57
    %v63 = vlaneseq
    %v64 = vshrl.u32 %v63, 7
    %v65 = vsub.s32 0, %v64
    %v66 = vrot.slane %v23, %v65
    %v68 = vmul.f32 %v60, %v66
    %v69 = vmul.f32 %v61, %v66
    %v71 = vlaneseq
    %v72 = vshrl.u32 %v71, 7
    %v73 = vsub.s32 0, %v72
    %v74 = vrot.slane %v24, %v73
    %v76 = vadd.f32 %v68, %v74
    %v77 = vadd.f32 %v69, %v74
    %v78 = vld [vmem:[%s3] sm:$0xff]
    %v79 = vld [vmem:[%s3 + $0x8] sm:$0xff]
    %v80 = vld [vmem:[%s3 + $0x10] sm:$0xff]
    %v81 = vld [vmem:[%s3 + $0x18] sm:$0xff]
    %v82 = vld [vmem:[%s3 + $0x20] sm:$0xff]
    %v83 = vld [vmem:[%s3 + $0x28] sm:$0xff]
    %v84 = vld [vmem:[%s3 + $0x30] sm:$0xff]
    %v85 = vld [vmem:[%s3 + $0x38] sm:$0xff]
    %v86 = vld [vmem:[%s3 + $0x40] sm:$0xff]
    %v87 = vld [vmem:[%s3 + $0x48] sm:$0xff]
    %v88 = vld [vmem:[%s3 + $0x50] sm:$0xff]
    %v89 = vld [vmem:[%s3 + $0x58] sm:$0xff]
    %v90 = vld [vmem:[%s3 + $0x60] sm:$0xff]
    %v91 = vld [vmem:[%s3 + $0x68] sm:$0xff]
    %v92 = vld [vmem:[%s3 + $0x70] sm:$0xff]
    %v93 = vld [vmem:[%s3 + $0x78] sm:$0xff]
    %v94 = vld [vmem:[%s4] sm:$0x1]
    %v96 = vlaneseq
    %v97 = vshrl.u32 %v96, 7
    %v98 = vsub.s32 0, %v97
    %v99 = vrot.slane %v94, %v98
    %v103 = vrot.slane %v77, 7
    %v104 = vsel %vm28, %v103, %v76
    %106 = vmatprep.subr.mxu0 0.0
    %107 = vmatpush1.msra.mxu0 %v78
    %108 = vmatprep.subr.mxu0 0.0
    %109 = vmatpush1.msra.mxu0 %v79
    %110 = vmatprep.subr.mxu0 0.0
    %111 = vmatpush1.msra.mxu0 %v80
    %112 = vmatprep.subr.mxu0 0.0
    %113 = vmatpush1.msra.mxu0 %v81
    %114 = vmatprep.subr.mxu0 0.0
    %115 = vmatpush1.msra.mxu0 %v82
    %116 = vmatprep.subr.mxu0 0.0
    %117 = vmatpush1.msra.mxu0 %v83
    %118 = vmatprep.subr.mxu0 0.0
    %119 = vmatpush1.msra.mxu0 %v84
    %120 = vmatprep.subr.mxu0 0.0
    %121 = vmatpush1.msra.mxu0 %v85
    %122 = vmatprep.subr.mxu0 0.0
    %123 = vmatpush1.msra.mxu0 %v86
    %124 = vmatprep.subr.mxu0 0.0
    %125 = vmatpush1.msra.mxu0 %v87
    %126 = vmatprep.subr.mxu0 0.0
    %127 = vmatpush1.msra.mxu0 %v88
    %128 = vmatprep.subr.mxu0 0.0
    %129 = vmatpush1.msra.mxu0 %v89
    %130 = vmatprep.subr.mxu0 0.0
    %131 = vmatpush1.msra.mxu0 %v90
    %132 = vmatprep.subr.mxu0 0.0
    %133 = vmatpush1.msra.mxu0 %v91
    %134 = vmatprep.subr.mxu0 0.0
    %135 = vmatpush1.msra.mxu0 %v92
    %136 = vmatprep.subr.mxu0 0.0
    %137 = vmatpush1.msra.mxu0 %v93
    %138 = vmatprep.subr.mxu0 0.0
    %139 = vmatpush1.msra.mxu0 0.0
    %140 = vmatprep.subr.mxu0 0.0
    %141 = vmatpush1.msra.mxu0 0.0
    %142 = vmatprep.subr.mxu0 0.0
    %143 = vmatpush1.msra.mxu0 0.0
    %144 = vmatprep.subr.mxu0 0.0
    %145 = vmatpush1.msra.mxu0 0.0
    %146 = vmatprep.subr.mxu0 0.0
    %147 = vmatpush1.msra.mxu0 0.0
    %148 = vmatprep.subr.mxu0 0.0
    %149 = vmatpush1.msra.mxu0 0.0
    %150 = vmatprep.subr.mxu0 0.0
    %151 = vmatpush1.msra.mxu0 0.0
    %152 = vmatprep.subr.mxu0 0.0
    %153 = vmatpush1.msra.mxu0 0.0
    %154 = vmatprep.subr.mxu0 0.0
    %155 = vmatpush1.msra.mxu0 0.0
    %156 = vmatprep.subr.mxu0 0.0
    %157 = vmatpush1.msra.mxu0 0.0
    %158 = vmatprep.subr.mxu0 0.0
    %159 = vmatpush1.msra.mxu0 0.0
    %160 = vmatprep.subr.mxu0 0.0
    %161 = vmatpush1.msra.mxu0 0.0
    %162 = vmatprep.subr.mxu0 0.0
    %163 = vmatpush1.msra.mxu0 0.0
    %164 = vmatprep.subr.mxu0 0.0
    %165 = vmatpush1.msra.mxu0 0.0
    %166 = vmatprep.subr.mxu0 0.0
    %167 = vmatpush1.msra.mxu0 0.0
    %168 = vmatprep.subr.mxu0 0.0
    %169 = vmatpush1.msra.mxu0 0.0
    %170 = vmatprep.mubr.f32.mxu0 0.0
    %171 = vmatmul.mubr.f32.gmra.mrb[0].mxu0 %v104
    %v172 = vpop.f32.mrb[0].mxu0
    %v173 = vadd.f32 %v99, %v172
    %v174 = vpop.f32.mrb[0].mxu0
    %175 = vdwg.mxu0
    %176 = vst [vmem:[#allocation2] sm:$0x3] %v173
    // Predicated region
    $region22: #{vit_forward.7} parent=1 // pred_check
      _
    $region23: #{vit_forward.7} parent=1 // pred_check_branch
      %178 = sbr.rel (0) target = $region25
    $region24: #{vit_forward.7} parent=1 // pred_region
      %s180 = ssub.s32 32, 32
      %181 = vsyncadd [#allocation3], %s180
      %s183 = sshll.u32 [#allocation2], 4
      %s184 = int_to_ptr.vmem [resolvable:$true] %s183
      %186 = dma.vmem_to_hbm [thread:$0]  %s184, 32, %s5, [#allocation3]
    $region25: #{vit_forward.7} parent=1 // pred_fallthru
      _
    // Predicated region
    $region26: #{vit_forward.7} parent=1 // pred_check
      _
    $region27: #{vit_forward.7} parent=1 // pred_check_branch
      %188 = sbr.rel (0) target = $region29
    $region28: #{vit_forward.7} parent=1 // pred_region
      %189 = dma.done [#allocation3], 32
    $region29: #{vit_forward.7} parent=1 // pred_fallthru
      _
    %190 = vsyncpa [#allocation3], 1

// kernel: vit_forward.4
$region0: #{vit_forward.4}
  #allocation0 [shape = 'u32[]', space=smem, size = 0x4, offset = 0x4, fixed_abs, tag = 'smem constant byte address 0x4 - core index']
  #allocation1 [shape = 'u32[144,128]{1,0:T(1,128)}', space=vmem, size = 0x12000, scoped, tag = 'internal scratch']
  %s0 = inlined_call_operand.vmem [shape: f32[2,4,768], index: 0, kind: input, shape index: {}]
  %s1 = inlined_call_operand.vmem [shape: f32[768,128], index: 1, kind: input, shape index: {}]
  %s2 = inlined_call_operand.vmem [shape: f32[1,128], index: 2, kind: input, shape index: {}]
  %s3 = inlined_call_operand.vmem [shape: f32[1,128], index: 3, kind: input, shape index: {}]
  %s4 = inlined_call_operand.vmem [shape: f32[8,128], index: 4, kind: input, shape index: {}]
  %s5 = inlined_call_operand.vmem [shape: f32[2,8,128], index: 5, kind: output, shape index: {}]
  %s6 = sld [smem:[#allocation0]]
  $region53: #{vit_forward.4} parent=0
    _
  %s8 = ssub.s32 1, %s6
  %s9 = scalar_select 0, %s8, %s6
  loop: start=0, step=1, limit=4
  $region2: #{vit_forward.4} parent=0 // loop_pre_header
    _
  $region3: #{vit_forward.4} parent=0 // loop_header
    %s11 = sphi 0, %s15
    %p12 = scmp.ge.s32.totalorder %s11, 4
    %s21 = sphi 0, %s23
    %s24 = sphi 0, %s21
    %s25 = sphi 0, %s24
    %s41 = sphi 0, %s25
    %s45 = sphi 0, %s45
    %s47 = sphi 0, %s45
    %s48 = sphi 0, %s47
    %s62 = sphi 0, %s48
    %s66 = sphi 0, %s66
    %s68 = sphi 0, %s66
    %s69 = sphi 0, %s68
    %s83 = sphi 0, %s69
    %s87 = sphi 0, %s87
    %s89 = sphi 0, %s87
    %s90 = sphi 0, %s89
    %s104 = sphi 0, %s90
    %s108 = sphi 0, %s108
    %s110 = sphi 0, %s108
    %s111 = sphi 0, %s110
    %s125 = sphi 0, %s111
    %s131 = sphi 0, %s133
    %s134 = sphi 0, %s131
    %s135 = sphi 0, %s134
    %s151 = sphi 0, %s135
  $region4: #{vit_forward.4} parent=0 // loop_header_branch
    %14 = sbr.rel (%p12) target = $region8
  $region5: #{vit_forward.4} parent=0 // loop_body
    %s16 = ssub.s32 %s11, 1
    %s17 = ssub.s32 %s11, 2
    %s18 = sadd.s32 %s11, 1
    %s19 = ssub.s32 %s11, %s18
    %p20 = scmp.eq.s32.totalorder %s19, 0
    %s22 = sadd.s32 %s21, 1
    %s23 = scalar_select %p20, %s21, %s22
    %p26 = pneg %p20
    %p27 = scmp.eq.s32.totalorder %s11, 1
    %p28 = por %p26, %p27
    %p29 = scmp.ne.s32.totalorder %s21, %s24
    %p30 = scmp.eq.s32.totalorder %s11, 0
    %p31 = por %p29, %p30
    %p32 = scmp.ne.s32.totalorder %s21, %s24
    %p33 = scmp.eq.s32.totalorder %s16, 1
    %p34 = por %p32, %p33
    %p35 = scmp.ne.s32.totalorder %s24, %s25
    %p36 = scmp.eq.s32.totalorder %s16, 0
    %p37 = por %p35, %p36
    %p38 = scmp.ne.s32.totalorder %s24, %s25
    %p39 = scmp.eq.s32.totalorder %s17, 1
    %p40 = por %p38, %p39
    %p42 = scmp.ne.s32.totalorder %s25, %s41
    %p43 = scmp.eq.s32.totalorder %s17, 0
    %p44 = por %p42, %p43
    %s46 = sadd.s32 %s45, 1
    %p49 = scmp.eq.s32.totalorder %s11, 1
    %p50 = scmp.ne.s32.totalorder %s45, %s47
    %p51 = scmp.eq.s32.totalorder %s11, 0
    %p52 = por %p50, %p51
    %p53 = scmp.ne.s32.totalorder %s45, %s47
    %p54 = scmp.eq.s32.totalorder %s16, 1
    %p55 = por %p53, %p54
    %p56 = scmp.ne.s32.totalorder %s47, %s48
    %p57 = scmp.eq.s32.totalorder %s16, 0
    %p58 = por %p56, %p57
    %p59 = scmp.ne.s32.totalorder %s47, %s48
    %p60 = scmp.eq.s32.totalorder %s17, 1
    %p61 = por %p59, %p60
    %p63 = scmp.ne.s32.totalorder %s48, %s62
    %p64 = scmp.eq.s32.totalorder %s17, 0
    %p65 = por %p63, %p64
    %s67 = sadd.s32 %s66, 1
    %p70 = scmp.eq.s32.totalorder %s11, 1
    %p71 = scmp.ne.s32.totalorder %s66, %s68
    %p72 = scmp.eq.s32.totalorder %s11, 0
    %p73 = por %p71, %p72
    %p74 = scmp.ne.s32.totalorder %s66, %s68
    %p75 = scmp.eq.s32.totalorder %s16, 1
    %p76 = por %p74, %p75
    %p77 = scmp.ne.s32.totalorder %s68, %s69
    %p78 = scmp.eq.s32.totalorder %s16, 0
    %p79 = por %p77, %p78
    %p80 = scmp.ne.s32.totalorder %s68, %s69
    %p81 = scmp.eq.s32.totalorder %s17, 1
    %p82 = por %p80, %p81
    %p84 = scmp.ne.s32.totalorder %s69, %s83
    %p85 = scmp.eq.s32.totalorder %s17, 0
    %p86 = por %p84, %p85
    %s88 = sadd.s32 %s87, 1
    %p91 = scmp.eq.s32.totalorder %s11, 1
    %p92 = scmp.ne.s32.totalorder %s87, %s89
    %p93 = scmp.eq.s32.totalorder %s11, 0
    %p94 = por %p92, %p93
    %p95 = scmp.ne.s32.totalorder %s87, %s89
    %p96 = scmp.eq.s32.totalorder %s16, 1
    %p97 = por %p95, %p96
    %p98 = scmp.ne.s32.totalorder %s89, %s90
    %p99 = scmp.eq.s32.totalorder %s16, 0
    %p100 = por %p98, %p99
    %p101 = scmp.ne.s32.totalorder %s89, %s90
    %p102 = scmp.eq.s32.totalorder %s17, 1
    %p103 = por %p101, %p102
    %p105 = scmp.ne.s32.totalorder %s90, %s104
    %p106 = scmp.eq.s32.totalorder %s17, 0
    %p107 = por %p105, %p106
    %s109 = sadd.s32 %s108, 1
    %p112 = scmp.eq.s32.totalorder %s11, 1
    %p113 = scmp.ne.s32.totalorder %s108, %s110
    %p114 = scmp.eq.s32.totalorder %s11, 0
    %p115 = por %p113, %p114
    %p116 = scmp.ne.s32.totalorder %s108, %s110
    %p117 = scmp.eq.s32.totalorder %s16, 1
    %p118 = por %p116, %p117
    %p119 = scmp.ne.s32.totalorder %s110, %s111
    %p120 = scmp.eq.s32.totalorder %s16, 0
    %p121 = por %p119, %p120
    %p122 = scmp.ne.s32.totalorder %s110, %s111
    %p123 = scmp.eq.s32.totalorder %s17, 1
    %p124 = por %p122, %p123
    %p126 = scmp.ne.s32.totalorder %s111, %s125
    %p127 = scmp.eq.s32.totalorder %s17, 0
    %p128 = por %p126, %p127
    %s129 = ssub.s32 %s11, %s18
    %p130 = scmp.eq.s32.totalorder %s129, 0
    %s132 = sadd.s32 %s131, 1
    %s133 = scalar_select %p130, %s131, %s132
    %p136 = pneg %p130
    %p137 = scmp.eq.s32.totalorder %s11, 1
    %p138 = por %p136, %p137
    %p139 = scmp.ne.s32.totalorder %s131, %s134
    %p140 = scmp.eq.s32.totalorder %s11, 0
    %p141 = por %p139, %p140
    %p142 = scmp.ne.s32.totalorder %s131, %s134
    %p143 = scmp.eq.s32.totalorder %s16, 1
    %p144 = por %p142, %p143
    %p145 = scmp.ne.s32.totalorder %s134, %s135
    %p146 = scmp.eq.s32.totalorder %s16, 0
    %p147 = por %p145, %p146
    %p148 = scmp.ne.s32.totalorder %s134, %s135
    %p149 = scmp.eq.s32.totalorder %s17, 1
    %p150 = por %p148, %p149
    %p152 = scmp.ne.s32.totalorder %s135, %s151
    %p153 = scmp.eq.s32.totalorder %s17, 0
    %p154 = por %p152, %p153
    %p155 = scmp.le.s32.totalorder 1, %s11
    %p156 = scmp.lt.s32.totalorder %s11, 3
    %p157 = pnand %p155, %p156
    %p158 = pneg %p157
    // Predicated region
    $region9: #{vit_forward.4} parent=5 // pred_check
      _
    $region10: #{vit_forward.4} parent=5 // pred_check_branch
      %160 = sbr.rel (%p157) target = $region12
    $region11: #{vit_forward.4} parent=5 // pred_region
      %s161 = ssub.s32 %s11, 1
      // Predicated region
      $region13: #{vit_forward.4} parent=11 // pred_check
        %p162 = pneg %p58
      $region14: #{vit_forward.4} parent=11 // pred_check_branch
        %164 = sbr.rel (%p162) target = $region16
      $region15: #{vit_forward.4} parent=11 // pred_region
        _
      $region16: #{vit_forward.4} parent=11 // pred_fallthru
        _
      // Predicated region
      $region17: #{vit_forward.4} parent=11 // pred_check
        %p165 = pneg %p79
      $region18: #{vit_forward.4} parent=11 // pred_check_branch
        %167 = sbr.rel (%p165) target = $region20
      $region19: #{vit_forward.4} parent=11 // pred_region
        _
      $region20: #{vit_forward.4} parent=11 // pred_fallthru
        _
      // Predicated region
      $region21: #{vit_forward.4} parent=11 // pred_check
        %p168 = pneg %p100
      $region22: #{vit_forward.4} parent=11 // pred_check_branch
        %170 = sbr.rel (%p168) target = $region24
      $region23: #{vit_forward.4} parent=11 // pred_region
        _
      $region24: #{vit_forward.4} parent=11 // pred_fallthru
        _
      // Predicated region
      $region25: #{vit_forward.4} parent=11 // pred_check
        %p171 = pneg %p121
      $region26: #{vit_forward.4} parent=11 // pred_check_branch
        %173 = sbr.rel (%p171) target = $region28
      $region27: #{vit_forward.4} parent=11 // pred_region
        _
      $region28: #{vit_forward.4} parent=11 // pred_fallthru
        _
    $region12: #{vit_forward.4} parent=5 // pred_fallthru
      _
    %p174 = scmp.lt.s32.totalorder %s11, 2
    // Predicated region
    $region29: #{vit_forward.4} parent=5 // pred_check
      %p175 = pneg %p174
    $region30: #{vit_forward.4} parent=5 // pred_check_branch
      %177 = sbr.rel (%p175) target = $region32
    $region31: #{vit_forward.4} parent=5 // pred_region
      // Predicated region
      $region33: #{vit_forward.4} parent=31 // pred_check
        %p178 = pneg %p31
      $region34: #{vit_forward.4} parent=31 // pred_check_branch
        %180 = sbr.rel (%p178) target = $region36
      $region35: #{vit_forward.4} parent=31 // pred_region
        %p181 = scmp.lt.s32.totalorder %s11, 1
        %s182 = scalar_select %p181, %s11, 1
        %s183 = smul.addr %s182, 6
        %s184 = smul.addr %s183, 4
        %s185 = scalar_lea.vmem %s0, %s184
      $region36: #{vit_forward.4} parent=31 // pred_fallthru
        _
    $region32: #{vit_forward.4} parent=5 // pred_fallthru
      _
    %p186 = scmp.le.s32.totalorder 1, %s11
    %p187 = scmp.lt.s32.totalorder %s11, 3
    %p188 = pnand %p186, %p187
    %p189 = pneg %p188
    // Predicated region
    $region37: #{vit_forward.4} parent=5 // pred_check
      _
    $region38: #{vit_forward.4} parent=5 // pred_check_branch
      %191 = sbr.rel (%p188) target = $region40
    $region39: #{vit_forward.4} parent=5 // pred_region
      %s192 = ssub.s32 %s11, 1
      %p193 = scmp.lt.s32.totalorder %s16, 1
      %s194 = scalar_select %p193, %s16, 1
      %s195 = smul.addr %s194, 6
      %s196 = smul.addr %s195, 4
      %s197 = scalar_lea.vmem %s0, %s196
      %p198 = pneg %p37
      %p199 = pneg %p34
      %p200 = pneg %p58
      %p201 = pneg %p55
      %p202 = pneg %p79
      %p203 = pneg %p76
      %p204 = pneg %p100
      %p205 = pneg %p97
      %p206 = pneg %p121
      %p207 = pneg %p118
      %p208 = pneg %p147
      %p209 = pneg %p144
      %p210 = scmp.lt.s32.totalorder %s16, 1
      %s211 = scalar_select %p210, %s16, 1
      %s212 = smul.addr %s211, 8
      %s213 = scalar_lea.vmem %s5, %s212
      %p214 = scmp.lt.s32.totalorder %s16, 1
      %s215 = scalar_select %p214, %s16, 1
      %s216 = smul.addr %s215, 6
      %s217 = smul.addr %s216, 4
      %s218 = scalar_lea.vmem %s0, %s217
      %p219 = scmp.lt.s32.totalorder %s16, 1
      %s220 = scalar_select %p219, %s16, 1
      %s221 = smul.addr %s220, 8
      %s222 = scalar_lea.vmem %s5, %s221
      %v223 = vld [vmem:[%s218] sm:$0xff]
      %v224 = vld [vmem:[%s218 + $0x8] sm:$0xff]
      %v225 = vld [vmem:[%s218 + $0x10] sm:$0xff]
      %v226 = vld [vmem:[%s1] sm:$0xff]
      %v227 = vld [vmem:[%s1 + $0x8] sm:$0xff]
      %v228 = vld [vmem:[%s1 + $0x10] sm:$0xff]
      %v229 = vld [vmem:[%s1 + $0x18] sm:$0xff]
      %v230 = vld [vmem:[%s1 + $0x20] sm:$0xff]
      %v231 = vld [vmem:[%s1 + $0x28] sm:$0xff]
      %v232 = vld [vmem:[%s1 + $0x30] sm:$0xff]
      %v233 = vld [vmem:[%s1 + $0x38] sm:$0xff]
      %v234 = vld [vmem:[%s1 + $0x40] sm:$0xff]
      %v235 = vld [vmem:[%s1 + $0x48] sm:$0xff]
      %v236 = vld [vmem:[%s1 + $0x50] sm:$0xff]
      %v237 = vld [vmem:[%s1 + $0x58] sm:$0xff]
      %v238 = vld [vmem:[%s1 + $0x60] sm:$0xff]
      %v239 = vld [vmem:[%s1 + $0x68] sm:$0xff]
      %v240 = vld [vmem:[%s1 + $0x70] sm:$0xff]
      %v241 = vld [vmem:[%s1 + $0x78] sm:$0xff]
      %v242 = vld [vmem:[%s1 + $0x80] sm:$0xff]
      %v243 = vld [vmem:[%s1 + $0x88] sm:$0xff]
      %v244 = vld [vmem:[%s1 + $0x90] sm:$0xff]
      %v245 = vld [vmem:[%s1 + $0x98] sm:$0xff]
      %v246 = vld [vmem:[%s1 + $0xa0] sm:$0xff]
      %v247 = vld [vmem:[%s1 + $0xa8] sm:$0xff]
      %v248 = vld [vmem:[%s1 + $0xb0] sm:$0xff]
      %v249 = vld [vmem:[%s1 + $0xb8] sm:$0xff]
      %v250 = vld [vmem:[%s1 + $0xc0] sm:$0xff]
      %v251 = vld [vmem:[%s1 + $0xc8] sm:$0xff]
      %v252 = vld [vmem:[%s1 + $0xd0] sm:$0xff]
      %v253 = vld [vmem:[%s1 + $0xd8] sm:$0xff]
      %v254 = vld [vmem:[%s1 + $0xe0] sm:$0xff]
      %v255 = vld [vmem:[%s1 + $0xe8] sm:$0xff]
      %v256 = vld [vmem:[%s1 + $0xf0] sm:$0xff]
      %v257 = vld [vmem:[%s1 + $0xf8] sm:$0xff]
      %v258 = vld [vmem:[%s1 + $0x100] sm:$0xff]
      %v259 = vld [vmem:[%s1 + $0x108] sm:$0xff]
      %v260 = vld [vmem:[%s1 + $0x110] sm:$0xff]
      %v261 = vld [vmem:[%s1 + $0x118] sm:$0xff]
      %v262 = vld [vmem:[%s1 + $0x120] sm:$0xff]
      %v263 = vld [vmem:[%s1 + $0x128] sm:$0xff]
      %v264 = vld [vmem:[%s1 + $0x130] sm:$0xff]
      %v265 = vld [vmem:[%s1 + $0x138] sm:$0xff]
      %v266 = vld [vmem:[%s1 + $0x140] sm:$0xff]
      %v267 = vld [vmem:[%s1 + $0x148] sm:$0xff]
      %v268 = vld [vmem:[%s1 + $0x150] sm:$0xff]
      %v269 = vld [vmem:[%s1 + $0x158] sm:$0xff]
      %v270 = vld [vmem:[%s1 + $0x160] sm:$0xff]
      %v271 = vld [vmem:[%s1 + $0x168] sm:$0xff]
      %v272 = vld [vmem:[%s1 + $0x170] sm:$0xff]
      %v273 = vld [vmem:[%s1 + $0x178] sm:$0xff]
      %v274 = vld [vmem:[%s1 + $0x180] sm:$0xff]
      %v275 = vld [vmem:[%s1 + $0x188] sm:$0xff]
      %v276 = vld [vmem:[%s1 + $0x190] sm:$0xff]
      %v277 = vld [vmem:[%s1 + $0x198] sm:$0xff]
      %v278 = vld [vmem:[%s1 + $0x1a0] sm:$0xff]
      %v279 = vld [vmem:[%s1 + $0x1a8] sm:$0xff]
      %v280 = vld [vmem:[%s1 + $0x1b0] sm:$0xff]
      %v281 = vld [vmem:[%s1 + $0x1b8] sm:$0xff]
      %v282 = vld [vmem:[%s1 + $0x1c0] sm:$0xff]
      %v283 = vld [vmem:[%s1 + $0x1c8] sm:$0xff]
      %v284 = vld [vmem:[%s1 + $0x1d0] sm:$0xff]
      %v285 = vld [vmem:[%s1 + $0x1d8] sm:$0xff]
      %v286 = vld [vmem:[%s1 + $0x1e0] sm:$0xff]
      %v287 = vld [vmem:[%s1 + $0x1e8] sm:$0xff]
      %v288 = vld [vmem:[%s1 + $0x1f0] sm:$0xff]
      %v289 = vld [vmem:[%s1 + $0x1f8] sm:$0xff]
      %v290 = vld [vmem:[%s1 + $0x200] sm:$0xff]
      %v291 = vld [vmem:[%s1 + $0x208] sm:$0xff]
      %v292 = vld [vmem:[%s1 + $0x210] sm:$0xff]
      %v293 = vld [vmem:[%s1 + $0x218] sm:$0xff]
      %v294 = vld [vmem:[%s1 + $0x220] sm:$0xff]
      %v295 = vld [vmem:[%s1 + $0x228] sm:$0xff]
      %v296 = vld [vmem:[%s1 + $0x230] sm:$0xff]
      %v297 = vld [vmem:[%s1 + $0x238] sm:$0xff]
      %v298 = vld [vmem:[%s1 + $0x240] sm:$0xff]
      %v299 = vld [vmem:[%s1 + $0x248] sm:$0xff]
      %v300 = vld [vmem:[%s1 + $0x250] sm:$0xff]
      %v301 = vld [vmem:[%s1 + $0x258] sm:$0xff]
      %v302 = vld [vmem:[%s1 + $0x260] sm:$0xff]
      %v303 = vld [vmem:[%s1 + $0x268] sm:$0xff]
      %v304 = vld [vmem:[%s1 + $0x270] sm:$0xff]
      %v305 = vld [vmem:[%s1 + $0x278] sm:$0xff]
      %v306 = vld [vmem:[%s1 + $0x280] sm:$0xff]
      %v307 = vld [vmem:[%s1 + $0x288] sm:$0xff]
      %v308 = vld [vmem:[%s1 + $0x290] sm:$0xff]
      %v309 = vld [vmem:[%s1 + $0x298] sm:$0xff]
      %v310 = vld [vmem:[%s1 + $0x2a0] sm:$0xff]
      %v311 = vld [vmem:[%s1 + $0x2a8] sm:$0xff]
      %v312 = vld [vmem:[%s1 + $0x2b0] sm:$0xff]
      %v313 = vld [vmem:[%s1 + $0x2b8] sm:$0xff]
      %v314 = vld [vmem:[%s1 + $0x2c0] sm:$0xff]
      %v315 = vld [vmem:[%s1 + $0x2c8] sm:$0xff]
      %v316 = vld [vmem:[%s1 + $0x2d0] sm:$0xff]
      %v317 = vld [vmem:[%s1 + $0x2d8] sm:$0xff]
      %v318 = vld [vmem:[%s1 + $0x2e0] sm:$0xff]
      %v319 = vld [vmem:[%s1 + $0x2e8] sm:$0xff]
      %v320 = vld [vmem:[%s1 + $0x2f0] sm:$0xff]
      %v321 = vld [vmem:[%s1 + $0x2f8] sm:$0xff]
      %v322 = vld [vmem:[%s2] sm:$0x1]
      %v324 = vlaneseq
      %v325 = vshrl.u32 %v324, 7
      %v326 = vsub.s32 0, %v325
      %v327 = vrot.slane %v322, %v326
      %v332 = vcombine.high %v223, %v223
      %v333 = vcombine.high %v224, %v224
      %v334 = vcombine.high %v225, %v225
      %338 = vmatprep.subr.mxu0 0.0
      %339 = vmatpush1.msra.mxu0 %v226
      %340 = vmatprep.subr.mxu0 0.0
      %341 = vmatpush1.msra.mxu0 %v227
      %342 = vmatprep.subr.mxu0 0.0
      %343 = vmatpush1.msra.mxu0 %v228
      %344 = vmatprep.subr.mxu0 0.0
      %345 = vmatpush1.msra.mxu0 %v229
      %346 = vmatprep.subr.mxu0 0.0
      %347 = vmatpush1.msra.mxu0 %v230
      %348 = vmatprep.subr.mxu0 0.0
      %349 = vmatpush1.msra.mxu0 %v231
      %350 = vmatprep.subr.mxu0 0.0
      %351 = vmatpush1.msra.mxu0 %v232
      %352 = vmatprep.subr.mxu0 0.0
      %353 = vmatpush1.msra.mxu0 %v233
      %354 = vmatprep.subr.mxu0 0.0
      %355 = vmatpush1.msra.mxu0 %v234
      %356 = vmatprep.subr.mxu0 0.0
      %357 = vmatpush1.msra.mxu0 %v235
      %358 = vmatprep.subr.mxu0 0.0
      %359 = vmatpush1.msra.mxu0 %v236
      %360 = vmatprep.subr.mxu0 0.0
      %361 = vmatpush1.msra.mxu0 %v237
      %362 = vmatprep.subr.mxu0 0.0
      %363 = vmatpush1.msra.mxu0 %v238
      %364 = vmatprep.subr.mxu0 0.0
      %365 = vmatpush1.msra.mxu0 %v239
      %366 = vmatprep.subr.mxu0 0.0
      %367 = vmatpush1.msra.mxu0 %v240
      %368 = vmatprep.subr.mxu0 0.0
      %369 = vmatpush1.msra.mxu0 %v241
      %370 = vmatprep.subr.mxu0 0.0
      %371 = vmatpush1.msra.mxu0 %v242
      %372 = vmatprep.subr.mxu0 0.0
      %373 = vmatpush1.msra.mxu0 %v243
      %374 = vmatprep.subr.mxu0 0.0
      %375 = vmatpush1.msra.mxu0 %v244
      %376 = vmatprep.subr.mxu0 0.0
      %377 = vmatpush1.msra.mxu0 %v245
      %378 = vmatprep.subr.mxu0 0.0
      %379 = vmatpush1.msra.mxu0 %v246
      %380 = vmatprep.subr.mxu0 0.0
      %381 = vmatpush1.msra.mxu0 %v247
      %382 = vmatprep.subr.mxu0 0.0
      %383 = vmatpush1.msra.mxu0 %v248
      %384 = vmatprep.subr.mxu0 0.0
      %385 = vmatpush1.msra.mxu0 %v249
      %386 = vmatprep.subr.mxu0 0.0
      %387 = vmatpush1.msra.mxu0 %v250
      %388 = vmatprep.subr.mxu0 0.0
      %389 = vmatpush1.msra.mxu0 %v251
      %390 = vmatprep.subr.mxu0 0.0
      %391 = vmatpush1.msra.mxu0 %v252
      %392 = vmatprep.subr.mxu0 0.0
      %393 = vmatpush1.msra.mxu0 %v253
      %394 = vmatprep.subr.mxu0 0.0
      %395 = vmatpush1.msra.mxu0 %v254
      %396 = vmatprep.subr.mxu0 0.0
      %397 = vmatpush1.msra.mxu0 %v255
      %398 = vmatprep.subr.mxu0 0.0
      %399 = vmatpush1.msra.mxu0 %v256
      %400 = vmatprep.subr.mxu0 0.0
      %401 = vmatpush1.msra.mxu0 %v257
      %402 = vmatprep.mubr.f32.mxu0 %v332
      %403 = vmatmul.mubr.f32.gmra.mrb[0].mxu0 %v223
      %v404 = vpop.f32.mrb[0].mxu0
      %v405 = vadd.f32 %v327, %v404
      %v406 = vpop.f32.mrb[0].mxu0
      %407 = vdwg.mxu0
      %408 = vmatprep.subr.mxu0 0.0
      %409 = vmatpush1.msra.mxu0 %v258
      %410 = vmatprep.subr.mxu0 0.0
      %411 = vmatpush1.msra.mxu0 %v259
      %412 = vmatprep.subr.mxu0 0.0
      %413 = vmatpush1.msra.mxu0 %v260
      %414 = vmatprep.subr.mxu0 0.0
      %415 = vmatpush1.msra.mxu0 %v261
      %416 = vmatprep.subr.mxu0 0.0
      %417 = vmatpush1.msra.mxu0 %v262
      %418 = vmatprep.subr.mxu0 0.0
      %419 = vmatpush1.msra.mxu0 %v263
      %420 = vmatprep.subr.mxu0 0.0
      %421 = vmatpush1.msra.mxu0 %v264
      %422 = vmatprep.subr.mxu0 0.0
      %423 = vmatpush1.msra.mxu0 %v265
      %424 = vmatprep.subr.mxu0 0.0
      %425 = vmatpush1.msra.mxu0 %v266
      %426 = vmatprep.subr.mxu0 0.0
      %427 = vmatpush1.msra.mxu0 %v267
      %428 = vmatprep.subr.mxu0 0.0
      %429 = vmatpush1.msra.mxu0 %v268
      %430 = vmatprep.subr.mxu0 0.0
      %431 = vmatpush1.msra.mxu0 %v269
      %432 = vmatprep.subr.mxu0 0.0
      %433 = vmatpush1.msra.mxu0 %v270
      %434 = vmatprep.subr.mxu0 0.0
      %435 = vmatpush1.msra.mxu0 %v271
      %436 = vmatprep.subr.mxu0 0.0
      %437 = vmatpush1.msra.mxu0 %v272
      %438 = vmatprep.subr.mxu0 0.0
      %439 = vmatpush1.msra.mxu0 %v273
      %440 = vmatprep.subr.mxu0 0.0
      %441 = vmatpush1.msra.mxu0 %v274
      %442 = vmatprep.subr.mxu0 0.0
      %443 = vmatpush1.msra.mxu0 %v275
      %444 = vmatprep.subr.mxu0 0.0
      %445 = vmatpush1.msra.mxu0 %v276
      %446 = vmatprep.subr.mxu0 0.0
      %447 = vmatpush1.msra.mxu0 %v277
      %448 = vmatprep.subr.mxu0 0.0
      %449 = vmatpush1.msra.mxu0 %v278
      %450 = vmatprep.subr.mxu0 0.0
      %451 = vmatpush1.msra.mxu0 %v279
      %452 = vmatprep.subr.mxu0 0.0
      %453 = vmatpush1.msra.mxu0 %v280
      %454 = vmatprep.subr.mxu0 0.0
      %455 = vmatpush1.msra.mxu0 %v281
      %456 = vmatprep.subr.mxu0 0.0
      %457 = vmatpush1.msra.mxu0 %v282
      %458 = vmatprep.subr.mxu0 0.0
      %459 = vmatpush1.msra.mxu0 %v283
      %460 = vmatprep.subr.mxu0 0.0
      %461 = vmatpush1.msra.mxu0 %v284
      %462 = vmatprep.subr.mxu0 0.0
      %463 = vmatpush1.msra.mxu0 %v285
      %464 = vmatprep.subr.mxu0 0.0
      %465 = vmatpush1.msra.mxu0 %v286
      %466 = vmatprep.subr.mxu0 0.0
      %467 = vmatpush1.msra.mxu0 %v287
      %468 = vmatprep.subr.mxu0 0.0
      %469 = vmatpush1.msra.mxu0 %v288
      %470 = vmatprep.subr.mxu0 0.0
      %471 = vmatpush1.msra.mxu0 %v289
      %472 = vmatprep.mubr.f32.mxu0 %v333
      %473 = vmatmul.mubr.f32.gmra.mrb[0].mxu0 %v224
      %v474 = vpop.f32.mrb[0].mxu0
      %v475 = vadd.f32 %v405, %v474
      %v476 = vpop.f32.mrb[0].mxu0
      %477 = vdwg.mxu0
      %478 = vmatprep.subr.mxu0 0.0
      %479 = vmatpush1.msra.mxu0 %v290
      %480 = vmatprep.subr.mxu0 0.0
      %481 = vmatpush1.msra.mxu0 %v291
      %482 = vmatprep.subr.mxu0 0.0
      %483 = vmatpush1.msra.mxu0 %v292
      %484 = vmatprep.subr.mxu0 0.0
      %485 = vmatpush1.msra.mxu0 %v293
      %486 = vmatprep.subr.mxu0 0.0
      %487 = vmatpush1.msra.mxu0 %v294
      %488 = vmatprep.subr.mxu0 0.0
      %489 = vmatpush1.msra.mxu0 %v295
      %490 = vmatprep.subr.mxu0 0.0
      %491 = vmatpush1.msra.mxu0 %v296
      %492 = vmatprep.subr.mxu0 0.0
      %493 = vmatpush1.msra.mxu0 %v297
      %494 = vmatprep.subr.mxu0 0.0
      %495 = vmatpush1.msra.mxu0 %v298
      %496 = vmatprep.subr.mxu0 0.0
      %497 = vmatpush1.msra.mxu0 %v299
      %498 = vmatprep.subr.mxu0 0.0
      %499 = vmatpush1.msra.mxu0 %v300
      %500 = vmatprep.subr.mxu0 0.0
      %501 = vmatpush1.msra.mxu0 %v301
      %502 = vmatprep.subr.mxu0 0.0
      %503 = vmatpush1.msra.mxu0 %v302
      %504 = vmatprep.subr.mxu0 0.0
      %505 = vmatpush1.msra.mxu0 %v303
      %506 = vmatprep.subr.mxu0 0.0
      %507 = vmatpush1.msra.mxu0 %v304
      %508 = vmatprep.subr.mxu0 0.0
      %509 = vmatpush1.msra.mxu0 %v305
      %510 = vmatprep.subr.mxu0 0.0
      %511 = vmatpush1.msra.mxu0 %v306
      %512 = vmatprep.subr.mxu0 0.0
      %513 = vmatpush1.msra.mxu0 %v307
      %514 = vmatprep.subr.mxu0 0.0
      %515 = vmatpush1.msra.mxu0 %v308
      %516 = vmatprep.subr.mxu0 0.0
      %517 = vmatpush1.msra.mxu0 %v309
      %518 = vmatprep.subr.mxu0 0.0
      %519 = vmatpush1.msra.mxu0 %v310
      %520 = vmatprep.subr.mxu0 0.0
      %521 = vmatpush1.msra.mxu0 %v311
      %522 = vmatprep.subr.mxu0 0.0
      %523 = vmatpush1.msra.mxu0 %v312
      %524 = vmatprep.subr.mxu0 0.0
      %525 = vmatpush1.msra.mxu0 %v313
      %526 = vmatprep.subr.mxu0 0.0
      %527 = vmatpush1.msra.mxu0 %v314
      %528 = vmatprep.subr.mxu0 0.0
      %529 = vmatpush1.msra.mxu0 %v315
      %530 = vmatprep.subr.mxu0 0.0
      %531 = vmatpush1.msra.mxu0 %v316
      %532 = vmatprep.subr.mxu0 0.0
      %533 = vmatpush1.msra.mxu0 %v317
      %534 = vmatprep.subr.mxu0 0.0
      %535 = vmatpush1.msra.mxu0 %v318
      %536 = vmatprep.subr.mxu0 0.0
      %537 = vmatpush1.msra.mxu0 %v319
      %538 = vmatprep.subr.mxu0 0.0
      %539 = vmatpush1.msra.mxu0 %v320
      %540 = vmatprep.subr.mxu0 0.0
      %541 = vmatpush1.msra.mxu0 %v321
      %542 = vmatprep.mubr.f32.mxu0 %v334
      %543 = vmatmul.mubr.f32.gmra.mrb[0].mxu0 %v225
      %v544 = vpop.f32.mrb[0].mxu0
      %v545 = vadd.f32 %v475, %v544
      %v546 = vpop.f32.mrb[0].mxu0
      %547 = vdwg.mxu0
      %v548 = vld [vmem:[%s3] sm:$0x1]
      %v550 = vrot.slane %v545, 7
      %vm552 = vcmask 1040384
      %v553 = vsel %vm552, %v548, %v550
      %vm554 = vcmask 1044480
      %v555 = vsel %vm554, %v553, 0.0
      %v556 = vld [vmem:[%s4] sm:$0xff]
      %v557 = vadd.f32 %v555, %v556
      %558 = vst [vmem:[%s222] sm:$0xff] %v557
      %p559 = scmp.lt.s32.totalorder %s16, 1
      %s560 = scalar_select %p559, %s16, 1
      %s561 = smul.addr %s560, 8
      %s562 = scalar_lea.vmem %s5, %s561
      // Predicated region
      $region41: #{vit_forward.4} parent=39 // pred_check
        %p563 = pneg %p144
      $region42: #{vit_forward.4} parent=39 // pred_check_branch
        %565 = sbr.rel (%p563) target = $region44
      $region43: #{vit_forward.4} parent=39 // pred_region
        _
      $region44: #{vit_forward.4} parent=39 // pred_fallthru
        _
    $region40: #{vit_forward.4} parent=5 // pred_fallthru
      _
    %p566 = scmp.le.s32.totalorder 2, %s11
    // Predicated region
    $region45: #{vit_forward.4} parent=5 // pred_check
      %p567 = pneg %p566
    $region46: #{vit_forward.4} parent=5 // pred_check_branch
      %569 = sbr.rel (%p567) target = $region48
    $region47: #{vit_forward.4} parent=5 // pred_region
      %s570 = ssub.s32 %s11, 2
      // Predicated region
      $region49: #{vit_forward.4} parent=47 // pred_check
        %p571 = pneg %p150
      $region50: #{vit_forward.4} parent=47 // pred_check_branch
        %573 = sbr.rel (%p571) target = $region52
      $region51: #{vit_forward.4} parent=47 // pred_region
        %p574 = scmp.lt.s32.totalorder %s17, 1
        %s575 = scalar_select %p574, %s17, 1
        %s576 = smul.addr %s575, 8
        %s577 = scalar_lea.vmem %s5, %s576
      $region52: #{vit_forward.4} parent=47 // pred_fallthru
        _
    $region48: #{vit_forward.4} parent=5 // pred_fallthru
      _
  $region6: #{vit_forward.4} parent=0 // loop_footer
    %s15 = sadd.s32 1, %s11
  $region7: #{vit_forward.4} parent=0 // loop_footer_branch
    %10 = sbr.rel target = $region3
  $region8: #{vit_forward.4} parent=0 // loop_exit
    _

// kernel: vit_forward.5
$region0: #{vit_forward.5}
  #allocation0 [shape = 'u32[]', space=smem, size = 0x4, offset = 0x4, fixed_abs, tag = 'smem constant byte address 0x4 - core index']
  #allocation1 [shape = 'u32[144,128]{1,0:T(1,128)}', space=vmem, size = 0x12000, scoped, tag = 'internal scratch']
  %s0 = inlined_call_operand.vmem [shape: f32[2,8,128], index: 0, kind: input, shape index: {}]
  %s1 = inlined_call_operand.vmem [shape: f32[1,128], index: 1, kind: input, shape index: {}]
  %s2 = inlined_call_operand.vmem [shape: f32[1,128], index: 2, kind: input, shape index: {}]
  %s3 = inlined_call_operand.vmem [shape: f32[128,384], index: 3, kind: input, shape index: {}]
  %s4 = inlined_call_operand.vmem [shape: f32[1,384], index: 4, kind: input, shape index: {}]
  %s5 = inlined_call_operand.vmem [shape: f32[128,128], index: 5, kind: input, shape index: {}]
  %s6 = inlined_call_operand.vmem [shape: f32[1,128], index: 6, kind: input, shape index: {}]
  %s7 = inlined_call_operand.vmem [shape: f32[1,128], index: 7, kind: input, shape index: {}]
  %s8 = inlined_call_operand.vmem [shape: f32[1,128], index: 8, kind: input, shape index: {}]
  %s9 = inlined_call_operand.vmem [shape: f32[128,512], index: 9, kind: input, shape index: {}]
  %s10 = inlined_call_operand.vmem [shape: f32[1,512], index: 10, kind: input, shape index: {}]
  %s11 = inlined_call_operand.vmem [shape: f32[512,128], index: 11, kind: input, shape index: {}]
  %s12 = inlined_call_operand.vmem [shape: f32[1,128], index: 12, kind: input, shape index: {}]
  %s13 = inlined_call_operand.vmem [shape: f32[2,8,128], index: 13, kind: output, shape index: {}]
  %s14 = sld [smem:[#allocation0]]
  $region85: #{vit_forward.5} parent=0
    _
  %s16 = ssub.s32 1, %s14
  %s17 = scalar_select 0, %s16, %s14
  loop: start=0, step=1, limit=4
  $region2: #{vit_forward.5} parent=0 // loop_pre_header
    _
  $region3: #{vit_forward.5} parent=0 // loop_header
    %s19 = sphi 0, %s23
    %p20 = scmp.ge.s32.totalorder %s19, 4
    %s29 = sphi 0, %s31
    %s32 = sphi 0, %s29
    %s33 = sphi 0, %s32
    %s49 = sphi 0, %s33
    %s53 = sphi 0, %s53
    %s55 = sphi 0, %s53
    %s56 = sphi 0, %s55
    %s70 = sphi 0, %s56
    %s74 = sphi 0, %s74
    %s76 = sphi 0, %s74
    %s77 = sphi 0, %s76
    %s91 = sphi 0, %s77
    %s95 = sphi 0, %s95
    %s97 = sphi 0, %s95
    %s98 = sphi 0, %s97
    %s112 = sphi 0, %s98
    %s116 = sphi 0, %s116
    %s118 = sphi 0, %s116
    %s119 = sphi 0, %s118
    %s133 = sphi 0, %s119
    %s137 = sphi 0, %s137
    %s139 = sphi 0, %s137
    %s140 = sphi 0, %s139
    %s154 = sphi 0, %s140
    %s158 = sphi 0, %s158
    %s160 = sphi 0, %s158
    %s161 = sphi 0, %s160
    %s175 = sphi 0, %s161
    %s179 = sphi 0, %s179
    %s181 = sphi 0, %s179
    %s182 = sphi 0, %s181
    %s196 = sphi 0, %s182
    %s200 = sphi 0, %s200
    %s202 = sphi 0, %s200
    %s203 = sphi 0, %s202
    %s217 = sphi 0, %s203
    %s221 = sphi 0, %s221
    %s223 = sphi 0, %s221
    %s224 = sphi 0, %s223
    %s238 = sphi 0, %s224
    %s242 = sphi 0, %s242
    %s244 = sphi 0, %s242
    %s245 = sphi 0, %s244
    %s259 = sphi 0, %s245
    %s263 = sphi 0, %s263
    %s265 = sphi 0, %s263
    %s266 = sphi 0, %s265
    %s280 = sphi 0, %s266
    %s284 = sphi 0, %s284
    %s286 = sphi 0, %s284
    %s287 = sphi 0, %s286
    %s301 = sphi 0, %s287
    %s307 = sphi 0, %s309
    %s310 = sphi 0, %s307
    %s311 = sphi 0, %s310
    %s327 = sphi 0, %s311
  $region4: #{vit_forward.5} parent=0 // loop_header_branch
    %22 = sbr.rel (%p20) target = $region8
  $region5: #{vit_forward.5} parent=0 // loop_body
    %s24 = ssub.s32 %s19, 1
    %s25 = ssub.s32 %s19, 2
    %s26 = sadd.s32 %s19, 1
    %s27 = ssub.s32 %s19, %s26
    %p28 = scmp.eq.s32.totalorder %s27, 0
    %s30 = sadd.s32 %s29, 1
    %s31 = scalar_select %p28, %s29, %s30
    %p34 = pneg %p28
    %p35 = scmp.eq.s32.totalorder %s19, 1
    %p36 = por %p34, %p35
    %p37 = scmp.ne.s32.totalorder %s29, %s32
    %p38 = scmp.eq.s32.totalorder %s19, 0
    %p39 = por %p37, %p38
    %p40 = scmp.ne.s32.totalorder %s29, %s32
    %p41 = scmp.eq.s32.totalorder %s24, 1
    %p42 = por %p40, %p41
    %p43 = scmp.ne.s32.totalorder %s32, %s33
    %p44 = scmp.eq.s32.totalorder %s24, 0
    %p45 = por %p43, %p44
    %p46 = scmp.ne.s32.totalorder %s32, %s33
    %p47 = scmp.eq.s32.totalorder %s25, 1
    %p48 = por %p46, %p47
    %p50 = scmp.ne.s32.totalorder %s33, %s49
    %p51 = scmp.eq.s32.totalorder %s25, 0
    %p52 = por %p50, %p51
    %s54 = sadd.s32 %s53, 1
    %p57 = scmp.eq.s32.totalorder %s19, 1
    %p58 = scmp.ne.s32.totalorder %s53, %s55
    %p59 = scmp.eq.s32.totalorder %s19, 0
    %p60 = por %p58, %p59
    %p61 = scmp.ne.s32.totalorder %s53, %s55
    %p62 = scmp.eq.s32.totalorder %s24, 1
    %p63 = por %p61, %p62
    %p64 = scmp.ne.s32.totalorder %s55, %s56
    %p65 = scmp.eq.s32.totalorder %s24, 0
    %p66 = por %p64, %p65
    %p67 = scmp.ne.s32.totalorder %s55, %s56
    %p68 = scmp.eq.s32.totalorder %s25, 1
    %p69 = por %p67, %p68
    %p71 = scmp.ne.s32.totalorder %s56, %s70
    %p72 = scmp.eq.s32.totalorder %s25, 0
    %p73 = por %p71, %p72
    %s75 = sadd.s32 %s74, 1
    %p78 = scmp.eq.s32.totalorder %s19, 1
    %p79 = scmp.ne.s32.totalorder %s74, %s76
    %p80 = scmp.eq.s32.totalorder %s19, 0
    %p81 = por %p79, %p80
    %p82 = scmp.ne.s32.totalorder %s74, %s76
    %p83 = scmp.eq.s32.totalorder %s24, 1
    %p84 = por %p82, %p83
    %p85 = scmp.ne.s32.totalorder %s76, %s77
    %p86 = scmp.eq.s32.totalorder %s24, 0
    %p87 = por %p85, %p86
    %p88 = scmp.ne.s32.totalorder %s76, %s77
    %p89 = scmp.eq.s32.totalorder %s25, 1
    %p90 = por %p88, %p89
    %p92 = scmp.ne.s32.totalorder %s77, %s91
    %p93 = scmp.eq.s32.totalorder %s25, 0
    %p94 = por %p92, %p93
    %s96 = sadd.s32 %s95, 1
    %p99 = scmp.eq.s32.totalorder %s19, 1
    %p100 = scmp.ne.s32.totalorder %s95, %s97
    %p101 = scmp.eq.s32.totalorder %s19, 0
    %p102 = por %p100, %p101
    %p103 = scmp.ne.s32.totalorder %s95, %s97
    %p104 = scmp.eq.s32.totalorder %s24, 1
    %p105 = por %p103, %p104
    %p106 = scmp.ne.s32.totalorder %s97, %s98
    %p107 = scmp.eq.s32.totalorder %s24, 0
    %p108 = por %p106, %p107
    %p109 = scmp.ne.s32.totalorder %s97, %s98
    %p110 = scmp.eq.s32.totalorder %s25, 1
    %p111 = por %p109, %p110
    %p113 = scmp.ne.s32.totalorder %s98, %s112
    %p114 = scmp.eq.s32.totalorder %s25, 0
    %p115 = por %p113, %p114
    %s117 = sadd.s32 %s116, 1
    %p120 = scmp.eq.s32.totalorder %s19, 1
    %p121 = scmp.ne.s32.totalorder %s116, %s118
    %p122 = scmp.eq.s32.totalorder %s19, 0
    %p123 = por %p121, %p122
    %p124 = scmp.ne.s32.totalorder %s116, %s118
    %p125 = scmp.eq.s32.totalorder %s24, 1
    %p126 = por %p124, %p125
    %p127 = scmp.ne.s32.totalorder %s118, %s119
    %p128 = scmp.eq.s32.totalorder %s24, 0
    %p129 = por %p127, %p128
    %p130 = scmp.ne.s32.totalorder %s118, %s119
    %p131 = scmp.eq.s32.totalorder %s25, 1
    %p132 = por %p130, %p131
    %p134 = scmp.ne.s32.totalorder %s119, %s133
    %p135 = scmp.eq.s32.totalorder %s25, 0
    %p136 = por %p134, %p135
    %s138 = sadd.s32 %s137, 1
    %p141 = scmp.eq.s32.totalorder %s19, 1
    %p142 = scmp.ne.s32.totalorder %s137, %s139
    %p143 = scmp.eq.s32.totalorder %s19, 0
    %p144 = por %p142, %p143
    %p145 = scmp.ne.s32.totalorder %s137, %s139
    %p146 = scmp.eq.s32.totalorder %s24, 1
    %p147 = por %p145, %p146
    %p148 = scmp.ne.s32.totalorder %s139, %s140
    %p149 = scmp.eq.s32.totalorder %s24, 0
    %p150 = por %p148, %p149
    %p151 = scmp.ne.s32.totalorder %s139, %s140
    %p152 = scmp.eq.s32.totalorder %s25, 1
    %p153 = por %p151, %p152
    %p155 = scmp.ne.s32.totalorder %s140, %s154
    %p156 = scmp.eq.s32.totalorder %s25, 0
    %p157 = por %p155, %p156
    %s159 = sadd.s32 %s158, 1
    %p162 = scmp.eq.s32.totalorder %s19, 1
    %p163 = scmp.ne.s32.totalorder %s158, %s160
    %p164 = scmp.eq.s32.totalorder %s19, 0
    %p165 = por %p163, %p164
    %p166 = scmp.ne.s32.totalorder %s158, %s160
    %p167 = scmp.eq.s32.totalorder %s24, 1
    %p168 = por %p166, %p167
    %p169 = scmp.ne.s32.totalorder %s160, %s161
    %p170 = scmp.eq.s32.totalorder %s24, 0
    %p171 = por %p169, %p170
    %p172 = scmp.ne.s32.totalorder %s160, %s161
    %p173 = scmp.eq.s32.totalorder %s25, 1
    %p174 = por %p172, %p173
    %p176 = scmp.ne.s32.totalorder %s161, %s175
    %p177 = scmp.eq.s32.totalorder %s25, 0
    %p178 = por %p176, %p177
    %s180 = sadd.s32 %s179, 1
    %p183 = scmp.eq.s32.totalorder %s19, 1
    %p184 = scmp.ne.s32.totalorder %s179, %s181
    %p185 = scmp.eq.s32.totalorder %s19, 0
    %p186 = por %p184, %p185
    %p187 = scmp.ne.s32.totalorder %s179, %s181
    %p188 = scmp.eq.s32.totalorder %s24, 1
    %p189 = por %p187, %p188
    %p190 = scmp.ne.s32.totalorder %s181, %s182
    %p191 = scmp.eq.s32.totalorder %s24, 0
    %p192 = por %p190, %p191
    %p193 = scmp.ne.s32.totalorder %s181, %s182
    %p194 = scmp.eq.s32.totalorder %s25, 1
    %p195 = por %p193, %p194
    %p197 = scmp.ne.s32.totalorder %s182, %s196
    %p198 = scmp.eq.s32.totalorder %s25, 0
    %p199 = por %p197, %p198
    %s201 = sadd.s32 %s200, 1
    %p204 = scmp.eq.s32.totalorder %s19, 1
    %p205 = scmp.ne.s32.totalorder %s200, %s202
    %p206 = scmp.eq.s32.totalorder %s19, 0
    %p207 = por %p205, %p206
    %p208 = scmp.ne.s32.totalorder %s200, %s202
    %p209 = scmp.eq.s32.totalorder %s24, 1
    %p210 = por %p208, %p209
    %p211 = scmp.ne.s32.totalorder %s202, %s203
    %p212 = scmp.eq.s32.totalorder %s24, 0
    %p213 = por %p211, %p212
    %p214 = scmp.ne.s32.totalorder %s202, %s203
    %p215 = scmp.eq.s32.totalorder %s25, 1
    %p216 = por %p214, %p215
    %p218 = scmp.ne.s32.totalorder %s203, %s217
    %p219 = scmp.eq.s32.totalorder %s25, 0
    %p220 = por %p218, %p219
    %s222 = sadd.s32 %s221, 1
    %p225 = scmp.eq.s32.totalorder %s19, 1
    %p226 = scmp.ne.s32.totalorder %s221, %s223
    %p227 = scmp.eq.s32.totalorder %s19, 0
    %p228 = por %p226, %p227
    %p229 = scmp.ne.s32.totalorder %s221, %s223
    %p230 = scmp.eq.s32.totalorder %s24, 1
    %p231 = por %p229, %p230
    %p232 = scmp.ne.s32.totalorder %s223, %s224
    %p233 = scmp.eq.s32.totalorder %s24, 0
    %p234 = por %p232, %p233
    %p235 = scmp.ne.s32.totalorder %s223, %s224
    %p236 = scmp.eq.s32.totalorder %s25, 1
    %p237 = por %p235, %p236
    %p239 = scmp.ne.s32.totalorder %s224, %s238
    %p240 = scmp.eq.s32.totalorder %s25, 0
    %p241 = por %p239, %p240
    %s243 = sadd.s32 %s242, 1
    %p246 = scmp.eq.s32.totalorder %s19, 1
    %p247 = scmp.ne.s32.totalorder %s242, %s244
    %p248 = scmp.eq.s32.totalorder %s19, 0
    %p249 = por %p247, %p248
    %p250 = scmp.ne.s32.totalorder %s242, %s244
    %p251 = scmp.eq.s32.totalorder %s24, 1
    %p252 = por %p250, %p251
    %p253 = scmp.ne.s32.totalorder %s244, %s245
    %p254 = scmp.eq.s32.totalorder %s24, 0
    %p255 = por %p253, %p254
    %p256 = scmp.ne.s32.totalorder %s244, %s245
    %p257 = scmp.eq.s32.totalorder %s25, 1
    %p258 = por %p256, %p257
    %p260 = scmp.ne.s32.totalorder %s245, %s259
    %p261 = scmp.eq.s32.totalorder %s25, 0
    %p262 = por %p260, %p261
    %s264 = sadd.s32 %s263, 1
    %p267 = scmp.eq.s32.totalorder %s19, 1
    %p268 = scmp.ne.s32.totalorder %s263, %s265
    %p269 = scmp.eq.s32.totalorder %s19, 0
    %p270 = por %p268, %p269
    %p271 = scmp.ne.s32.totalorder %s263, %s265
    %p272 = scmp.eq.s32.totalorder %s24, 1
    %p273 = por %p271, %p272
    %p274 = scmp.ne.s32.totalorder %s265, %s266
    %p275 = scmp.eq.s32.totalorder %s24, 0
    %p276 = por %p274, %p275
    %p277 = scmp.ne.s32.totalorder %s265, %s266
    %p278 = scmp.eq.s32.totalorder %s25, 1
    %p279 = por %p277, %p278
    %p281 = scmp.ne.s32.totalorder %s266, %s280
    %p282 = scmp.eq.s32.totalorder %s25, 0
    %p283 = por %p281, %p282
    %s285 = sadd.s32 %s284, 1
    %p288 = scmp.eq.s32.totalorder %s19, 1
    %p289 = scmp.ne.s32.totalorder %s284, %s286
    %p290 = scmp.eq.s32.totalorder %s19, 0
    %p291 = por %p289, %p290
    %p292 = scmp.ne.s32.totalorder %s284, %s286
    %p293 = scmp.eq.s32.totalorder %s24, 1
    %p294 = por %p292, %p293
    %p295 = scmp.ne.s32.totalorder %s286, %s287
    %p296 = scmp.eq.s32.totalorder %s24, 0
    %p297 = por %p295, %p296
    %p298 = scmp.ne.s32.totalorder %s286, %s287
    %p299 = scmp.eq.s32.totalorder %s25, 1
    %p300 = por %p298, %p299
    %p302 = scmp.ne.s32.totalorder %s287, %s301
    %p303 = scmp.eq.s32.totalorder %s25, 0
    %p304 = por %p302, %p303
    %s305 = ssub.s32 %s19, %s26
    %p306 = scmp.eq.s32.totalorder %s305, 0
    %s308 = sadd.s32 %s307, 1
    %s309 = scalar_select %p306, %s307, %s308
    %p312 = pneg %p306
    %p313 = scmp.eq.s32.totalorder %s19, 1
    %p314 = por %p312, %p313
    %p315 = scmp.ne.s32.totalorder %s307, %s310
    %p316 = scmp.eq.s32.totalorder %s19, 0
    %p317 = por %p315, %p316
    %p318 = scmp.ne.s32.totalorder %s307, %s310
    %p319 = scmp.eq.s32.totalorder %s24, 1
    %p320 = por %p318, %p319
    %p321 = scmp.ne.s32.totalorder %s310, %s311
    %p322 = scmp.eq.s32.totalorder %s24, 0
    %p323 = por %p321, %p322
    %p324 = scmp.ne.s32.totalorder %s310, %s311
    %p325 = scmp.eq.s32.totalorder %s25, 1
    %p326 = por %p324, %p325
    %p328 = scmp.ne.s32.totalorder %s311, %s327
    %p329 = scmp.eq.s32.totalorder %s25, 0
    %p330 = por %p328, %p329
    %p331 = scmp.le.s32.totalorder 1, %s19
    %p332 = scmp.lt.s32.totalorder %s19, 3
    %p333 = pnand %p331, %p332
    %p334 = pneg %p333
    // Predicated region
    $region9: #{vit_forward.5} parent=5 // pred_check
      _
    $region10: #{vit_forward.5} parent=5 // pred_check_branch
      %336 = sbr.rel (%p333) target = $region12
    $region11: #{vit_forward.5} parent=5 // pred_region
      %s337 = ssub.s32 %s19, 1
      // Predicated region
      $region13: #{vit_forward.5} parent=11 // pred_check
        %p338 = pneg %p66
      $region14: #{vit_forward.5} parent=11 // pred_check_branch
        %340 = sbr.rel (%p338) target = $region16
      $region15: #{vit_forward.5} parent=11 // pred_region
        _
      $region16: #{vit_forward.5} parent=11 // pred_fallthru
        _
      // Predicated region
      $region17: #{vit_forward.5} parent=11 // pred_check
        %p341 = pneg %p87
      $region18: #{vit_forward.5} parent=11 // pred_check_branch
        %343 = sbr.rel (%p341) target = $region20
      $region19: #{vit_forward.5} parent=11 // pred_region
        _
      $region20: #{vit_forward.5} parent=11 // pred_fallthru
        _
      // Predicated region
      $region21: #{vit_forward.5} parent=11 // pred_check
        %p344 = pneg %p108
      $region22: #{vit_forward.5} parent=11 // pred_check_branch
        %346 = sbr.rel (%p344) target = $region24
      $region23: #{vit_forward.5} parent=11 // pred_region
        _
      $region24: #{vit_forward.5} parent=11 // pred_fallthru
        _
      // Predicated region
      $region25: #{vit_forward.5} parent=11 // pred_check
        %p347 = pneg %p129
      $region26: #{vit_forward.5} parent=11 // pred_check_branch
        %349 = sbr.rel (%p347) target = $region28
      $region27: #{vit_forward.5} parent=11 // pred_region
        _
      $region28: #{vit_forward.5} parent=11 // pred_fallthru
        _
      // Predicated region
      $region29: #{vit_forward.5} parent=11 // pred_check
        %p350 = pneg %p150
      $region30: #{vit_forward.5} parent=11 // pred_check_branch
        %352 = sbr.rel (%p350) target = $region32
      $region31: #{vit_forward.5} parent=11 // pred_region
        _
      $region32: #{vit_forward.5} parent=11 // pred_fallthru
        _
      // Predicated region
      $region33: #{vit_forward.5} parent=11 // pred_check
        %p353 = pneg %p171
      $region34: #{vit_forward.5} parent=11 // pred_check_branch
        %355 = sbr.rel (%p353) target = $region36
      $region35: #{vit_forward.5} parent=11 // pred_region
        _
      $region36: #{vit_forward.5} parent=11 // pred_fallthru
        _
      // Predicated region
      $region37: #{vit_forward.5} parent=11 // pred_check
        %p356 = pneg %p192
      $region38: #{vit_forward.5} parent=11 // pred_check_branch
        %358 = sbr.rel (%p356) target = $region40
      $region39: #{vit_forward.5} parent=11 // pred_region
        _
      $region40: #{vit_forward.5} parent=11 // pred_fallthru
        _
      // Predicated region
      $region41: #{vit_forward.5} parent=11 // pred_check
        %p359 = pneg %p213
      $region42: #{vit_forward.5} parent=11 // pred_check_branch
        %361 = sbr.rel (%p359) target = $region44
      $region43: #{vit_forward.5} parent=11 // pred_region
        _
      $region44: #{vit_forward.5} parent=11 // pred_fallthru
        _
      // Predicated region
      $region45: #{vit_forward.5} parent=11 // pred_check
        %p362 = pneg %p234
      $region46: #{vit_forward.5} parent=11 // pred_check_branch
        %364 = sbr.rel (%p362) target = $region48
      $region47: #{vit_forward.5} parent=11 // pred_region
        _
      $region48: #{vit_forward.5} parent=11 // pred_fallthru
        _
      // Predicated region
      $region49: #{vit_forward.5} parent=11 // pred_check
        %p365 = pneg %p255
      $region50: #{vit_forward.5} parent=11 // pred_check_branch
        %367 = sbr.rel (%p365) target = $region52
      $region51: #{vit_forward.5} parent=11 // pred_region
        _
      $region52: #{vit_forward.5} parent=11 // pred_fallthru
        _
      // Predicated region
      $region53: #{vit_forward.5} parent=11 // pred_check
        %p368 = pneg %p276
      $region54: #{vit_forward.5} parent=11 // pred_check_branch
        %370 = sbr.rel (%p368) target = $region56
      $region55: #{vit_forward.5} parent=11 // pred_region
        _
      $region56: #{vit_forward.5} parent=11 // pred_fallthru
        _
      // Predicated region
      $region57: #{vit_forward.5} parent=11 // pred_check
        %p371 = pneg %p297
      $region58: #{vit_forward.5} parent=11 // pred_check_branch
        %373 = sbr.rel (%p371) target = $region60
      $region59: #{vit_forward.5} parent=11 // pred_region
        _
      $region60: #{vit_forward.5} parent=11 // pred_fallthru
        _
    $region12: #{vit_forward.5} parent=5 // pred_fallthru
      _
    %p374 = scmp.lt.s32.totalorder %s19, 2
    // Predicated region
    $region61: #{vit_forward.5} parent=5 // pred_check
      %p375 = pneg %p374
    $region62: #{vit_forward.5} parent=5 // pred_check_branch
      %377 = sbr.rel (%p375) target = $region64
    $region63: #{vit_forward.5} parent=5 // pred_region
      // Predicated region
      $region65: #{vit_forward.5} parent=63 // pred_check
        %p378 = pneg %p39
      $region66: #{vit_forward.5} parent=63 // pred_check_branch
        %380 = sbr.rel (%p378) target = $region68
      $region67: #{vit_forward.5} parent=63 // pred_region
        %p381 = scmp.lt.s32.totalorder %s19, 1
        %s382 = scalar_select %p381, %s19, 1
        %s383 = smul.addr %s382, 8
        %s384 = scalar_lea.vmem %s0, %s383
      $region68: #{vit_forward.5} parent=63 // pred_fallthru
        _
    $region64: #{vit_forward.5} parent=5 // pred_fallthru
      _
    %p385 = scmp.le.s32.totalorder 1, %s19
    %p386 = scmp.lt.s32.totalorder %s19, 3
    %p387 = pnand %p385, %p386
    %p388 = pneg %p387
    // Predicated region
    $region69: #{vit_forward.5} parent=5 // pred_check
      _
    $region70: #{vit_forward.5} parent=5 // pred_check_branch
      %390 = sbr.rel (%p387) target = $region72
    $region71: #{vit_forward.5} parent=5 // pred_region
      %s391 = ssub.s32 %s19, 1
      %p392 = scmp.lt.s32.totalorder %s24, 1
      %s393 = scalar_select %p392, %s24, 1
      %s394 = smul.addr %s393, 8
      %s395 = scalar_lea.vmem %s0, %s394
      %p396 = pneg %p45
      %p397 = pneg %p42
      %p398 = pneg %p66
      %p399 = pneg %p63
      %p400 = pneg %p87
      %p401 = pneg %p84
      %p402 = pneg %p108
      %p403 = pneg %p105
      %p404 = pneg %p129
      %p405 = pneg %p126
      %p406 = pneg %p150
      %p407 = pneg %p147
      %p408 = pneg %p171
      %p409 = pneg %p168
      %p410 = pneg %p192
      %p411 = pneg %p189
      %p412 = pneg %p213
      %p413 = pneg %p210
      %p414 = pneg %p234
      %p415 = pneg %p231
      %p416 = pneg %p255
      %p417 = pneg %p252
      %p418 = pneg %p276
      %p419 = pneg %p273
      %p420 = pneg %p297
      %p421 = pneg %p294
      %p422 = pneg %p323
      %p423 = pneg %p320
      %p424 = scmp.lt.s32.totalorder %s24, 1
      %s425 = scalar_select %p424, %s24, 1
      %s426 = smul.addr %s425, 8
      %s427 = scalar_lea.vmem %s13, %s426
      %p428 = scmp.lt.s32.totalorder %s24, 1
      %s429 = scalar_select %p428, %s24, 1
      %s430 = smul.addr %s429, 8
      %s431 = scalar_lea.vmem %s0, %s430
      %p432 = scmp.lt.s32.totalorder %s24, 1
      %s433 = scalar_select %p432, %s24, 1
      %s434 = smul.addr %s433, 8
      %s435 = scalar_lea.vmem %s13, %s434
      %v436 = vld [vmem:[%s431] sm:$0xff]
      %v437 = vld [vmem:[%s1] sm:$0x1]
      %v438 = vld [vmem:[%s2] sm:$0x1]
      %439 = vadd.xlane.f32.xlu0 %v436
      %v440 = vpop.xlane.xlu0 %439
      %v441 = vrcp.pop 128.0
      %v442 = vmul.f32 %v440, %v441
      %v443 = vsub.f32 %v436, %v442
      %v444 = vmul.f32 %v443, %v443
      %445 = vadd.xlane.f32.xlu0 %v444
      %v446 = vpop.xlane.xlu0 %445
      %v447 = vmul.f32 %v446, %v441
      %v448 = vadd.f32 %v447, 1e-06
      %v449 = vrsqrt.pop %v448
      %v450 = vmul.f32 %v443, %v449
      %v452 = vlaneseq
      %v453 = vshrl.u32 %v452, 7
      %v454 = vsub.s32 0, %v453
      %v455 = vrot.slane %v437, %v454
      %v457 = vmul.f32 %v450, %v455
      %v459 = vlaneseq
      %v460 = vshrl.u32 %v459, 7
      %v461 = vsub.s32 0, %v460
      %v462 = vrot.slane %v438, %v461
      %v464 = vadd.f32 %v457, %v462
      %v465 = vld [vmem:[%s3] sm:$0xff]
      %v466 = vld [vmem:[%s3 + $0x8] sm:$0xff]
      %v467 = vld [vmem:[%s3 + $0x10] sm:$0xff]
      %v468 = vld [vmem:[%s3 + $0x18] sm:$0xff]
      %v469 = vld [vmem:[%s3 + $0x20] sm:$0xff]
      %v470 = vld [vmem:[%s3 + $0x28] sm:$0xff]
      %v471 = vld [vmem:[%s3 + $0x30] sm:$0xff]
      %v472 = vld [vmem:[%s3 + $0x38] sm:$0xff]
      %v473 = vld [vmem:[%s3 + $0x40] sm:$0xff]
      %v474 = vld [vmem:[%s3 + $0x48] sm:$0xff]
      %v475 = vld [vmem:[%s3 + $0x50] sm:$0xff]
      %v476 = vld [vmem:[%s3 + $0x58] sm:$0xff]
      %v477 = vld [vmem:[%s3 + $0x60] sm:$0xff]
      %v478 = vld [vmem:[%s3 + $0x68] sm:$0xff]
      %v479 = vld [vmem:[%s3 + $0x70] sm:$0xff]
      %v480 = vld [vmem:[%s3 + $0x78] sm:$0xff]
      %v481 = vld [vmem:[%s3 + $0x80] sm:$0xff]
      %v482 = vld [vmem:[%s3 + $0x88] sm:$0xff]
      %v483 = vld [vmem:[%s3 + $0x90] sm:$0xff]
      %v484 = vld [vmem:[%s3 + $0x98] sm:$0xff]
      %v485 = vld [vmem:[%s3 + $0xa0] sm:$0xff]
      %v486 = vld [vmem:[%s3 + $0xa8] sm:$0xff]
      %v487 = vld [vmem:[%s3 + $0xb0] sm:$0xff]
      %v488 = vld [vmem:[%s3 + $0xb8] sm:$0xff]
      %v489 = vld [vmem:[%s3 + $0xc0] sm:$0xff]
      %v490 = vld [vmem:[%s3 + $0xc8] sm:$0xff]
      %v491 = vld [vmem:[%s3 + $0xd0] sm:$0xff]
      %v492 = vld [vmem:[%s3 + $0xd8] sm:$0xff]
      %v493 = vld [vmem:[%s3 + $0xe0] sm:$0xff]
      %v494 = vld [vmem:[%s3 + $0xe8] sm:$0xff]
      %v495 = vld [vmem:[%s3 + $0xf0] sm:$0xff]
      %v496 = vld [vmem:[%s3 + $0xf8] sm:$0xff]
      %v497 = vld [vmem:[%s3 + $0x100] sm:$0xff]
      %v498 = vld [vmem:[%s3 + $0x108] sm:$0xff]
      %v499 = vld [vmem:[%s3 + $0x110] sm:$0xff]
      %v500 = vld [vmem:[%s3 + $0x118] sm:$0xff]
      %v501 = vld [vmem:[%s3 + $0x120] sm:$0xff]
      %v502 = vld [vmem:[%s3 + $0x128] sm:$0xff]
      %v503 = vld [vmem:[%s3 + $0x130] sm:$0xff]
      %v504 = vld [vmem:[%s3 + $0x138] sm:$0xff]
      %v505 = vld [vmem:[%s3 + $0x140] sm:$0xff]
      %v506 = vld [vmem:[%s3 + $0x148] sm:$0xff]
      %v507 = vld [vmem:[%s3 + $0x150] sm:$0xff]
      %v508 = vld [vmem:[%s3 + $0x158] sm:$0xff]
      %v509 = vld [vmem:[%s3 + $0x160] sm:$0xff]
      %v510 = vld [vmem:[%s3 + $0x168] sm:$0xff]
      %v511 = vld [vmem:[%s3 + $0x170] sm:$0xff]
      %v512 = vld [vmem:[%s3 + $0x178] sm:$0xff]
      %v513 = vld [vmem:[%s4] sm:$0x7]
      %v515 = vlaneseq
      %v516 = vshrl.u32 %v515, 7
      %v517 = vsub.s32 0, %v516
      %v518 = vrot.slane %v513, %v517
      %v519 = vlaneseq
      %v520 = vshrl.u32 %v519, 7
      %v521 = vsub.s32 1, %v520
      %v522 = vrot.slane %v513, %v521
      %v523 = vlaneseq
      %v524 = vshrl.u32 %v523, 7
      %v525 = vsub.s32 2, %v524
      %v526 = vrot.slane %v513, %v525
      %530 = vmatprep.subr.mxu0 %v466
      %531 = vmatpush1.msra.mxu0 %v465
      %532 = vmatprep.subr.mxu0 %v469
      %533 = vmatpush1.msra.mxu0 %v468
      %534 = vmatprep.subr.mxu0 %v472
      %535 = vmatpush1.msra.mxu0 %v471
      %536 = vmatprep.subr.mxu0 %v475
      %537 = vmatpush1.msra.mxu0 %v474
      %538 = vmatprep.subr.mxu0 %v478
      %539 = vmatpush1.msra.mxu0 %v477
      %540 = vmatprep.subr.mxu0 %v481
      %541 = vmatpush1.msra.mxu0 %v480
      %542 = vmatprep.subr.mxu0 %v484
      %543 = vmatpush1.msra.mxu0 %v483
      %544 = vmatprep.subr.mxu0 %v487
      %545 = vmatpush1.msra.mxu0 %v486
      %546 = vmatprep.subr.mxu0 %v490
      %547 = vmatpush1.msra.mxu0 %v489
      %548 = vmatprep.subr.mxu0 %v493
      %549 = vmatpush1.msra.mxu0 %v492
      %550 = vmatprep.subr.mxu0 %v496
      %551 = vmatpush1.msra.mxu0 %v495
      %552 = vmatprep.subr.mxu0 %v499
      %553 = vmatpush1.msra.mxu0 %v498
      %554 = vmatprep.subr.mxu0 %v502
      %555 = vmatpush1.msra.mxu0 %v501
      %556 = vmatprep.subr.mxu0 %v505
      %557 = vmatpush1.msra.mxu0 %v504
      %558 = vmatprep.subr.mxu0 %v508
      %559 = vmatpush1.msra.mxu0 %v507
      %560 = vmatprep.subr.mxu0 %v511
      %561 = vmatpush1.msra.mxu0 %v510
      %562 = vmatprep.subr.mxu0 0.0
      %563 = vmatpush1.msra.mxu0 0.0
      %564 = vmatprep.subr.mxu0 0.0
      %565 = vmatpush1.msra.mxu0 0.0
      %566 = vmatprep.subr.mxu0 0.0
      %567 = vmatpush1.msra.mxu0 0.0
      %568 = vmatprep.subr.mxu0 0.0
      %569 = vmatpush1.msra.mxu0 0.0
      %570 = vmatprep.subr.mxu0 0.0
      %571 = vmatpush1.msra.mxu0 0.0
      %572 = vmatprep.subr.mxu0 0.0
      %573 = vmatpush1.msra.mxu0 0.0
      %574 = vmatprep.subr.mxu0 0.0
      %575 = vmatpush1.msra.mxu0 0.0
      %576 = vmatprep.subr.mxu0 0.0
      %577 = vmatpush1.msra.mxu0 0.0
      %578 = vmatprep.subr.mxu0 0.0
      %579 = vmatpush1.msra.mxu0 0.0
      %580 = vmatprep.subr.mxu0 0.0
      %581 = vmatpush1.msra.mxu0 0.0
      %582 = vmatprep.subr.mxu0 0.0
      %583 = vmatpush1.msra.mxu0 0.0
      %584 = vmatprep.subr.mxu0 0.0
      %585 = vmatpush1.msra.mxu0 0.0
      %586 = vmatprep.subr.mxu0 0.0
      %587 = vmatpush1.msra.mxu0 0.0
      %588 = vmatprep.subr.mxu0 0.0
      %589 = vmatpush1.msra.mxu0 0.0
      %590 = vmatprep.subr.mxu0 0.0
      %591 = vmatpush1.msra.mxu0 0.0
      %592 = vmatprep.subr.mxu0 0.0
      %593 = vmatpush1.msra.mxu0 0.0
      %594 = vmatprep.mubr.f32.mxu0 0.0
      %595 = vmatmul.mubr.f32.gmra.mrb[0].mxu0 %v464
      %v596 = vpop.f32.mrb[0].mxu0
      %v597 = vadd.f32 %v518, %v596
      %v598 = vpop.f32.mrb[0].mxu0
      %v599 = vadd.f32 %v522, %v598
      %600 = vdwg.mxu0
      %601 = vmatprep.subr.mxu0 0.0
      %602 = vmatpush1.msra.mxu0 %v467
      %603 = vmatprep.subr.mxu0 0.0
      %604 = vmatpush1.msra.mxu0 %v470
      %605 = vmatprep.subr.mxu0 0.0
      %606 = vmatpush1.msra.mxu0 %v473
      %607 = vmatprep.subr.mxu0 0.0
      %608 = vmatpush1.msra.mxu0 %v476
      %609 = vmatprep.subr.mxu0 0.0
      %610 = vmatpush1.msra.mxu0 %v479
      %611 = vmatprep.subr.mxu0 0.0
      %612 = vmatpush1.msra.mxu0 %v482
      %613 = vmatprep.subr.mxu0 0.0
      %614 = vmatpush1.msra.mxu0 %v485
      %615 = vmatprep.subr.mxu0 0.0
      %616 = vmatpush1.msra.mxu0 %v488
      %617 = vmatprep.subr.mxu0 0.0
      %618 = vmatpush1.msra.mxu0 %v491
      %619 = vmatprep.subr.mxu0 0.0
      %620 = vmatpush1.msra.mxu0 %v494
      %621 = vmatprep.subr.mxu0 0.0
      %622 = vmatpush1.msra.mxu0 %v497
      %623 = vmatprep.subr.mxu0 0.0
      %624 = vmatpush1.msra.mxu0 %v500
      %625 = vmatprep.subr.mxu0 0.0
      %626 = vmatpush1.msra.mxu0 %v503
      %627 = vmatprep.subr.mxu0 0.0
      %628 = vmatpush1.msra.mxu0 %v506
      %629 = vmatprep.subr.mxu0 0.0
      %630 = vmatpush1.msra.mxu0 %v509
      %631 = vmatprep.subr.mxu0 0.0
      %632 = vmatpush1.msra.mxu0 %v512
      %633 = vmatprep.subr.mxu0 0.0
      %634 = vmatpush1.msra.mxu0 0.0
      %635 = vmatprep.subr.mxu0 0.0
      %636 = vmatpush1.msra.mxu0 0.0
      %637 = vmatprep.subr.mxu0 0.0
      %638 = vmatpush1.msra.mxu0 0.0
      %639 = vmatprep.subr.mxu0 0.0
      %640 = vmatpush1.msra.mxu0 0.0
      %641 = vmatprep.subr.mxu0 0.0
      %642 = vmatpush1.msra.mxu0 0.0
      %643 = vmatprep.subr.mxu0 0.0
      %644 = vmatpush1.msra.mxu0 0.0
      %645 = vmatprep.subr.mxu0 0.0
      %646 = vmatpush1.msra.mxu0 0.0
      %647 = vmatprep.subr.mxu0 0.0
      %648 = vmatpush1.msra.mxu0 0.0
      %649 = vmatprep.subr.mxu0 0.0
      %650 = vmatpush1.msra.mxu0 0.0
      %651 = vmatprep.subr.mxu0 0.0
      %652 = vmatpush1.msra.mxu0 0.0
      %653 = vmatprep.subr.mxu0 0.0
      %654 = vmatpush1.msra.mxu0 0.0
      %655 = vmatprep.subr.mxu0 0.0
      %656 = vmatpush1.msra.mxu0 0.0
      %657 = vmatprep.subr.mxu0 0.0
      %658 = vmatpush1.msra.mxu0 0.0
      %659 = vmatprep.subr.mxu0 0.0
      %660 = vmatpush1.msra.mxu0 0.0
      %661 = vmatprep.subr.mxu0 0.0
      %662 = vmatpush1.msra.mxu0 0.0
      %663 = vmatprep.subr.mxu0 0.0
      %664 = vmatpush1.msra.mxu0 0.0
      %665 = vmatprep.mubr.f32.mxu0 0.0
      %666 = vmatmul.mubr.f32.gmra.mrb[0].mxu0 %v464
      %v667 = vpop.f32.mrb[0].mxu0
      %v668 = vadd.f32 %v526, %v667
      %v669 = vpop.f32.mrb[0].mxu0
      %670 = vdwg.mxu0
      %v671 = vlaneseq
      %v672 = vand.u32 %v671, 127
      %vm673 = vcmp.lt.s32.totalorder %v672, 5
      %v674 = vsel %vm673, 0.0, -1e+30
      %vm675 = vcmask 261120
      %v677 = vsel %vm675, %v597, 0
      %v680 = vsel %vm675, %v599, 0
      %682 = vmatprep.subr.mxu0 0.0
      %683 = vmatpush1.xpose.msra.mxu0 %v680
      %684 = vmatprep.subr.mxu0 0.0
      %685 = vmatpush1.xpose.msra.mxu0 0.0
      %686 = vmatprep.subr.mxu0 0.0
      %687 = vmatpush1.xpose.msra.mxu0 0.0
      %688 = vmatprep.subr.mxu0 0.0
      %689 = vmatpush1.xpose.msra.mxu0 0.0
      %690 = vmatprep.subr.mxu0 0.0
      %691 = vmatpush1.xpose.msra.mxu0 0.0
      %692 = vmatprep.subr.mxu0 0.0
      %693 = vmatpush1.xpose.msra.mxu0 0.0
      %694 = vmatprep.subr.mxu0 0.0
      %695 = vmatpush1.xpose.msra.mxu0 0.0
      %696 = vmatprep.subr.mxu0 0.0
      %697 = vmatpush1.xpose.msra.mxu0 0.0
      %698 = vmatprep.subr.mxu0 0.0
      %699 = vmatpush1.xpose.msra.mxu0 0.0
      %700 = vmatprep.subr.mxu0 0.0
      %701 = vmatpush1.xpose.msra.mxu0 0.0
      %702 = vmatprep.subr.mxu0 0.0
      %703 = vmatpush1.xpose.msra.mxu0 0.0
      %704 = vmatprep.subr.mxu0 0.0
      %705 = vmatpush1.xpose.msra.mxu0 0.0
      %706 = vmatprep.subr.mxu0 0.0
      %707 = vmatpush1.xpose.msra.mxu0 0.0
      %708 = vmatprep.subr.mxu0 0.0
      %709 = vmatpush1.xpose.msra.mxu0 0.0
      %710 = vmatprep.subr.mxu0 0.0
      %711 = vmatpush1.xpose.msra.mxu0 0.0
      %712 = vmatprep.subr.mxu0 0.0
      %713 = vmatpush1.xpose.msra.mxu0 0.0
      %714 = vmatprep.subr.mxu0 0.0
      %715 = vmatpush1.xpose.msra.mxu0 0.0
      %716 = vmatprep.subr.mxu0 0.0
      %717 = vmatpush1.xpose.msra.mxu0 0.0
      %718 = vmatprep.subr.mxu0 0.0
      %719 = vmatpush1.xpose.msra.mxu0 0.0
      %720 = vmatprep.subr.mxu0 0.0
      %721 = vmatpush1.xpose.msra.mxu0 0.0
      %722 = vmatprep.subr.mxu0 0.0
      %723 = vmatpush1.xpose.msra.mxu0 0.0
      %724 = vmatprep.subr.mxu0 0.0
      %725 = vmatpush1.xpose.msra.mxu0 0.0
      %726 = vmatprep.subr.mxu0 0.0
      %727 = vmatpush1.xpose.msra.mxu0 0.0
      %728 = vmatprep.subr.mxu0 0.0
      %729 = vmatpush1.xpose.msra.mxu0 0.0
      %730 = vmatprep.subr.mxu0 0.0
      %731 = vmatpush1.xpose.msra.mxu0 0.0
      %732 = vmatprep.subr.mxu0 0.0
      %733 = vmatpush1.xpose.msra.mxu0 0.0
      %734 = vmatprep.subr.mxu0 0.0
      %735 = vmatpush1.xpose.msra.mxu0 0.0
      %736 = vmatprep.subr.mxu0 0.0
      %737 = vmatpush1.xpose.msra.mxu0 0.0
      %738 = vmatprep.subr.mxu0 0.0
      %739 = vmatpush1.xpose.msra.mxu0 0.0
      %740 = vmatprep.subr.mxu0 0.0
      %741 = vmatpush1.xpose.msra.mxu0 0.0
      %742 = vmatprep.subr.mxu0 0.0
      %743 = vmatpush1.xpose.msra.mxu0 0.0
      %744 = vmatprep.subr.mxu0 0.0
      %745 = vmatpush1.xpose.msra.mxu0 0.0
      %746 = vmatprep.mubr.f32.mxu0 0.0
      %747 = vmatmul.mubr.f32.gmra.mrb[0].mxu0 %v677
      %v748 = vpop.f32.mrb[0].mxu0
      %v749 = vadd.f32 0.0, %v748
      %v750 = vpop.f32.mrb[0].mxu0
      %751 = vdwg.mxu0
      %v752 = vmul.f32 %v749, 0.17677669
      %v753 = vadd.f32 %v752, %v674
      %vm754 = vcmask 64512
      %v755 = vsel %vm754, %v753, -inf
      %756 = vmax.xlane.f32.xlu0 %v755
      %v757 = vpop.xlane.xlu0 %756
      %v758 = vsub.f32 %v753, %v757
      %v759 = vmul.f32 %v758, 1.442695
      %v760 = vpow.pop %v759
      %v761 = vsel %vm754, %v760, 0.0
      %762 = vadd.xlane.f32.xlu0 %v761
      %v763 = vpop.xlane.xlu0 %762
      %v764 = vrcp.pop %v763
      %v765 = vmul.f32 %v760, %v764
      %v767 = vsel %vm754, %v765, 0
      %769 = vmatprep.subr.mxu0 0.0
      %770 = vmatpush1.msra.mxu0 %v668
      %771 = vmatprep.subr.mxu0 0.0
      %772 = vmatpush1.msra.mxu0 0.0
      %773 = vmatprep.subr.mxu0 0.0
      %774 = vmatpush1.msra.mxu0 0.0
      %775 = vmatprep.subr.mxu0 0.0
      %776 = vmatpush1.msra.mxu0 0.0
      %777 = vmatprep.subr.mxu0 0.0
      %778 = vmatpush1.msra.mxu0 0.0
      %779 = vmatprep.subr.mxu0 0.0
      %780 = vmatpush1.msra.mxu0 0.0
      %781 = vmatprep.subr.mxu0 0.0
      %782 = vmatpush1.msra.mxu0 0.0
      %783 = vmatprep.subr.mxu0 0.0
      %784 = vmatpush1.msra.mxu0 0.0
      %785 = vmatprep.subr.mxu0 0.0
      %786 = vmatpush1.msra.mxu0 0.0
      %787 = vmatprep.subr.mxu0 0.0
      %788 = vmatpush1.msra.mxu0 0.0
      %789 = vmatprep.subr.mxu0 0.0
      %790 = vmatpush1.msra.mxu0 0.0
      %791 = vmatprep.subr.mxu0 0.0
      %792 = vmatpush1.msra.mxu0 0.0
      %793 = vmatprep.subr.mxu0 0.0
      %794 = vmatpush1.msra.mxu0 0.0
      %795 = vmatprep.subr.mxu0 0.0
      %796 = vmatpush1.msra.mxu0 0.0
      %797 = vmatprep.subr.mxu0 0.0
      %798 = vmatpush1.msra.mxu0 0.0
      %799 = vmatprep.subr.mxu0 0.0
      %800 = vmatpush1.msra.mxu0 0.0
      %801 = vmatprep.subr.mxu0 0.0
      %802 = vmatpush1.msra.mxu0 0.0
      %803 = vmatprep.subr.mxu0 0.0
      %804 = vmatpush1.msra.mxu0 0.0
      %805 = vmatprep.subr.mxu0 0.0
      %806 = vmatpush1.msra.mxu0 0.0
      %807 = vmatprep.subr.mxu0 0.0
      %808 = vmatpush1.msra.mxu0 0.0
      %809 = vmatprep.subr.mxu0 0.0
      %810 = vmatpush1.msra.mxu0 0.0
      %811 = vmatprep.subr.mxu0 0.0
      %812 = vmatpush1.msra.mxu0 0.0
      %813 = vmatprep.subr.mxu0 0.0
      %814 = vmatpush1.msra.mxu0 0.0
      %815 = vmatprep.subr.mxu0 0.0
      %816 = vmatpush1.msra.mxu0 0.0
      %817 = vmatprep.subr.mxu0 0.0
      %818 = vmatpush1.msra.mxu0 0.0
      %819 = vmatprep.subr.mxu0 0.0
      %820 = vmatpush1.msra.mxu0 0.0
      %821 = vmatprep.subr.mxu0 0.0
      %822 = vmatpush1.msra.mxu0 0.0
      %823 = vmatprep.subr.mxu0 0.0
      %824 = vmatpush1.msra.mxu0 0.0
      %825 = vmatprep.subr.mxu0 0.0
      %826 = vmatpush1.msra.mxu0 0.0
      %827 = vmatprep.subr.mxu0 0.0
      %828 = vmatpush1.msra.mxu0 0.0
      %829 = vmatprep.subr.mxu0 0.0
      %830 = vmatpush1.msra.mxu0 0.0
      %831 = vmatprep.subr.mxu0 0.0
      %832 = vmatpush1.msra.mxu0 0.0
      %833 = vmatprep.mubr.f32.mxu0 0.0
      %834 = vmatmul.mubr.f32.gmra.mrb[0].mxu0 %v767
      %v835 = vpop.f32.mrb[0].mxu0
      %v836 = vadd.f32 0.0, %v835
      %v837 = vpop.f32.mrb[0].mxu0
      %838 = vdwg.mxu0
      %839 = vrot.lane.b32.xlu0 %v597, 96
      %v840 = vpop.permute.xlu0 %839
      %841 = vrot.lane.b32.xlu0 %v599, 96
      %v842 = vpop.permute.xlu0 %841
      %v843 = vsel %vm675, %v840, 0
      %v845 = vsel %vm675, %v842, 0
      %847 = vmatprep.subr.mxu0 0.0
      %848 = vmatpush1.xpose.msra.mxu0 %v845
      %849 = vmatprep.subr.mxu0 0.0
      %850 = vmatpush1.xpose.msra.mxu0 0.0
      %851 = vmatprep.subr.mxu0 0.0
      %852 = vmatpush1.xpose.msra.mxu0 0.0
      %853 = vmatprep.subr.mxu0 0.0
      %854 = vmatpush1.xpose.msra.mxu0 0.0
      %855 = vmatprep.subr.mxu0 0.0
      %856 = vmatpush1.xpose.msra.mxu0 0.0
      %857 = vmatprep.subr.mxu0 0.0
      %858 = vmatpush1.xpose.msra.mxu0 0.0
      %859 = vmatprep.subr.mxu0 0.0
      %860 = vmatpush1.xpose.msra.mxu0 0.0
      %861 = vmatprep.subr.mxu0 0.0
      %862 = vmatpush1.xpose.msra.mxu0 0.0
      %863 = vmatprep.subr.mxu0 0.0
      %864 = vmatpush1.xpose.msra.mxu0 0.0
      %865 = vmatprep.subr.mxu0 0.0
      %866 = vmatpush1.xpose.msra.mxu0 0.0
      %867 = vmatprep.subr.mxu0 0.0
      %868 = vmatpush1.xpose.msra.mxu0 0.0
      %869 = vmatprep.subr.mxu0 0.0
      %870 = vmatpush1.xpose.msra.mxu0 0.0
      %871 = vmatprep.subr.mxu0 0.0
      %872 = vmatpush1.xpose.msra.mxu0 0.0
      %873 = vmatprep.subr.mxu0 0.0
      %874 = vmatpush1.xpose.msra.mxu0 0.0
      %875 = vmatprep.subr.mxu0 0.0
      %876 = vmatpush1.xpose.msra.mxu0 0.0
      %877 = vmatprep.subr.mxu0 0.0
      %878 = vmatpush1.xpose.msra.mxu0 0.0
      %879 = vmatprep.subr.mxu0 0.0
      %880 = vmatpush1.xpose.msra.mxu0 0.0
      %881 = vmatprep.subr.mxu0 0.0
      %882 = vmatpush1.xpose.msra.mxu0 0.0
      %883 = vmatprep.subr.mxu0 0.0
      %884 = vmatpush1.xpose.msra.mxu0 0.0
      %885 = vmatprep.subr.mxu0 0.0
      %886 = vmatpush1.xpose.msra.mxu0 0.0
      %887 = vmatprep.subr.mxu0 0.0
      %888 = vmatpush1.xpose.msra.mxu0 0.0
      %889 = vmatprep.subr.mxu0 0.0
      %890 = vmatpush1.xpose.msra.mxu0 0.0
      %891 = vmatprep.subr.mxu0 0.0
      %892 = vmatpush1.xpose.msra.mxu0 0.0
      %893 = vmatprep.subr.mxu0 0.0
      %894 = vmatpush1.xpose.msra.mxu0 0.0
      %895 = vmatprep.subr.mxu0 0.0
      %896 = vmatpush1.xpose.msra.mxu0 0.0
      %897 = vmatprep.subr.mxu0 0.0
      %898 = vmatpush1.xpose.msra.mxu0 0.0
      %899 = vmatprep.subr.mxu0 0.0
      %900 = vmatpush1.xpose.msra.mxu0 0.0
      %901 = vmatprep.subr.mxu0 0.0
      %902 = vmatpush1.xpose.msra.mxu0 0.0
      %903 = vmatprep.subr.mxu0 0.0
      %904 = vmatpush1.xpose.msra.mxu0 0.0
      %905 = vmatprep.subr.mxu0 0.0
      %906 = vmatpush1.xpose.msra.mxu0 0.0
      %907 = vmatprep.subr.mxu0 0.0
      %908 = vmatpush1.xpose.msra.mxu0 0.0
      %909 = vmatprep.subr.mxu0 0.0
      %910 = vmatpush1.xpose.msra.mxu0 0.0
      %911 = vmatprep.mubr.f32.mxu0 0.0
      %912 = vmatmul.mubr.f32.gmra.mrb[0].mxu0 %v843
      %v913 = vpop.f32.mrb[0].mxu0
      %v914 = vadd.f32 0.0, %v913
      %v915 = vpop.f32.mrb[0].mxu0
      %916 = vdwg.mxu0
      %v917 = vmul.f32 %v914, 0.17677669
      %v918 = vadd.f32 %v917, %v674
      %v919 = vsel %vm754, %v918, -inf
      %920 = vmax.xlane.f32.xlu0 %v919
      %v921 = vpop.xlane.xlu0 %920
      %v922 = vsub.f32 %v918, %v921
      %v923 = vmul.f32 %v922, 1.442695
      %v924 = vpow.pop %v923
      %v925 = vsel %vm754, %v924, 0.0
      %926 = vadd.xlane.f32.xlu0 %v925
      %v927 = vpop.xlane.xlu0 %926
      %v928 = vrcp.pop %v927
      %v929 = vmul.f32 %v924, %v928
      %931 = vrot.lane.b32.xlu0 %v668, 96
      %v932 = vpop.permute.xlu0 %931
      %v935 = vsel %vm754, %v929, 0
      %937 = vmatprep.subr.mxu0 0.0
      %938 = vmatpush1.msra.mxu0 %v932
      %939 = vmatprep.subr.mxu0 0.0
      %940 = vmatpush1.msra.mxu0 0.0
      %941 = vmatprep.subr.mxu0 0.0
      %942 = vmatpush1.msra.mxu0 0.0
      %943 = vmatprep.subr.mxu0 0.0
      %944 = vmatpush1.msra.mxu0 0.0
      %945 = vmatprep.subr.mxu0 0.0
      %946 = vmatpush1.msra.mxu0 0.0
      %947 = vmatprep.subr.mxu0 0.0
      %948 = vmatpush1.msra.mxu0 0.0
      %949 = vmatprep.subr.mxu0 0.0
      %950 = vmatpush1.msra.mxu0 0.0
      %951 = vmatprep.subr.mxu0 0.0
      %952 = vmatpush1.msra.mxu0 0.0
      %953 = vmatprep.subr.mxu0 0.0
      %954 = vmatpush1.msra.mxu0 0.0
      %955 = vmatprep.subr.mxu0 0.0
      %956 = vmatpush1.msra.mxu0 0.0
      %957 = vmatprep.subr.mxu0 0.0
      %958 = vmatpush1.msra.mxu0 0.0
      %959 = vmatprep.subr.mxu0 0.0
      %960 = vmatpush1.msra.mxu0 0.0
      %961 = vmatprep.subr.mxu0 0.0
      %962 = vmatpush1.msra.mxu0 0.0
      %963 = vmatprep.subr.mxu0 0.0
      %964 = vmatpush1.msra.mxu0 0.0
      %965 = vmatprep.subr.mxu0 0.0
      %966 = vmatpush1.msra.mxu0 0.0
      %967 = vmatprep.subr.mxu0 0.0
      %968 = vmatpush1.msra.mxu0 0.0
      %969 = vmatprep.subr.mxu0 0.0
      %970 = vmatpush1.msra.mxu0 0.0
      %971 = vmatprep.subr.mxu0 0.0
      %972 = vmatpush1.msra.mxu0 0.0
      %973 = vmatprep.subr.mxu0 0.0
      %974 = vmatpush1.msra.mxu0 0.0
      %975 = vmatprep.subr.mxu0 0.0
      %976 = vmatpush1.msra.mxu0 0.0
      %977 = vmatprep.subr.mxu0 0.0
      %978 = vmatpush1.msra.mxu0 0.0
      %979 = vmatprep.subr.mxu0 0.0
      %980 = vmatpush1.msra.mxu0 0.0
      %981 = vmatprep.subr.mxu0 0.0
      %982 = vmatpush1.msra.mxu0 0.0
      %983 = vmatprep.subr.mxu0 0.0
      %984 = vmatpush1.msra.mxu0 0.0
      %985 = vmatprep.subr.mxu0 0.0
      %986 = vmatpush1.msra.mxu0 0.0
      %987 = vmatprep.subr.mxu0 0.0
      %988 = vmatpush1.msra.mxu0 0.0
      %989 = vmatprep.subr.mxu0 0.0
      %990 = vmatpush1.msra.mxu0 0.0
      %991 = vmatprep.subr.mxu0 0.0
      %992 = vmatpush1.msra.mxu0 0.0
      %993 = vmatprep.subr.mxu0 0.0
      %994 = vmatpush1.msra.mxu0 0.0
      %995 = vmatprep.subr.mxu0 0.0
      %996 = vmatpush1.msra.mxu0 0.0
      %997 = vmatprep.subr.mxu0 0.0
      %998 = vmatpush1.msra.mxu0 0.0
      %999 = vmatprep.subr.mxu0 0.0
      %1000 = vmatpush1.msra.mxu0 0.0
      %1001 = vmatprep.mubr.f32.mxu0 0.0
      %1002 = vmatmul.mubr.f32.gmra.mrb[0].mxu0 %v935
      %v1003 = vpop.f32.mrb[0].mxu0
      %v1004 = vadd.f32 0.0, %v1003
      %v1005 = vpop.f32.mrb[0].mxu0
      %1006 = vdwg.mxu0
      %1007 = vrot.lane.b32.xlu0 %v597, 64
      %v1008 = vpop.permute.xlu0 %1007
      %1009 = vrot.lane.b32.xlu0 %v599, 64
      %v1010 = vpop.permute.xlu0 %1009
      %v1011 = vsel %vm675, %v1008, 0
      %v1013 = vsel %vm675, %v1010, 0
      %1015 = vmatprep.subr.mxu0 0.0
      %1016 = vmatpush1.xpose.msra.mxu0 %v1013
      %1017 = vmatprep.subr.mxu0 0.0
      %1018 = vmatpush1.xpose.msra.mxu0 0.0
      %1019 = vmatprep.subr.mxu0 0.0
      %1020 = vmatpush1.xpose.msra.mxu0 0.0
      %1021 = vmatprep.subr.mxu0 0.0
      %1022 = vmatpush1.xpose.msra.mxu0 0.0
      %1023 = vmatprep.subr.mxu0 0.0
      %1024 = vmatpush1.xpose.msra.mxu0 0.0
      %1025 = vmatprep.subr.mxu0 0.0
      %1026 = vmatpush1.xpose.msra.mxu0 0.0
      %1027 = vmatprep.subr.mxu0 0.0
      %1028 = vmatpush1.xpose.msra.mxu0 0.0
      %1029 = vmatprep.subr.mxu0 0.0
      %1030 = vmatpush1.xpose.msra.mxu0 0.0
      %1031 = vmatprep.subr.mxu0 0.0
      %1032 = vmatpush1.xpose.msra.mxu0 0.0
      %1033 = vmatprep.subr.mxu0 0.0
      %1034 = vmatpush1.xpose.msra.mxu0 0.0
      %1035 = vmatprep.subr.mxu0 0.0
      %1036 = vmatpush1.xpose.msra.mxu0 0.0
      %1037 = vmatprep.subr.mxu0 0.0
      %1038 = vmatpush1.xpose.msra.mxu0 0.0
      %1039 = vmatprep.subr.mxu0 0.0
      %1040 = vmatpush1.xpose.msra.mxu0 0.0
      %1041 = vmatprep.subr.mxu0 0.0
      %1042 = vmatpush1.xpose.msra.mxu0 0.0
      %1043 = vmatprep.subr.mxu0 0.0
      %1044 = vmatpush1.xpose.msra.mxu0 0.0
      %1045 = vmatprep.subr.mxu0 0.0
      %1046 = vmatpush1.xpose.msra.mxu0 0.0
      %1047 = vmatprep.subr.mxu0 0.0
      %1048 = vmatpush1.xpose.msra.mxu0 0.0
      %1049 = vmatprep.subr.mxu0 0.0
      %1050 = vmatpush1.xpose.msra.mxu0 0.0
      %1051 = vmatprep.subr.mxu0 0.0
      %1052 = vmatpush1.xpose.msra.mxu0 0.0
      %1053 = vmatprep.subr.mxu0 0.0
      %1054 = vmatpush1.xpose.msra.mxu0 0.0
      %1055 = vmatprep.subr.mxu0 0.0
      %1056 = vmatpush1.xpose.msra.mxu0 0.0
      %1057 = vmatprep.subr.mxu0 0.0
      %1058 = vmatpush1.xpose.msra.mxu0 0.0
      %1059 = vmatprep.subr.mxu0 0.0
      %1060 = vmatpush1.xpose.msra.mxu0 0.0
      %1061 = vmatprep.subr.mxu0 0.0
      %1062 = vmatpush1.xpose.msra.mxu0 0.0
      %1063 = vmatprep.subr.mxu0 0.0
      %1064 = vmatpush1.xpose.msra.mxu0 0.0
      %1065 = vmatprep.subr.mxu0 0.0
      %1066 = vmatpush1.xpose.msra.mxu0 0.0
      %1067 = vmatprep.subr.mxu0 0.0
      %1068 = vmatpush1.xpose.msra.mxu0 0.0
      %1069 = vmatprep.subr.mxu0 0.0
      %1070 = vmatpush1.xpose.msra.mxu0 0.0
      %1071 = vmatprep.subr.mxu0 0.0
      %1072 = vmatpush1.xpose.msra.mxu0 0.0
      %1073 = vmatprep.subr.mxu0 0.0
      %1074 = vmatpush1.xpose.msra.mxu0 0.0
      %1075 = vmatprep.subr.mxu0 0.0
      %1076 = vmatpush1.xpose.msra.mxu0 0.0
      %1077 = vmatprep.subr.mxu0 0.0
      %1078 = vmatpush1.xpose.msra.mxu0 0.0
      %1079 = vmatprep.mubr.f32.mxu0 0.0
      %1080 = vmatmul.mubr.f32.gmra.mrb[0].mxu0 %v1011
      %v1081 = vpop.f32.mrb[0].mxu0
      %v1082 = vadd.f32 0.0, %v1081
      %v1083 = vpop.f32.mrb[0].mxu0
      %1084 = vdwg.mxu0
      %v1085 = vmul.f32 %v1082, 0.17677669
      %v1086 = vadd.f32 %v1085, %v674
      %v1087 = vsel %vm754, %v1086, -inf
      %1088 = vmax.xlane.f32.xlu0 %v1087
      %v1089 = vpop.xlane.xlu0 %1088
      %v1090 = vsub.f32 %v1086, %v1089
      %v1091 = vmul.f32 %v1090, 1.442695
      %v1092 = vpow.pop %v1091
      %v1093 = vsel %vm754, %v1092, 0.0
      %1094 = vadd.xlane.f32.xlu0 %v1093
      %v1095 = vpop.xlane.xlu0 %1094
      %v1096 = vrcp.pop %v1095
      %v1097 = vmul.f32 %v1092, %v1096
      %1098 = vrot.lane.b32.xlu0 %v668, 64
      %v1099 = vpop.permute.xlu0 %1098
      %v1102 = vsel %vm754, %v1097, 0
      %1104 = vmatprep.subr.mxu0 0.0
      %1105 = vmatpush1.msra.mxu0 %v1099
      %1106 = vmatprep.subr.mxu0 0.0
      %1107 = vmatpush1.msra.mxu0 0.0
      %1108 = vmatprep.subr.mxu0 0.0
      %1109 = vmatpush1.msra.mxu0 0.0
      %1110 = vmatprep.subr.mxu0 0.0
      %1111 = vmatpush1.msra.mxu0 0.0
      %1112 = vmatprep.subr.mxu0 0.0
      %1113 = vmatpush1.msra.mxu0 0.0
      %1114 = vmatprep.subr.mxu0 0.0
      %1115 = vmatpush1.msra.mxu0 0.0
      %1116 = vmatprep.subr.mxu0 0.0
      %1117 = vmatpush1.msra.mxu0 0.0
      %1118 = vmatprep.subr.mxu0 0.0
      %1119 = vmatpush1.msra.mxu0 0.0
      %1120 = vmatprep.subr.mxu0 0.0
      %1121 = vmatpush1.msra.mxu0 0.0
      %1122 = vmatprep.subr.mxu0 0.0
      %1123 = vmatpush1.msra.mxu0 0.0
      %1124 = vmatprep.subr.mxu0 0.0
      %1125 = vmatpush1.msra.mxu0 0.0
      %1126 = vmatprep.subr.mxu0 0.0
      %1127 = vmatpush1.msra.mxu0 0.0
      %1128 = vmatprep.subr.mxu0 0.0
      %1129 = vmatpush1.msra.mxu0 0.0
      %1130 = vmatprep.subr.mxu0 0.0
      %1131 = vmatpush1.msra.mxu0 0.0
      %1132 = vmatprep.subr.mxu0 0.0
      %1133 = vmatpush1.msra.mxu0 0.0
      %1134 = vmatprep.subr.mxu0 0.0
      %1135 = vmatpush1.msra.mxu0 0.0
      %1136 = vmatprep.subr.mxu0 0.0
      %1137 = vmatpush1.msra.mxu0 0.0
      %1138 = vmatprep.subr.mxu0 0.0
      %1139 = vmatpush1.msra.mxu0 0.0
      %1140 = vmatprep.subr.mxu0 0.0
      %1141 = vmatpush1.msra.mxu0 0.0
      %1142 = vmatprep.subr.mxu0 0.0
      %1143 = vmatpush1.msra.mxu0 0.0
      %1144 = vmatprep.subr.mxu0 0.0
      %1145 = vmatpush1.msra.mxu0 0.0
      %1146 = vmatprep.subr.mxu0 0.0
      %1147 = vmatpush1.msra.mxu0 0.0
      %1148 = vmatprep.subr.mxu0 0.0
      %1149 = vmatpush1.msra.mxu0 0.0
      %1150 = vmatprep.subr.mxu0 0.0
      %1151 = vmatpush1.msra.mxu0 0.0
      %1152 = vmatprep.subr.mxu0 0.0
      %1153 = vmatpush1.msra.mxu0 0.0
      %1154 = vmatprep.subr.mxu0 0.0
      %1155 = vmatpush1.msra.mxu0 0.0
      %1156 = vmatprep.subr.mxu0 0.0
      %1157 = vmatpush1.msra.mxu0 0.0
      %1158 = vmatprep.subr.mxu0 0.0
      %1159 = vmatpush1.msra.mxu0 0.0
      %1160 = vmatprep.subr.mxu0 0.0
      %1161 = vmatpush1.msra.mxu0 0.0
      %1162 = vmatprep.subr.mxu0 0.0
      %1163 = vmatpush1.msra.mxu0 0.0
      %1164 = vmatprep.subr.mxu0 0.0
      %1165 = vmatpush1.msra.mxu0 0.0
      %1166 = vmatprep.subr.mxu0 0.0
      %1167 = vmatpush1.msra.mxu0 0.0
      %1168 = vmatprep.mubr.f32.mxu0 0.0
      %1169 = vmatmul.mubr.f32.gmra.mrb[0].mxu0 %v1102
      %v1170 = vpop.f32.mrb[0].mxu0
      %v1171 = vadd.f32 0.0, %v1170
      %v1172 = vpop.f32.mrb[0].mxu0
      %1173 = vdwg.mxu0
      %1174 = vrot.lane.b32.xlu0 %v597, 32
      %v1175 = vpop.permute.xlu0 %1174
      %1176 = vrot.lane.b32.xlu0 %v599, 32
      %v1177 = vpop.permute.xlu0 %1176
      %v1178 = vsel %vm675, %v1175, 0
      %v1180 = vsel %vm675, %v1177, 0
      %1182 = vmatprep.subr.mxu0 0.0
      %1183 = vmatpush1.xpose.msra.mxu0 %v1180
      %1184 = vmatprep.subr.mxu0 0.0
      %1185 = vmatpush1.xpose.msra.mxu0 0.0
      %1186 = vmatprep.subr.mxu0 0.0
      %1187 = vmatpush1.xpose.msra.mxu0 0.0
      %1188 = vmatprep.subr.mxu0 0.0
      %1189 = vmatpush1.xpose.msra.mxu0 0.0
      %1190 = vmatprep.subr.mxu0 0.0
      %1191 = vmatpush1.xpose.msra.mxu0 0.0
      %1192 = vmatprep.subr.mxu0 0.0
      %1193 = vmatpush1.xpose.msra.mxu0 0.0
      %1194 = vmatprep.subr.mxu0 0.0
      %1195 = vmatpush1.xpose.msra.mxu0 0.0
      %1196 = vmatprep.subr.mxu0 0.0
      %1197 = vmatpush1.xpose.msra.mxu0 0.0
      %1198 = vmatprep.subr.mxu0 0.0
      %1199 = vmatpush1.xpose.msra.mxu0 0.0
      %1200 = vmatprep.subr.mxu0 0.0
      %1201 = vmatpush1.xpose.msra.mxu0 0.0
      %1202 = vmatprep.subr.mxu0 0.0
      %1203 = vmatpush1.xpose.msra.mxu0 0.0
      %1204 = vmatprep.subr.mxu0 0.0
      %1205 = vmatpush1.xpose.msra.mxu0 0.0
      %1206 = vmatprep.subr.mxu0 0.0
      %1207 = vmatpush1.xpose.msra.mxu0 0.0
      %1208 = vmatprep.subr.mxu0 0.0
      %1209 = vmatpush1.xpose.msra.mxu0 0.0
      %1210 = vmatprep.subr.mxu0 0.0
      %1211 = vmatpush1.xpose.msra.mxu0 0.0
      %1212 = vmatprep.subr.mxu0 0.0
      %1213 = vmatpush1.xpose.msra.mxu0 0.0
      %1214 = vmatprep.subr.mxu0 0.0
      %1215 = vmatpush1.xpose.msra.mxu0 0.0
      %1216 = vmatprep.subr.mxu0 0.0
      %1217 = vmatpush1.xpose.msra.mxu0 0.0
      %1218 = vmatprep.subr.mxu0 0.0
      %1219 = vmatpush1.xpose.msra.mxu0 0.0
      %1220 = vmatprep.subr.mxu0 0.0
      %1221 = vmatpush1.xpose.msra.mxu0 0.0
      %1222 = vmatprep.subr.mxu0 0.0
      %1223 = vmatpush1.xpose.msra.mxu0 0.0
      %1224 = vmatprep.subr.mxu0 0.0
      %1225 = vmatpush1.xpose.msra.mxu0 0.0
      %1226 = vmatprep.subr.mxu0 0.0
      %1227 = vmatpush1.xpose.msra.mxu0 0.0
      %1228 = vmatprep.subr.mxu0 0.0
      %1229 = vmatpush1.xpose.msra.mxu0 0.0
      %1230 = vmatprep.subr.mxu0 0.0
      %1231 = vmatpush1.xpose.msra.mxu0 0.0
      %1232 = vmatprep.subr.mxu0 0.0
      %1233 = vmatpush1.xpose.msra.mxu0 0.0
      %1234 = vmatprep.subr.mxu0 0.0
      %1235 = vmatpush1.xpose.msra.mxu0 0.0
      %1236 = vmatprep.subr.mxu0 0.0
      %1237 = vmatpush1.xpose.msra.mxu0 0.0
      %1238 = vmatprep.subr.mxu0 0.0
      %1239 = vmatpush1.xpose.msra.mxu0 0.0
      %1240 = vmatprep.subr.mxu0 0.0
      %1241 = vmatpush1.xpose.msra.mxu0 0.0
      %1242 = vmatprep.subr.mxu0 0.0
      %1243 = vmatpush1.xpose.msra.mxu0 0.0
      %1244 = vmatprep.subr.mxu0 0.0
      %1245 = vmatpush1.xpose.msra.mxu0 0.0
      %1246 = vmatprep.mubr.f32.mxu0 0.0
      %1247 = vmatmul.mubr.f32.gmra.mrb[0].mxu0 %v1178
      %v1248 = vpop.f32.mrb[0].mxu0
      %v1249 = vadd.f32 0.0, %v1248
      %v1250 = vpop.f32.mrb[0].mxu0
      %1251 = vdwg.mxu0
      %v1252 = vmul.f32 %v1249, 0.17677669
      %v1253 = vadd.f32 %v1252, %v674
      %v1254 = vsel %vm754, %v1253, -inf
      %1255 = vmax.xlane.f32.xlu0 %v1254
      %v1256 = vpop.xlane.xlu0 %1255
      %v1257 = vsub.f32 %v1253, %v1256
      %v1258 = vmul.f32 %v1257, 1.442695
      %v1259 = vpow.pop %v1258
      %v1260 = vsel %vm754, %v1259, 0.0
      %1261 = vadd.xlane.f32.xlu0 %v1260
      %v1262 = vpop.xlane.xlu0 %1261
      %v1263 = vrcp.pop %v1262
      %v1264 = vmul.f32 %v1259, %v1263
      %1265 = vrot.lane.b32.xlu0 %v668, 32
      %v1266 = vpop.permute.xlu0 %1265
      %v1269 = vsel %vm754, %v1264, 0
      %1271 = vmatprep.subr.mxu0 0.0
      %1272 = vmatpush1.msra.mxu0 %v1266
      %1273 = vmatprep.subr.mxu0 0.0
      %1274 = vmatpush1.msra.mxu0 0.0
      %1275 = vmatprep.subr.mxu0 0.0
      %1276 = vmatpush1.msra.mxu0 0.0
      %1277 = vmatprep.subr.mxu0 0.0
      %1278 = vmatpush1.msra.mxu0 0.0
      %1279 = vmatprep.subr.mxu0 0.0
      %1280 = vmatpush1.msra.mxu0 0.0
      %1281 = vmatprep.subr.mxu0 0.0
      %1282 = vmatpush1.msra.mxu0 0.0
      %1283 = vmatprep.subr.mxu0 0.0
      %1284 = vmatpush1.msra.mxu0 0.0
      %1285 = vmatprep.subr.mxu0 0.0
      %1286 = vmatpush1.msra.mxu0 0.0
      %1287 = vmatprep.subr.mxu0 0.0
      %1288 = vmatpush1.msra.mxu0 0.0
      %1289 = vmatprep.subr.mxu0 0.0
      %1290 = vmatpush1.msra.mxu0 0.0
      %1291 = vmatprep.subr.mxu0 0.0
      %1292 = vmatpush1.msra.mxu0 0.0
      %1293 = vmatprep.subr.mxu0 0.0
      %1294 = vmatpush1.msra.mxu0 0.0
      %1295 = vmatprep.subr.mxu0 0.0
      %1296 = vmatpush1.msra.mxu0 0.0
      %1297 = vmatprep.subr.mxu0 0.0
      %1298 = vmatpush1.msra.mxu0 0.0
      %1299 = vmatprep.subr.mxu0 0.0
      %1300 = vmatpush1.msra.mxu0 0.0
      %1301 = vmatprep.subr.mxu0 0.0
      %1302 = vmatpush1.msra.mxu0 0.0
      %1303 = vmatprep.subr.mxu0 0.0
      %1304 = vmatpush1.msra.mxu0 0.0
      %1305 = vmatprep.subr.mxu0 0.0
      %1306 = vmatpush1.msra.mxu0 0.0
      %1307 = vmatprep.subr.mxu0 0.0
      %1308 = vmatpush1.msra.mxu0 0.0
      %1309 = vmatprep.subr.mxu0 0.0
      %1310 = vmatpush1.msra.mxu0 0.0
      %1311 = vmatprep.subr.mxu0 0.0
      %1312 = vmatpush1.msra.mxu0 0.0
      %1313 = vmatprep.subr.mxu0 0.0
      %1314 = vmatpush1.msra.mxu0 0.0
      %1315 = vmatprep.subr.mxu0 0.0
      %1316 = vmatpush1.msra.mxu0 0.0
      %1317 = vmatprep.subr.mxu0 0.0
      %1318 = vmatpush1.msra.mxu0 0.0
      %1319 = vmatprep.subr.mxu0 0.0
      %1320 = vmatpush1.msra.mxu0 0.0
      %1321 = vmatprep.subr.mxu0 0.0
      %1322 = vmatpush1.msra.mxu0 0.0
      %1323 = vmatprep.subr.mxu0 0.0
      %1324 = vmatpush1.msra.mxu0 0.0
      %1325 = vmatprep.subr.mxu0 0.0
      %1326 = vmatpush1.msra.mxu0 0.0
      %1327 = vmatprep.subr.mxu0 0.0
      %1328 = vmatpush1.msra.mxu0 0.0
      %1329 = vmatprep.subr.mxu0 0.0
      %1330 = vmatpush1.msra.mxu0 0.0
      %1331 = vmatprep.subr.mxu0 0.0
      %1332 = vmatpush1.msra.mxu0 0.0
      %1333 = vmatprep.subr.mxu0 0.0
      %1334 = vmatpush1.msra.mxu0 0.0
      %1335 = vmatprep.mubr.f32.mxu0 0.0
      %1336 = vmatmul.mubr.f32.gmra.mrb[0].mxu0 %v1269
      %v1337 = vpop.f32.mrb[0].mxu0
      %v1338 = vadd.f32 0.0, %v1337
      %v1339 = vpop.f32.mrb[0].mxu0
      %1340 = vdwg.mxu0
      %1342 = vrot.lane.b32.xlu0 %v1004, 32
      %v1343 = vpop.permute.xlu0 %1342
      %1346 = vrot.lane.b32.xlu0 %v1171, 64
      %v1347 = vpop.permute.xlu0 %1346
      %1350 = vrot.lane.b32.xlu0 %v1338, 96
      %v1351 = vpop.permute.xlu0 %1350
      %v1353 = vsel %vm675, %v836, %v1343
      %vm1354 = vcmask 523264
      %v1355 = vsel %vm1354, %v1353, %v1347
      %vm1356 = vcmask 785408
      %v1357 = vsel %vm1356, %v1355, %v1351
      %v1358 = vld [vmem:[%s5] sm:$0xff]
      %v1359 = vld [vmem:[%s5 + $0x8] sm:$0xff]
      %v1360 = vld [vmem:[%s5 + $0x10] sm:$0xff]
      %v1361 = vld [vmem:[%s5 + $0x18] sm:$0xff]
      %v1362 = vld [vmem:[%s5 + $0x20] sm:$0xff]
      %v1363 = vld [vmem:[%s5 + $0x28] sm:$0xff]
      %v1364 = vld [vmem:[%s5 + $0x30] sm:$0xff]
      %v1365 = vld [vmem:[%s5 + $0x38] sm:$0xff]
      %v1366 = vld [vmem:[%s5 + $0x40] sm:$0xff]
      %v1367 = vld [vmem:[%s5 + $0x48] sm:$0xff]
      %v1368 = vld [vmem:[%s5 + $0x50] sm:$0xff]
      %v1369 = vld [vmem:[%s5 + $0x58] sm:$0xff]
      %v1370 = vld [vmem:[%s5 + $0x60] sm:$0xff]
      %v1371 = vld [vmem:[%s5 + $0x68] sm:$0xff]
      %v1372 = vld [vmem:[%s5 + $0x70] sm:$0xff]
      %v1373 = vld [vmem:[%s5 + $0x78] sm:$0xff]
      %1374 = vmatprep.subr.mxu0 0.0
      %1375 = vmatpush1.msra.mxu0 %v1358
      %1376 = vmatprep.subr.mxu0 0.0
      %1377 = vmatpush1.msra.mxu0 %v1359
      %1378 = vmatprep.subr.mxu0 0.0
      %1379 = vmatpush1.msra.mxu0 %v1360
      %1380 = vmatprep.subr.mxu0 0.0
      %1381 = vmatpush1.msra.mxu0 %v1361
      %1382 = vmatprep.subr.mxu0 0.0
      %1383 = vmatpush1.msra.mxu0 %v1362
      %1384 = vmatprep.subr.mxu0 0.0
      %1385 = vmatpush1.msra.mxu0 %v1363
      %1386 = vmatprep.subr.mxu0 0.0
      %1387 = vmatpush1.msra.mxu0 %v1364
      %1388 = vmatprep.subr.mxu0 0.0
      %1389 = vmatpush1.msra.mxu0 %v1365
      %1390 = vmatprep.subr.mxu0 0.0
      %1391 = vmatpush1.msra.mxu0 %v1366
      %1392 = vmatprep.subr.mxu0 0.0
      %1393 = vmatpush1.msra.mxu0 %v1367
      %1394 = vmatprep.subr.mxu0 0.0
      %1395 = vmatpush1.msra.mxu0 %v1368
      %1396 = vmatprep.subr.mxu0 0.0
      %1397 = vmatpush1.msra.mxu0 %v1369
      %1398 = vmatprep.subr.mxu0 0.0
      %1399 = vmatpush1.msra.mxu0 %v1370
      %1400 = vmatprep.subr.mxu0 0.0
      %1401 = vmatpush1.msra.mxu0 %v1371
      %1402 = vmatprep.subr.mxu0 0.0
      %1403 = vmatpush1.msra.mxu0 %v1372
      %1404 = vmatprep.subr.mxu0 0.0
      %1405 = vmatpush1.msra.mxu0 %v1373
      %1406 = vmatprep.subr.mxu0 0.0
      %1407 = vmatpush1.msra.mxu0 0.0
      %1408 = vmatprep.subr.mxu0 0.0
      %1409 = vmatpush1.msra.mxu0 0.0
      %1410 = vmatprep.subr.mxu0 0.0
      %1411 = vmatpush1.msra.mxu0 0.0
      %1412 = vmatprep.subr.mxu0 0.0
      %1413 = vmatpush1.msra.mxu0 0.0
      %1414 = vmatprep.subr.mxu0 0.0
      %1415 = vmatpush1.msra.mxu0 0.0
      %1416 = vmatprep.subr.mxu0 0.0
      %1417 = vmatpush1.msra.mxu0 0.0
      %1418 = vmatprep.subr.mxu0 0.0
      %1419 = vmatpush1.msra.mxu0 0.0
      %1420 = vmatprep.subr.mxu0 0.0
      %1421 = vmatpush1.msra.mxu0 0.0
      %1422 = vmatprep.subr.mxu0 0.0
      %1423 = vmatpush1.msra.mxu0 0.0
      %1424 = vmatprep.subr.mxu0 0.0
      %1425 = vmatpush1.msra.mxu0 0.0
      %1426 = vmatprep.subr.mxu0 0.0
      %1427 = vmatpush1.msra.mxu0 0.0
      %1428 = vmatprep.subr.mxu0 0.0
      %1429 = vmatpush1.msra.mxu0 0.0
      %1430 = vmatprep.subr.mxu0 0.0
      %1431 = vmatpush1.msra.mxu0 0.0
      %1432 = vmatprep.subr.mxu0 0.0
      %1433 = vmatpush1.msra.mxu0 0.0
      %1434 = vmatprep.subr.mxu0 0.0
      %1435 = vmatpush1.msra.mxu0 0.0
      %1436 = vmatprep.subr.mxu0 0.0
      %1437 = vmatpush1.msra.mxu0 0.0
      %1438 = vmatprep.mubr.f32.mxu0 0.0
      %1439 = vmatmul.mubr.f32.gmra.mrb[0].mxu0 %v1357
      %v1440 = vpop.f32.mrb[0].mxu0
      %v1441 = vadd.f32 0.0, %v1440
      %v1442 = vpop.f32.mrb[0].mxu0
      %1443 = vdwg.mxu0
      %v1444 = vadd.f32 %v436, %v1441
      %v1445 = vld [vmem:[%s6] sm:$0x1]
      %v1447 = vlaneseq
      %v1448 = vshrl.u32 %v1447, 7
      %v1449 = vsub.s32 0, %v1448
      %v1450 = vrot.slane %v1445, %v1449
      %v1452 = vadd.f32 %v1444, %v1450
      %v1453 = vld [vmem:[%s7] sm:$0x1]
      %v1454 = vld [vmem:[%s8] sm:$0x1]
      %1455 = vadd.xlane.f32.xlu0 %v1452
      %v1456 = vpop.xlane.xlu0 %1455
      %v1457 = vmul.f32 %v1456, %v441
      %v1458 = vsub.f32 %v1452, %v1457
      %v1459 = vmul.f32 %v1458, %v1458
      %1460 = vadd.xlane.f32.xlu0 %v1459
      %v1461 = vpop.xlane.xlu0 %1460
      %v1462 = vmul.f32 %v1461, %v441
      %v1463 = vadd.f32 %v1462, 1e-06
      %v1464 = vrsqrt.pop %v1463
      %v1465 = vmul.f32 %v1458, %v1464
      %v1467 = vlaneseq
      %v1468 = vshrl.u32 %v1467, 7
      %v1469 = vsub.s32 0, %v1468
      %v1470 = vrot.slane %v1453, %v1469
      %v1472 = vmul.f32 %v1465, %v1470
      %v1474 = vlaneseq
      %v1475 = vshrl.u32 %v1474, 7
      %v1476 = vsub.s32 0, %v1475
      %v1477 = vrot.slane %v1454, %v1476
      %v1479 = vadd.f32 %v1472, %v1477
      %v1480 = vld [vmem:[%s9] sm:$0xff]
      %v1481 = vld [vmem:[%s9 + $0x8] sm:$0xff]
      %v1482 = vld [vmem:[%s9 + $0x10] sm:$0xff]
      %v1483 = vld [vmem:[%s9 + $0x18] sm:$0xff]
      %v1484 = vld [vmem:[%s9 + $0x20] sm:$0xff]
      %v1485 = vld [vmem:[%s9 + $0x28] sm:$0xff]
      %v1486 = vld [vmem:[%s9 + $0x30] sm:$0xff]
      %v1487 = vld [vmem:[%s9 + $0x38] sm:$0xff]
      %v1488 = vld [vmem:[%s9 + $0x40] sm:$0xff]
      %v1489 = vld [vmem:[%s9 + $0x48] sm:$0xff]
      %v1490 = vld [vmem:[%s9 + $0x50] sm:$0xff]
      %v1491 = vld [vmem:[%s9 + $0x58] sm:$0xff]
      %v1492 = vld [vmem:[%s9 + $0x60] sm:$0xff]
      %v1493 = vld [vmem:[%s9 + $0x68] sm:$0xff]
      %v1494 = vld [vmem:[%s9 + $0x70] sm:$0xff]
      %v1495 = vld [vmem:[%s9 + $0x78] sm:$0xff]
      %v1496 = vld [vmem:[%s9 + $0x80] sm:$0xff]
      %v1497 = vld [vmem:[%s9 + $0x88] sm:$0xff]
      %v1498 = vld [vmem:[%s9 + $0x90] sm:$0xff]
      %v1499 = vld [vmem:[%s9 + $0x98] sm:$0xff]
      %v1500 = vld [vmem:[%s9 + $0xa0] sm:$0xff]
      %v1501 = vld [vmem:[%s9 + $0xa8] sm:$0xff]
      %v1502 = vld [vmem:[%s9 + $0xb0] sm:$0xff]
      %v1503 = vld [vmem:[%s9 + $0xb8] sm:$0xff]
      %v1504 = vld [vmem:[%s9 + $0xc0] sm:$0xff]
      %v1505 = vld [vmem:[%s9 + $0xc8] sm:$0xff]
      %v1506 = vld [vmem:[%s9 + $0xd0] sm:$0xff]
      %v1507 = vld [vmem:[%s9 + $0xd8] sm:$0xff]
      %v1508 = vld [vmem:[%s9 + $0xe0] sm:$0xff]
      %v1509 = vld [vmem:[%s9 + $0xe8] sm:$0xff]
      %v1510 = vld [vmem:[%s9 + $0xf0] sm:$0xff]
      %v1511 = vld [vmem:[%s9 + $0xf8] sm:$0xff]
      %v1512 = vld [vmem:[%s9 + $0x100] sm:$0xff]
      %v1513 = vld [vmem:[%s9 + $0x108] sm:$0xff]
      %v1514 = vld [vmem:[%s9 + $0x110] sm:$0xff]
      %v1515 = vld [vmem:[%s9 + $0x118] sm:$0xff]
      %v1516 = vld [vmem:[%s9 + $0x120] sm:$0xff]
      %v1517 = vld [vmem:[%s9 + $0x128] sm:$0xff]
      %v1518 = vld [vmem:[%s9 + $0x130] sm:$0xff]
      %v1519 = vld [vmem:[%s9 + $0x138] sm:$0xff]
      %v1520 = vld [vmem:[%s9 + $0x140] sm:$0xff]
      %v1521 = vld [vmem:[%s9 + $0x148] sm:$0xff]
      %v1522 = vld [vmem:[%s9 + $0x150] sm:$0xff]
      %v1523 = vld [vmem:[%s9 + $0x158] sm:$0xff]
      %v1524 = vld [vmem:[%s9 + $0x160] sm:$0xff]
      %v1525 = vld [vmem:[%s9 + $0x168] sm:$0xff]
      %v1526 = vld [vmem:[%s9 + $0x170] sm:$0xff]
      %v1527 = vld [vmem:[%s9 + $0x178] sm:$0xff]
      %v1528 = vld [vmem:[%s9 + $0x180] sm:$0xff]
      %v1529 = vld [vmem:[%s9 + $0x188] sm:$0xff]
      %v1530 = vld [vmem:[%s9 + $0x190] sm:$0xff]
      %v1531 = vld [vmem:[%s9 + $0x198] sm:$0xff]
      %v1532 = vld [vmem:[%s9 + $0x1a0] sm:$0xff]
      %v1533 = vld [vmem:[%s9 + $0x1a8] sm:$0xff]
      %v1534 = vld [vmem:[%s9 + $0x1b0] sm:$0xff]
      %v1535 = vld [vmem:[%s9 + $0x1b8] sm:$0xff]
      %v1536 = vld [vmem:[%s9 + $0x1c0] sm:$0xff]
      %v1537 = vld [vmem:[%s9 + $0x1c8] sm:$0xff]
      %v1538 = vld [vmem:[%s9 + $0x1d0] sm:$0xff]
      %v1539 = vld [vmem:[%s9 + $0x1d8] sm:$0xff]
      %v1540 = vld [vmem:[%s9 + $0x1e0] sm:$0xff]
      %v1541 = vld [vmem:[%s9 + $0x1e8] sm:$0xff]
      %v1542 = vld [vmem:[%s9 + $0x1f0] sm:$0xff]
      %v1543 = vld [vmem:[%s9 + $0x1f8] sm:$0xff]
      %v1544 = vld [vmem:[%s10] sm:$0xf]
      %v1546 = vlaneseq
      %v1547 = vshrl.u32 %v1546, 7
      %v1548 = vsub.s32 0, %v1547
      %v1549 = vrot.slane %v1544, %v1548
      %v1550 = vlaneseq
      %v1551 = vshrl.u32 %v1550, 7
      %v1552 = vsub.s32 1, %v1551
      %v1553 = vrot.slane %v1544, %v1552
      %v1554 = vlaneseq
      %v1555 = vshrl.u32 %v1554, 7
      %v1556 = vsub.s32 2, %v1555
      %v1557 = vrot.slane %v1544, %v1556
      %v1558 = vlaneseq
      %v1559 = vshrl.u32 %v1558, 7
      %v1560 = vsub.s32 3, %v1559
      %v1561 = vrot.slane %v1544, %v1560
      %1566 = vmatprep.subr.mxu0 %v1481
      %1567 = vmatpush1.msra.mxu0 %v1480
      %1568 = vmatprep.subr.mxu0 %v1485
      %1569 = vmatpush1.msra.mxu0 %v1484
      %1570 = vmatprep.subr.mxu0 %v1489
      %1571 = vmatpush1.msra.mxu0 %v1488
      %1572 = vmatprep.subr.mxu0 %v1493
      %1573 = vmatpush1.msra.mxu0 %v1492
      %1574 = vmatprep.subr.mxu0 %v1497
      %1575 = vmatpush1.msra.mxu0 %v1496
      %1576 = vmatprep.subr.mxu0 %v1501
      %1577 = vmatpush1.msra.mxu0 %v1500
      %1578 = vmatprep.subr.mxu0 %v1505
      %1579 = vmatpush1.msra.mxu0 %v1504
      %1580 = vmatprep.subr.mxu0 %v1509
      %1581 = vmatpush1.msra.mxu0 %v1508
      %1582 = vmatprep.subr.mxu0 %v1513
      %1583 = vmatpush1.msra.mxu0 %v1512
      %1584 = vmatprep.subr.mxu0 %v1517
      %1585 = vmatpush1.msra.mxu0 %v1516
      %1586 = vmatprep.subr.mxu0 %v1521
      %1587 = vmatpush1.msra.mxu0 %v1520
      %1588 = vmatprep.subr.mxu0 %v1525
      %1589 = vmatpush1.msra.mxu0 %v1524
      %1590 = vmatprep.subr.mxu0 %v1529
      %1591 = vmatpush1.msra.mxu0 %v1528
      %1592 = vmatprep.subr.mxu0 %v1533
      %1593 = vmatpush1.msra.mxu0 %v1532
      %1594 = vmatprep.subr.mxu0 %v1537
      %1595 = vmatpush1.msra.mxu0 %v1536
      %1596 = vmatprep.subr.mxu0 %v1541
      %1597 = vmatpush1.msra.mxu0 %v1540
      %1598 = vmatprep.subr.mxu0 0.0
      %1599 = vmatpush1.msra.mxu0 0.0
      %1600 = vmatprep.subr.mxu0 0.0
      %1601 = vmatpush1.msra.mxu0 0.0
      %1602 = vmatprep.subr.mxu0 0.0
      %1603 = vmatpush1.msra.mxu0 0.0
      %1604 = vmatprep.subr.mxu0 0.0
      %1605 = vmatpush1.msra.mxu0 0.0
      %1606 = vmatprep.subr.mxu0 0.0
      %1607 = vmatpush1.msra.mxu0 0.0
      %1608 = vmatprep.subr.mxu0 0.0
      %1609 = vmatpush1.msra.mxu0 0.0
      %1610 = vmatprep.subr.mxu0 0.0
      %1611 = vmatpush1.msra.mxu0 0.0
      %1612 = vmatprep.subr.mxu0 0.0
      %1613 = vmatpush1.msra.mxu0 0.0
      %1614 = vmatprep.subr.mxu0 0.0
      %1615 = vmatpush1.msra.mxu0 0.0
      %1616 = vmatprep.subr.mxu0 0.0
      %1617 = vmatpush1.msra.mxu0 0.0
      %1618 = vmatprep.subr.mxu0 0.0
      %1619 = vmatpush1.msra.mxu0 0.0
      %1620 = vmatprep.subr.mxu0 0.0
      %1621 = vmatpush1.msra.mxu0 0.0
      %1622 = vmatprep.subr.mxu0 0.0
      %1623 = vmatpush1.msra.mxu0 0.0
      %1624 = vmatprep.subr.mxu0 0.0
      %1625 = vmatpush1.msra.mxu0 0.0
      %1626 = vmatprep.subr.mxu0 0.0
      %1627 = vmatpush1.msra.mxu0 0.0
      %1628 = vmatprep.subr.mxu0 0.0
      %1629 = vmatpush1.msra.mxu0 0.0
      %1630 = vmatprep.mubr.f32.mxu0 0.0
      %1631 = vmatmul.mubr.f32.gmra.mrb[0].mxu0 %v1479
      %v1632 = vpop.f32.mrb[0].mxu0
      %v1633 = vadd.f32 %v1549, %v1632
      %v1634 = vpop.f32.mrb[0].mxu0
      %v1635 = vadd.f32 %v1553, %v1634
      %1636 = vdwg.mxu0
      %1637 = vmatprep.subr.mxu0 %v1483
      %1638 = vmatpush1.msra.mxu0 %v1482
      %1639 = vmatprep.subr.mxu0 %v1487
      %1640 = vmatpush1.msra.mxu0 %v1486
      %1641 = vmatprep.subr.mxu0 %v1491
      %1642 = vmatpush1.msra.mxu0 %v1490
      %1643 = vmatprep.subr.mxu0 %v1495
      %1644 = vmatpush1.msra.mxu0 %v1494
      %1645 = vmatprep.subr.mxu0 %v1499
      %1646 = vmatpush1.msra.mxu0 %v1498
      %1647 = vmatprep.subr.mxu0 %v1503
      %1648 = vmatpush1.msra.mxu0 %v1502
      %1649 = vmatprep.subr.mxu0 %v1507
      %1650 = vmatpush1.msra.mxu0 %v1506
      %1651 = vmatprep.subr.mxu0 %v1511
      %1652 = vmatpush1.msra.mxu0 %v1510
      %1653 = vmatprep.subr.mxu0 %v1515
      %1654 = vmatpush1.msra.mxu0 %v1514
      %1655 = vmatprep.subr.mxu0 %v1519
      %1656 = vmatpush1.msra.mxu0 %v1518
      %1657 = vmatprep.subr.mxu0 %v1523
      %1658 = vmatpush1.msra.mxu0 %v1522
      %1659 = vmatprep.subr.mxu0 %v1527
      %1660 = vmatpush1.msra.mxu0 %v1526
      %1661 = vmatprep.subr.mxu0 %v1531
      %1662 = vmatpush1.msra.mxu0 %v1530
      %1663 = vmatprep.subr.mxu0 %v1535
      %1664 = vmatpush1.msra.mxu0 %v1534
      %1665 = vmatprep.subr.mxu0 %v1539
      %1666 = vmatpush1.msra.mxu0 %v1538
      %1667 = vmatprep.subr.mxu0 %v1543
      %1668 = vmatpush1.msra.mxu0 %v1542
      %1669 = vmatprep.subr.mxu0 0.0
      %1670 = vmatpush1.msra.mxu0 0.0
      %1671 = vmatprep.subr.mxu0 0.0
      %1672 = vmatpush1.msra.mxu0 0.0
      %1673 = vmatprep.subr.mxu0 0.0
      %1674 = vmatpush1.msra.mxu0 0.0
      %1675 = vmatprep.subr.mxu0 0.0
      %1676 = vmatpush1.msra.mxu0 0.0
      %1677 = vmatprep.subr.mxu0 0.0
      %1678 = vmatpush1.msra.mxu0 0.0
      %1679 = vmatprep.subr.mxu0 0.0
      %1680 = vmatpush1.msra.mxu0 0.0
      %1681 = vmatprep.subr.mxu0 0.0
      %1682 = vmatpush1.msra.mxu0 0.0
      %1683 = vmatprep.subr.mxu0 0.0
      %1684 = vmatpush1.msra.mxu0 0.0
      %1685 = vmatprep.subr.mxu0 0.0
      %1686 = vmatpush1.msra.mxu0 0.0
      %1687 = vmatprep.subr.mxu0 0.0
      %1688 = vmatpush1.msra.mxu0 0.0
      %1689 = vmatprep.subr.mxu0 0.0
      %1690 = vmatpush1.msra.mxu0 0.0
      %1691 = vmatprep.subr.mxu0 0.0
      %1692 = vmatpush1.msra.mxu0 0.0
      %1693 = vmatprep.subr.mxu0 0.0
      %1694 = vmatpush1.msra.mxu0 0.0
      %1695 = vmatprep.subr.mxu0 0.0
      %1696 = vmatpush1.msra.mxu0 0.0
      %1697 = vmatprep.subr.mxu0 0.0
      %1698 = vmatpush1.msra.mxu0 0.0
      %1699 = vmatprep.subr.mxu0 0.0
      %1700 = vmatpush1.msra.mxu0 0.0
      %1701 = vmatprep.mubr.f32.mxu0 0.0
      %1702 = vmatmul.mubr.f32.gmra.mrb[0].mxu0 %v1479
      %v1703 = vpop.f32.mrb[0].mxu0
      %v1704 = vadd.f32 %v1557, %v1703
      %v1705 = vpop.f32.mrb[0].mxu0
      %v1706 = vadd.f32 %v1561, %v1705
      %1707 = vdwg.mxu0
      %v1708 = vmul.f32 %v1633, 0.5
      %v1709 = vmul.f32 %v1635, 0.5
      %v1710 = vmul.f32 %v1704, 0.5
      %v1711 = vmul.f32 %v1706, 0.5
      %v1712 = vmul.f32 %v1633, 0.70710677
      %v1713 = vmul.f32 %v1635, 0.70710677
      %v1714 = vmul.f32 %v1704, 0.70710677
      %v1715 = vmul.f32 %v1706, 0.70710677
      %v1716 = verf.f32.pop %v1712
      %v1717 = verf.f32.pop %v1713
      %v1718 = verf.f32.pop %v1714
      %v1719 = verf.f32.pop %v1715
      %v1720 = vadd.f32 %v1716, 1.0
      %v1721 = vadd.f32 %v1717, 1.0
      %v1722 = vadd.f32 %v1718, 1.0
      %v1723 = vadd.f32 %v1719, 1.0
      %v1724 = vmul.f32 %v1708, %v1720
      %v1725 = vmul.f32 %v1709, %v1721
      %v1726 = vmul.f32 %v1710, %v1722
      %v1727 = vmul.f32 %v1711, %v1723
      %v1728 = vld [vmem:[%s11] sm:$0xff]
      %v1729 = vld [vmem:[%s11 + $0x8] sm:$0xff]
      %v1730 = vld [vmem:[%s11 + $0x10] sm:$0xff]
      %v1731 = vld [vmem:[%s11 + $0x18] sm:$0xff]
      %v1732 = vld [vmem:[%s11 + $0x20] sm:$0xff]
      %v1733 = vld [vmem:[%s11 + $0x28] sm:$0xff]
      %v1734 = vld [vmem:[%s11 + $0x30] sm:$0xff]
      %v1735 = vld [vmem:[%s11 + $0x38] sm:$0xff]
      %v1736 = vld [vmem:[%s11 + $0x40] sm:$0xff]
      %v1737 = vld [vmem:[%s11 + $0x48] sm:$0xff]
      %v1738 = vld [vmem:[%s11 + $0x50] sm:$0xff]
      %v1739 = vld [vmem:[%s11 + $0x58] sm:$0xff]
      %v1740 = vld [vmem:[%s11 + $0x60] sm:$0xff]
      %v1741 = vld [vmem:[%s11 + $0x68] sm:$0xff]
      %v1742 = vld [vmem:[%s11 + $0x70] sm:$0xff]
      %v1743 = vld [vmem:[%s11 + $0x78] sm:$0xff]
      %v1744 = vld [vmem:[%s11 + $0x80] sm:$0xff]
      %v1745 = vld [vmem:[%s11 + $0x88] sm:$0xff]
      %v1746 = vld [vmem:[%s11 + $0x90] sm:$0xff]
      %v1747 = vld [vmem:[%s11 + $0x98] sm:$0xff]
      %v1748 = vld [vmem:[%s11 + $0xa0] sm:$0xff]
      %v1749 = vld [vmem:[%s11 + $0xa8] sm:$0xff]
      %v1750 = vld [vmem:[%s11 + $0xb0] sm:$0xff]
      %v1751 = vld [vmem:[%s11 + $0xb8] sm:$0xff]
      %v1752 = vld [vmem:[%s11 + $0xc0] sm:$0xff]
      %v1753 = vld [vmem:[%s11 + $0xc8] sm:$0xff]
      %v1754 = vld [vmem:[%s11 + $0xd0] sm:$0xff]
      %v1755 = vld [vmem:[%s11 + $0xd8] sm:$0xff]
      %v1756 = vld [vmem:[%s11 + $0xe0] sm:$0xff]
      %v1757 = vld [vmem:[%s11 + $0xe8] sm:$0xff]
      %v1758 = vld [vmem:[%s11 + $0xf0] sm:$0xff]
      %v1759 = vld [vmem:[%s11 + $0xf8] sm:$0xff]
      %v1760 = vld [vmem:[%s11 + $0x100] sm:$0xff]
      %v1761 = vld [vmem:[%s11 + $0x108] sm:$0xff]
      %v1762 = vld [vmem:[%s11 + $0x110] sm:$0xff]
      %v1763 = vld [vmem:[%s11 + $0x118] sm:$0xff]
      %v1764 = vld [vmem:[%s11 + $0x120] sm:$0xff]
      %v1765 = vld [vmem:[%s11 + $0x128] sm:$0xff]
      %v1766 = vld [vmem:[%s11 + $0x130] sm:$0xff]
      %v1767 = vld [vmem:[%s11 + $0x138] sm:$0xff]
      %v1768 = vld [vmem:[%s11 + $0x140] sm:$0xff]
      %v1769 = vld [vmem:[%s11 + $0x148] sm:$0xff]
      %v1770 = vld [vmem:[%s11 + $0x150] sm:$0xff]
      %v1771 = vld [vmem:[%s11 + $0x158] sm:$0xff]
      %v1772 = vld [vmem:[%s11 + $0x160] sm:$0xff]
      %v1773 = vld [vmem:[%s11 + $0x168] sm:$0xff]
      %v1774 = vld [vmem:[%s11 + $0x170] sm:$0xff]
      %v1775 = vld [vmem:[%s11 + $0x178] sm:$0xff]
      %v1776 = vld [vmem:[%s11 + $0x180] sm:$0xff]
      %v1777 = vld [vmem:[%s11 + $0x188] sm:$0xff]
      %v1778 = vld [vmem:[%s11 + $0x190] sm:$0xff]
      %v1779 = vld [vmem:[%s11 + $0x198] sm:$0xff]
      %v1780 = vld [vmem:[%s11 + $0x1a0] sm:$0xff]
      %v1781 = vld [vmem:[%s11 + $0x1a8] sm:$0xff]
      %v1782 = vld [vmem:[%s11 + $0x1b0] sm:$0xff]
      %v1783 = vld [vmem:[%s11 + $0x1b8] sm:$0xff]
      %v1784 = vld [vmem:[%s11 + $0x1c0] sm:$0xff]
      %v1785 = vld [vmem:[%s11 + $0x1c8] sm:$0xff]
      %v1786 = vld [vmem:[%s11 + $0x1d0] sm:$0xff]
      %v1787 = vld [vmem:[%s11 + $0x1d8] sm:$0xff]
      %v1788 = vld [vmem:[%s11 + $0x1e0] sm:$0xff]
      %v1789 = vld [vmem:[%s11 + $0x1e8] sm:$0xff]
      %v1790 = vld [vmem:[%s11 + $0x1f0] sm:$0xff]
      %v1791 = vld [vmem:[%s11 + $0x1f8] sm:$0xff]
      %1792 = vmatprep.subr.mxu0 0.0
      %1793 = vmatpush1.msra.mxu0 %v1728
      %1794 = vmatprep.subr.mxu0 0.0
      %1795 = vmatpush1.msra.mxu0 %v1729
      %1796 = vmatprep.subr.mxu0 0.0
      %1797 = vmatpush1.msra.mxu0 %v1730
      %1798 = vmatprep.subr.mxu0 0.0
      %1799 = vmatpush1.msra.mxu0 %v1731
      %1800 = vmatprep.subr.mxu0 0.0
      %1801 = vmatpush1.msra.mxu0 %v1732
      %1802 = vmatprep.subr.mxu0 0.0
      %1803 = vmatpush1.msra.mxu0 %v1733
      %1804 = vmatprep.subr.mxu0 0.0
      %1805 = vmatpush1.msra.mxu0 %v1734
      %1806 = vmatprep.subr.mxu0 0.0
      %1807 = vmatpush1.msra.mxu0 %v1735
      %1808 = vmatprep.subr.mxu0 0.0
      %1809 = vmatpush1.msra.mxu0 %v1736
      %1810 = vmatprep.subr.mxu0 0.0
      %1811 = vmatpush1.msra.mxu0 %v1737
      %1812 = vmatprep.subr.mxu0 0.0
      %1813 = vmatpush1.msra.mxu0 %v1738
      %1814 = vmatprep.subr.mxu0 0.0
      %1815 = vmatpush1.msra.mxu0 %v1739
      %1816 = vmatprep.subr.mxu0 0.0
      %1817 = vmatpush1.msra.mxu0 %v1740
      %1818 = vmatprep.subr.mxu0 0.0
      %1819 = vmatpush1.msra.mxu0 %v1741
      %1820 = vmatprep.subr.mxu0 0.0
      %1821 = vmatpush1.msra.mxu0 %v1742
      %1822 = vmatprep.subr.mxu0 0.0
      %1823 = vmatpush1.msra.mxu0 %v1743
      %1824 = vmatprep.subr.mxu0 0.0
      %1825 = vmatpush1.msra.mxu0 %v1744
      %1826 = vmatprep.subr.mxu0 0.0
      %1827 = vmatpush1.msra.mxu0 %v1745
      %1828 = vmatprep.subr.mxu0 0.0
      %1829 = vmatpush1.msra.mxu0 %v1746
      %1830 = vmatprep.subr.mxu0 0.0
      %1831 = vmatpush1.msra.mxu0 %v1747
      %1832 = vmatprep.subr.mxu0 0.0
      %1833 = vmatpush1.msra.mxu0 %v1748
      %1834 = vmatprep.subr.mxu0 0.0
      %1835 = vmatpush1.msra.mxu0 %v1749
      %1836 = vmatprep.subr.mxu0 0.0
      %1837 = vmatpush1.msra.mxu0 %v1750
      %1838 = vmatprep.subr.mxu0 0.0
      %1839 = vmatpush1.msra.mxu0 %v1751
      %1840 = vmatprep.subr.mxu0 0.0
      %1841 = vmatpush1.msra.mxu0 %v1752
      %1842 = vmatprep.subr.mxu0 0.0
      %1843 = vmatpush1.msra.mxu0 %v1753
      %1844 = vmatprep.subr.mxu0 0.0
      %1845 = vmatpush1.msra.mxu0 %v1754
      %1846 = vmatprep.subr.mxu0 0.0
      %1847 = vmatpush1.msra.mxu0 %v1755
      %1848 = vmatprep.subr.mxu0 0.0
      %1849 = vmatpush1.msra.mxu0 %v1756
      %1850 = vmatprep.subr.mxu0 0.0
      %1851 = vmatpush1.msra.mxu0 %v1757
      %1852 = vmatprep.subr.mxu0 0.0
      %1853 = vmatpush1.msra.mxu0 %v1758
      %1854 = vmatprep.subr.mxu0 0.0
      %1855 = vmatpush1.msra.mxu0 %v1759
      %1856 = vmatprep.mubr.f32.mxu0 %v1725
      %1857 = vmatmul.mubr.f32.gmra.mrb[0].mxu0 %v1724
      %v1858 = vpop.f32.mrb[0].mxu0
      %v1859 = vadd.f32 0.0, %v1858
      %v1860 = vpop.f32.mrb[0].mxu0
      %1861 = vdwg.mxu0
      %1862 = vmatprep.subr.mxu0 0.0
      %1863 = vmatpush1.msra.mxu0 %v1760
      %1864 = vmatprep.subr.mxu0 0.0
      %1865 = vmatpush1.msra.mxu0 %v1761
      %1866 = vmatprep.subr.mxu0 0.0
      %1867 = vmatpush1.msra.mxu0 %v1762
      %1868 = vmatprep.subr.mxu0 0.0
      %1869 = vmatpush1.msra.mxu0 %v1763
      %1870 = vmatprep.subr.mxu0 0.0
      %1871 = vmatpush1.msra.mxu0 %v1764
      %1872 = vmatprep.subr.mxu0 0.0
      %1873 = vmatpush1.msra.mxu0 %v1765
      %1874 = vmatprep.subr.mxu0 0.0
      %1875 = vmatpush1.msra.mxu0 %v1766
      %1876 = vmatprep.subr.mxu0 0.0
      %1877 = vmatpush1.msra.mxu0 %v1767
      %1878 = vmatprep.subr.mxu0 0.0
      %1879 = vmatpush1.msra.mxu0 %v1768
      %1880 = vmatprep.subr.mxu0 0.0
      %1881 = vmatpush1.msra.mxu0 %v1769
      %1882 = vmatprep.subr.mxu0 0.0
      %1883 = vmatpush1.msra.mxu0 %v1770
      %1884 = vmatprep.subr.mxu0 0.0
      %1885 = vmatpush1.msra.mxu0 %v1771
      %1886 = vmatprep.subr.mxu0 0.0
      %1887 = vmatpush1.msra.mxu0 %v1772
      %1888 = vmatprep.subr.mxu0 0.0
      %1889 = vmatpush1.msra.mxu0 %v1773
      %1890 = vmatprep.subr.mxu0 0.0
      %1891 = vmatpush1.msra.mxu0 %v1774
      %1892 = vmatprep.subr.mxu0 0.0
      %1893 = vmatpush1.msra.mxu0 %v1775
      %1894 = vmatprep.subr.mxu0 0.0
      %1895 = vmatpush1.msra.mxu0 %v1776
      %1896 = vmatprep.subr.mxu0 0.0
      %1897 = vmatpush1.msra.mxu0 %v1777
      %1898 = vmatprep.subr.mxu0 0.0
      %1899 = vmatpush1.msra.mxu0 %v1778
      %1900 = vmatprep.subr.mxu0 0.0
      %1901 = vmatpush1.msra.mxu0 %v1779
      %1902 = vmatprep.subr.mxu0 0.0
      %1903 = vmatpush1.msra.mxu0 %v1780
      %1904 = vmatprep.subr.mxu0 0.0
      %1905 = vmatpush1.msra.mxu0 %v1781
      %1906 = vmatprep.subr.mxu0 0.0
      %1907 = vmatpush1.msra.mxu0 %v1782
      %1908 = vmatprep.subr.mxu0 0.0
      %1909 = vmatpush1.msra.mxu0 %v1783
      %1910 = vmatprep.subr.mxu0 0.0
      %1911 = vmatpush1.msra.mxu0 %v1784
      %1912 = vmatprep.subr.mxu0 0.0
      %1913 = vmatpush1.msra.mxu0 %v1785
      %1914 = vmatprep.subr.mxu0 0.0
      %1915 = vmatpush1.msra.mxu0 %v1786
      %1916 = vmatprep.subr.mxu0 0.0
      %1917 = vmatpush1.msra.mxu0 %v1787
      %1918 = vmatprep.subr.mxu0 0.0
      %1919 = vmatpush1.msra.mxu0 %v1788
      %1920 = vmatprep.subr.mxu0 0.0
      %1921 = vmatpush1.msra.mxu0 %v1789
      %1922 = vmatprep.subr.mxu0 0.0
      %1923 = vmatpush1.msra.mxu0 %v1790
      %1924 = vmatprep.subr.mxu0 0.0
      %1925 = vmatpush1.msra.mxu0 %v1791
      %1926 = vmatprep.mubr.f32.mxu0 %v1727
      %1927 = vmatmul.mubr.f32.gmra.mrb[0].mxu0 %v1726
      %v1928 = vpop.f32.mrb[0].mxu0
      %v1929 = vadd.f32 %v1859, %v1928
      %v1930 = vpop.f32.mrb[0].mxu0
      %1931 = vdwg.mxu0
      %v1932 = vadd.f32 %v1452, %v1929
      %v1933 = vld [vmem:[%s12] sm:$0x1]
      %v1935 = vlaneseq
      %v1936 = vshrl.u32 %v1935, 7
      %v1937 = vsub.s32 0, %v1936
      %v1938 = vrot.slane %v1933, %v1937
      %v1940 = vadd.f32 %v1932, %v1938
      %1941 = vst [vmem:[%s435] sm:$0xff] %v1940
      %p1942 = scmp.lt.s32.totalorder %s24, 1
      %s1943 = scalar_select %p1942, %s24, 1
      %s1944 = smul.addr %s1943, 8
      %s1945 = scalar_lea.vmem %s13, %s1944
      // Predicated region
      $region73: #{vit_forward.5} parent=71 // pred_check
        %p1946 = pneg %p320
      $region74: #{vit_forward.5} parent=71 // pred_check_branch
        %1948 = sbr.rel (%p1946) target = $region76
      $region75: #{vit_forward.5} parent=71 // pred_region
        _
      $region76: #{vit_forward.5} parent=71 // pred_fallthru
        _
    $region72: #{vit_forward.5} parent=5 // pred_fallthru
      _
    %p1949 = scmp.le.s32.totalorder 2, %s19
    // Predicated region
    $region77: #{vit_forward.5} parent=5 // pred_check
      %p1950 = pneg %p1949
    $region78: #{vit_forward.5} parent=5 // pred_check_branch
      %1952 = sbr.rel (%p1950) target = $region80
    $region79: #{vit_forward.5} parent=5 // pred_region
      %s1953 = ssub.s32 %s19, 2
      // Predicated region
      $region81: #{vit_forward.5} parent=79 // pred_check
        %p1954 = pneg %p326
      $region82: #{vit_forward.5} parent=79 // pred_check_branch
        %1956 = sbr.rel (%p1954) target = $region84
      $region83: #{vit_forward.5} parent=79 // pred_region
        %p1957 = scmp.lt.s32.totalorder %s25, 1
        %s1958 = scalar_select %p1957, %s25, 1
        %s1959 = smul.addr %s1958, 8
        %s1960 = scalar_lea.vmem %s13, %s1959
      $region84: #{vit_forward.5} parent=79 // pred_fallthru
        _
    $region80: #{vit_forward.5} parent=5 // pred_fallthru
      _
  $region6: #{vit_forward.5} parent=0 // loop_footer
    %s23 = sadd.s32 1, %s19
  $region7: #{vit_forward.5} parent=0 // loop_footer_branch
    %18 = sbr.rel target = $region3
  $region8: #{vit_forward.5} parent=0 // loop_exit
    _

</llo_original>
